<compile_context>
chip_gen: v7x
topology: tpu7x:2x2x1
jax: 0.10.0
libtpu: 0.0.40
codegen_flags: <defaults>
</compile_context>

<pallas_src>
import functools

import jax
import jax.numpy as jnp
from jax.experimental import pallas as pl
from jax.experimental.pallas import tpu as pltpu

IN_FEATURES = 2048   # fixed by the module definition
_LANE = 128
_MAX_TN = 512        # 2048 x 512 bf16 weight tile = 2 MiB; x2 buffers = 4 MiB
_MAX_TB = 256        # batch tile (rows); 256 x 2048 f32 = 2 MiB


def _round_up(x, m):
    return ((x + m - 1) // m) * m


def _linear_kernel(x_ref, w_ref, b_ref, o_ref):
    # x_ref: [TB, K] f32, w_ref: [K, TN] bf16, b_ref: [1, TN] f32, o_ref: [TB, TN] f32
    acc = jnp.dot(
        x_ref[...].astype(jnp.bfloat16),   # bf16 x bf16 on the MXU
        w_ref[...],
        preferred_element_type=jnp.float32,  # f32 accumulation
    )
    o_ref[...] = (acc + b_ref[...]).astype(o_ref.dtype)


@functools.partial(jax.jit, static_argnames=("classes",))
def netc_resnet_forward(x, w_t, b, *, classes):
    """x: [B, 2048] f32, w_t: [2048, Np] bf16, b: [1, Np] f32 -> [B, classes]."""
    B, K = x.shape
    assert K == IN_FEATURES
    Np = w_t.shape[1]

    # N tile: <= 512 lanes (multiple of 256 when possible -> full 256x256 MXU).
    TN = min(_MAX_TN, Np)
    assert Np % TN == 0, "weight must be padded to a multiple of the N tile"

    # Batch tile: only pad when needed (avoid an extra HBM copy of x).
    TB = min(_MAX_TB, _round_up(B, 8))
    Bp = _round_up(B, TB)
    if Bp != B:
        x = jnp.pad(x, ((0, Bp - B), (0, 0)))

    grid = (Bp // TB, Np // TN)

    wbytes = jnp.dtype(w_t.dtype).itemsize
    cost = pl.CostEstimate(
        flops=2 * Bp * K * Np,
        transcendentals=0,
        bytes_accessed=K * Np * wbytes + Bp * K * 4 + Bp * Np * 4 + Np * 4,
    )

    out_padded = pl.pallas_call(
        _linear_kernel,
        out_shape=jax.ShapeDtypeStruct((Bp, Np), jnp.float32),
        grid_spec=pltpu.PrefetchScalarGridSpec(
            num_scalar_prefetch=0,
            grid=grid,
            in_specs=[
                pl.BlockSpec((TB, K), lambda i, j: (i, 0)),   # x tile
                pl.BlockSpec((K, TN), lambda i, j: (0, j)),   # weight tile (streamed)
                pl.BlockSpec((1, TN), lambda i, j: (0, j)),   # bias tile
            ],
            out_specs=pl.BlockSpec((TB, TN), lambda i, j: (i, j)),
        ),
        compiler_params=pltpu.CompilerParams(
            dimension_semantics=("parallel", "parallel"),
        ),
        cost_estimate=cost,
    )(x, w_t, b)

    return out_padded[:B, :classes]


def make_params(key, classes):
    """Deterministic init mimicking nn.Linear(2048, classes).

    Returns (w_t, b_p, w, b): weight pre-transposed + padded to [2048, Np] in
    bfloat16, bias padded to [1, Np] in f32, plus the unpadded f32 originals
    for the reference check.  Np is padded so the 512-lane N tile divides it
    (or Np < 512 and a single full tile is used); padding columns are zero so
    they never affect the sliced output.
    """
    kw, kb = jax.random.split(key)
    bound = 1.0 / (IN_FEATURES ** 0.5)  # PyTorch default U(-1/sqrt(fan_in), +)
    w = jax.random.uniform(kw, (classes, IN_FEATURES), jnp.float32, -bound, bound)
    b = jax.random.uniform(kb, (classes,), jnp.float32, -bound, bound)

    np_lane = _round_up(classes, _LANE)
    TN = min(_MAX_TN, np_lane)
    Np = _round_up(classes, TN)

    w_t = jnp.zeros((IN_FEATURES, Np), jnp.float32).at[:, :classes].set(w.T)
    w_t = w_t.astype(jnp.bfloat16)                       # bf16 weights in HBM
    b_p = jnp.zeros((1, Np), jnp.float32).at[0, :classes].set(b)
    return w_t, b_p, w, b


if __name__ == "__main__":
    key = jax.random.PRNGKey(0)
    k_x, k_p = jax.random.split(key)

    batch = 4
    classes = 1000  # ResNet-style head; pads to Np=1024 -> two 512-lane N tiles

    x = jax.random.normal(k_x, (batch, IN_FEATURES), jnp.float32)
    w_t, b_p, w, b = make_params(k_p, classes)

    out = netc_resnet_forward(x, w_t, b_p, classes=classes)
    out = jax.block_until_ready(out)

    # Reference check against plain JAX f32 (same math as PyTorch: x @ W.T + b).
    ref = x @ w.T + b
    assert out.shape == (batch, classes)
    # bf16 weights/activations with f32 accumulation -> a few e-3 abs error.
    assert jnp.allclose(out, ref, atol=2e-2, rtol=2e-2), (
        float(jnp.max(jnp.abs(out - ref))))

    print("KERNEL_OK")
</pallas_src>

<mosaic_0001>
module attributes {stable_mosaic.version = 11 : i64} {
  func.func @_linear_kernel(%arg0: i32, %arg1: i32, %arg2: memref<8x2048xf32, #tpu.memory_space<vmem>>, %arg3: memref<2048x512xbf16, #tpu.memory_space<vmem>>, %arg4: memref<1x512xf32, #tpu.memory_space<vmem>>, %arg5: memref<8x512xf32, #tpu.memory_space<vmem>>) attributes {dimension_semantics = [#tpu.dimension_semantics<parallel>, #tpu.dimension_semantics<parallel>], iteration_bounds = array<i64: 1, 2>, scalar_prefetch = 0 : i64, scratch_operands = 0 : i64, tpu.core_type = #tpu.core_type<tc>, window_params = [{transform_indices = @transform_0, window_bounds = array<i64: 8, 2048>}, {transform_indices = @transform_1, window_bounds = array<i64: 2048, 512>}, {transform_indices = @transform_2, window_bounds = array<i64: 1, 512>}, {transform_indices = @transform_3, window_bounds = array<i64: 8, 512>}]} {
    %c0 = arith.constant 0 : index
    %c0_0 = arith.constant 0 : index
    %0 = vector.load %arg2[%c0, %c0_0] : memref<8x2048xf32, #tpu.memory_space<vmem>>, vector<8x2048xf32>
    %1 = arith.truncf %0 : vector<8x2048xf32> to vector<8x2048xbf16>
    %c0_1 = arith.constant 0 : index
    %c0_2 = arith.constant 0 : index
    %2 = vector.load %arg3[%c0_1, %c0_2] : memref<2048x512xbf16, #tpu.memory_space<vmem>>, vector<2048x512xbf16>
    %cst = arith.constant dense<0.000000e+00> : vector<8x512xf32>
    %3 = tpu.matmul %1, %2, %cst {dimension_numbers = #tpu.dot_dimension_numbers<[1], [0], [0], [1], [0, 0, 1, 1], [], []>} : vector<8x2048xbf16>, vector<2048x512xbf16>, vector<8x512xf32> -> vector<8x512xf32>
    %c0_3 = arith.constant 0 : index
    %c0_4 = arith.constant 0 : index
    %4 = vector.load %arg4[%c0_3, %c0_4] : memref<1x512xf32, #tpu.memory_space<vmem>>, vector<1x512xf32>
    %5 = vector.broadcast %4 : vector<1x512xf32> to vector<8x512xf32>
    %6 = arith.addf %3, %5 : vector<8x512xf32>
    %c0_5 = arith.constant 0 : index
    %c0_6 = arith.constant 0 : index
    %7 = vector.load %arg5[%c0_5, %c0_6] : memref<8x512xf32, #tpu.memory_space<vmem>>, vector<8x512xf32>
    tpu.vector_store %arg5[%c0_5, %c0_6], %6 {strides = array<i32>} : memref<8x512xf32, #tpu.memory_space<vmem>>, vector<8x512xf32>,
    return
  }
  func.func @transform_0(%arg0: i32, %arg1: i32) -> (i32, i32) {
    %c0_i32 = arith.constant 0 : i32
    %c0_i32_0 = arith.constant 0 : i32
    return %arg0, %c0_i32 : i32, i32
  }
  func.func @transform_1(%arg0: i32, %arg1: i32) -> (i32, i32) {
    %c0_i32 = arith.constant 0 : i32
    %c0_i32_0 = arith.constant 0 : i32
    return %c0_i32, %arg1 : i32, i32
  }
  func.func @transform_2(%arg0: i32, %arg1: i32) -> (i32, i32) {
    %c0_i32 = arith.constant 0 : i32
    %c0_i32_0 = arith.constant 0 : i32
    return %c0_i32, %arg1 : i32, i32
  }
  func.func @transform_3(%arg0: i32, %arg1: i32) -> (i32, i32) {
    %c0_i32 = arith.constant 0 : i32
    return %arg0, %arg1 : i32, i32
  }
}

</mosaic_0001>

<llo_original>
// kernel: netc_resnet_forward.1
$region0: #{netc_resnet_forward.1}
  #allocation0 [shape = 'u32[]', space=smem, size = 0x4, offset = 0x4, fixed_abs, tag = 'smem constant byte address 0x4 - core index']
  #allocation1 [shape = 'u32[144,128]{1,0:T(1,128)}', space=vmem, size = 0x12000, scoped, tag = 'internal scratch']
  %s0 = inlined_call_operand.vmem [shape: f32[8,2048], index: 0, kind: input, shape index: {}]
  %s1 = inlined_call_operand.hbm [shape: bf16[2048,1024], index: 1, kind: input, shape index: {}]
  %s2 = inlined_call_operand.hbm [shape: f32[1,1024], index: 2, kind: input, shape index: {}]
  %s3 = inlined_call_operand.vmem [shape: f32[8,1024], index: 3, kind: output, shape index: {}]
  %s4 = sld [smem:[#allocation0]]
  $region53: #{netc_resnet_forward.1} parent=0
    _
  %s6 = ssub.s32 1, %s4
  %s7 = scalar_select 0, %s6, %s4
  $region1: #{netc_resnet_forward.1} parent=0
    #allocation2 [shape = 'u8[4194304]{0}', space=vmem, size = 0x400000, scoped, tag = 'input window, operand 1']
    #allocation3 [shape = 's32[2]{0}', space=sflag, size = 0x8, scoped, tag = 'scoped memory for netc_resnet_forward.1']
    #allocation4 [shape = 'u8[4096]{0}', space=vmem, size = 0x1000, scoped, tag = 'input window, operand 2']
    #allocation5 [shape = 's32[2]{0}', space=sflag, size = 0x8, scoped, tag = 'scoped memory for netc_resnet_forward.1']
    %8 = vsyncpa [#allocation3], 0
    %s9 = scalar_lea.sflag [#allocation3], 1
    %10 = vsyncpa %s9, 0
    %11 = vsyncpa [#allocation5], 0
    %s12 = scalar_lea.sflag [#allocation5], 1
    %13 = vsyncpa %s12, 0
    loop: start=0, step=1, limit=4
    $region2: #{netc_resnet_forward.1} parent=1 // loop_pre_header
      _
    $region3: #{netc_resnet_forward.1} parent=1 // loop_header
      %s15 = sphi 0, %s19
      %p16 = scmp.ge.s32.totalorder %s15, 4
      %s22 = sphi 0, %s34
      %s23 = sphi 0, %s30
      %s24 = sphi 0, %s22
      %s25 = sphi 0, %s23
      %s26 = sphi 0, %s24
      %s27 = sphi 0, %s25
      %s37 = sphi 0, %s39
      %s40 = sphi 0, %s37
      %s41 = sphi 0, %s40
      %s57 = sphi 0, %s41
      %s63 = sphi 0, %s65
      %s66 = sphi 0, %s63
      %s67 = sphi 0, %s66
      %s83 = sphi 0, %s67
      %s89 = sphi 0, %s91
      %s92 = sphi 0, %s89
      %s93 = sphi 0, %s92
      %s109 = sphi 0, %s93
      %s117 = sphi 0, %s119
      %s120 = sphi 0, %s117
      %s121 = sphi 0, %s120
      %s137 = sphi 0, %s121
    $region4: #{netc_resnet_forward.1} parent=1 // loop_header_branch
      %18 = sbr.rel (%p16) target = $region8
    $region5: #{netc_resnet_forward.1} parent=1 // loop_body
      %s20 = ssub.s32 %s15, 1
      %s21 = ssub.s32 %s15, 2
      %s28 = sadd.s32 1, %s23
      %p29 = scmp.ge.s32.totalorder %s28, 2
      %s30 = scalar_select %p29, 0, %s28
      %s31 = sadd.s32 1, %s22
      %s32 = scalar_select %p29, %s31, %s22
      %p33 = scmp.ge.s32.totalorder %s32, 1
      %s34 = scalar_select %p33, 0, %s32
      %s35 = ssub.s32 %s22, %s34
      %p36 = scmp.eq.s32.totalorder %s35, 0
      %s38 = sadd.s32 %s37, 1
      %s39 = scalar_select %p36, %s37, %s38
      %p42 = pneg %p36
      %p43 = scmp.eq.s32.totalorder %s15, 1
      %p44 = por %p42, %p43
      %p45 = scmp.ne.s32.totalorder %s37, %s40
      %p46 = scmp.eq.s32.totalorder %s15, 0
      %p47 = por %p45, %p46
      %p48 = scmp.ne.s32.totalorder %s37, %s40
      %p49 = scmp.eq.s32.totalorder %s20, 1
      %p50 = por %p48, %p49
      %p51 = scmp.ne.s32.totalorder %s40, %s41
      %p52 = scmp.eq.s32.totalorder %s20, 0
      %p53 = por %p51, %p52
      %p54 = scmp.ne.s32.totalorder %s40, %s41
      %p55 = scmp.eq.s32.totalorder %s21, 1
      %p56 = por %p54, %p55
      %p58 = scmp.ne.s32.totalorder %s41, %s57
      %p59 = scmp.eq.s32.totalorder %s21, 0
      %p60 = por %p58, %p59
      %s61 = ssub.s32 %s23, %s30
      %p62 = scmp.eq.s32.totalorder %s61, 0
      %s64 = sadd.s32 %s63, 1
      %s65 = scalar_select %p62, %s63, %s64
      %p68 = pneg %p62
      %p69 = scmp.eq.s32.totalorder %s15, 1
      %p70 = por %p68, %p69
      %p71 = scmp.ne.s32.totalorder %s63, %s66
      %p72 = scmp.eq.s32.totalorder %s15, 0
      %p73 = por %p71, %p72
      %p74 = scmp.ne.s32.totalorder %s63, %s66
      %p75 = scmp.eq.s32.totalorder %s20, 1
      %p76 = por %p74, %p75
      %p77 = scmp.ne.s32.totalorder %s66, %s67
      %p78 = scmp.eq.s32.totalorder %s20, 0
      %p79 = por %p77, %p78
      %p80 = scmp.ne.s32.totalorder %s66, %s67
      %p81 = scmp.eq.s32.totalorder %s21, 1
      %p82 = por %p80, %p81
      %p84 = scmp.ne.s32.totalorder %s67, %s83
      %p85 = scmp.eq.s32.totalorder %s21, 0
      %p86 = por %p84, %p85
      %s87 = ssub.s32 %s23, %s30
      %p88 = scmp.eq.s32.totalorder %s87, 0
      %s90 = sadd.s32 %s89, 1
      %s91 = scalar_select %p88, %s89, %s90
      %p94 = pneg %p88
      %p95 = scmp.eq.s32.totalorder %s15, 1
      %p96 = por %p94, %p95
      %p97 = scmp.ne.s32.totalorder %s89, %s92
      %p98 = scmp.eq.s32.totalorder %s15, 0
      %p99 = por %p97, %p98
      %p100 = scmp.ne.s32.totalorder %s89, %s92
      %p101 = scmp.eq.s32.totalorder %s20, 1
      %p102 = por %p100, %p101
      %p103 = scmp.ne.s32.totalorder %s92, %s93
      %p104 = scmp.eq.s32.totalorder %s20, 0
      %p105 = por %p103, %p104
      %p106 = scmp.ne.s32.totalorder %s92, %s93
      %p107 = scmp.eq.s32.totalorder %s21, 1
      %p108 = por %p106, %p107
      %p110 = scmp.ne.s32.totalorder %s93, %s109
      %p111 = scmp.eq.s32.totalorder %s21, 0
      %p112 = por %p110, %p111
      %s113 = ssub.s32 %s22, %s34
      %s114 = ssub.s32 %s23, %s30
      %s115 = sor.u32 %s113, %s114
      %p116 = scmp.eq.s32.totalorder %s115, 0
      %s118 = sadd.s32 %s117, 1
      %s119 = scalar_select %p116, %s117, %s118
      %p122 = pneg %p116
      %p123 = scmp.eq.s32.totalorder %s15, 1
      %p124 = por %p122, %p123
      %p125 = scmp.ne.s32.totalorder %s117, %s120
      %p126 = scmp.eq.s32.totalorder %s15, 0
      %p127 = por %p125, %p126
      %p128 = scmp.ne.s32.totalorder %s117, %s120
      %p129 = scmp.eq.s32.totalorder %s20, 1
      %p130 = por %p128, %p129
      %p131 = scmp.ne.s32.totalorder %s120, %s121
      %p132 = scmp.eq.s32.totalorder %s20, 0
      %p133 = por %p131, %p132
      %p134 = scmp.ne.s32.totalorder %s120, %s121
      %p135 = scmp.eq.s32.totalorder %s21, 1
      %p136 = por %p134, %p135
      %p138 = scmp.ne.s32.totalorder %s121, %s137
      %p139 = scmp.eq.s32.totalorder %s21, 0
      %p140 = por %p138, %p139
      %p141 = scmp.le.s32.totalorder 1, %s15
      %p142 = scmp.lt.s32.totalorder %s15, 3
      %p143 = pnand %p141, %p142
      %p144 = pneg %p143
      // Predicated region
      $region9: #{netc_resnet_forward.1} parent=5 // pred_check
        _
      $region10: #{netc_resnet_forward.1} parent=5 // pred_check_branch
        %146 = sbr.rel (%p143) target = $region12
      $region11: #{netc_resnet_forward.1} parent=5 // pred_region
        %s147 = ssub.s32 %s15, 1
        // Predicated region
        $region13: #{netc_resnet_forward.1} parent=11 // pred_check
          %p148 = pneg %p53
        $region14: #{netc_resnet_forward.1} parent=11 // pred_check_branch
          %150 = sbr.rel (%p148) target = $region16
        $region15: #{netc_resnet_forward.1} parent=11 // pred_region
          %p151 = scmp.lt.s32.totalorder %s24, 0
          %s152 = scalar_select %p151, %s24, 0
          %s153 = smul.addr %s152, 16
          %s154 = smul.addr %s153, 8
          %s155 = scalar_lea.vmem %s0, %s154
        $region16: #{netc_resnet_forward.1} parent=11 // pred_fallthru
          _
      $region12: #{netc_resnet_forward.1} parent=5 // pred_fallthru
        _
      %p156 = scmp.lt.s32.totalorder %s15, 2
      // Predicated region
      $region17: #{netc_resnet_forward.1} parent=5 // pred_check
        %p157 = pneg %p156
      $region18: #{netc_resnet_forward.1} parent=5 // pred_check_branch
        %159 = sbr.rel (%p157) target = $region20
      $region19: #{netc_resnet_forward.1} parent=5 // pred_region
        // Predicated region
        $region21: #{netc_resnet_forward.1} parent=19 // pred_check
          %p160 = pneg %p73
        $region22: #{netc_resnet_forward.1} parent=19 // pred_check_branch
          %162 = sbr.rel (%p160) target = $region24
        $region23: #{netc_resnet_forward.1} parent=19 // pred_region
          %s163 = sand.u32 %s63, 1
          %s164 = scalar_lea.sflag [#allocation3], %s163
          %s165 = sand.u32 %s63, 1
          %s166 = smul.addr %s165, 4096
          %s167 = scalar_lea.vmem [#allocation2], %s166
          %s168 = smul.u32 4, %s23
          %s170 = ssub.s32 65536, 65536
          %171 = vsyncadd %s164, %s170
          %s172 = smul.addr %s168, 64
          %s173 = scalar_lea.hbm %s1, %s172
          %s174 = sshll.u32 %s167, 4
          %s175 = int_to_ptr.vmem [resolvable:$true] %s174
          %180 = dma.hbm_to_vmem [thread:$0]  %s173, 65536, %s175, %s164, 512, 256, 16
        $region24: #{netc_resnet_forward.1} parent=19 // pred_fallthru
          _
        // Predicated region
        $region25: #{netc_resnet_forward.1} parent=19 // pred_check
          %p181 = pneg %p99
        $region26: #{netc_resnet_forward.1} parent=19 // pred_check_branch
          %183 = sbr.rel (%p181) target = $region28
        $region27: #{netc_resnet_forward.1} parent=19 // pred_region
          %s184 = sand.u32 %s89, 1
          %s185 = scalar_lea.sflag [#allocation5], %s184
          %s186 = sand.u32 %s89, 1
          %s187 = smul.addr %s186, 4
          %s188 = scalar_lea.vmem [#allocation4], %s187
          %s189 = smul.u32 4, %s23
          %s191 = ssub.s32 64, 64
          %192 = vsyncadd %s185, %s191
          %s193 = smul.addr %s189, 16
          %s194 = scalar_lea.hbm %s2, %s193
          %s196 = sshll.u32 %s188, 4
          %s197 = int_to_ptr.vmem [resolvable:$true] %s196
          %199 = dma.hbm_to_vmem [thread:$0]  %s194, 64, %s197, %s185
        $region28: #{netc_resnet_forward.1} parent=19 // pred_fallthru
          _
      $region20: #{netc_resnet_forward.1} parent=5 // pred_fallthru
        _
      %p200 = scmp.le.s32.totalorder 1, %s15
      %p201 = scmp.lt.s32.totalorder %s15, 3
      %p202 = pnand %p200, %p201
      %p203 = pneg %p202
      // Predicated region
      $region29: #{netc_resnet_forward.1} parent=5 // pred_check
        _
      $region30: #{netc_resnet_forward.1} parent=5 // pred_check_branch
        %205 = sbr.rel (%p202) target = $region32
      $region31: #{netc_resnet_forward.1} parent=5 // pred_region
        %s206 = ssub.s32 %s15, 1
        %s207 = sand.u32 %s66, 1
        %s208 = scalar_lea.sflag [#allocation3], %s207
        %s209 = sand.u32 %s66, 1
        %s210 = smul.addr %s209, 4096
        %s211 = scalar_lea.vmem [#allocation2], %s210
        // Predicated region
        $region33: #{netc_resnet_forward.1} parent=31 // pred_check
          %p212 = pneg %p79
        $region34: #{netc_resnet_forward.1} parent=31 // pred_check_branch
          %214 = sbr.rel (%p212) target = $region36
        $region35: #{netc_resnet_forward.1} parent=31 // pred_region
          %215 = dma.done %s208, 65536
        $region36: #{netc_resnet_forward.1} parent=31 // pred_fallthru
          _
        %s216 = sand.u32 %s92, 1
        %s217 = scalar_lea.sflag [#allocation5], %s216
        %s218 = sand.u32 %s92, 1
        %s219 = smul.addr %s218, 4
        %s220 = scalar_lea.vmem [#allocation4], %s219
        // Predicated region
        $region37: #{netc_resnet_forward.1} parent=31 // pred_check
          %p221 = pneg %p105
        $region38: #{netc_resnet_forward.1} parent=31 // pred_check_branch
          %223 = sbr.rel (%p221) target = $region40
        $region39: #{netc_resnet_forward.1} parent=31 // pred_region
          %224 = dma.done %s217, 64
        $region40: #{netc_resnet_forward.1} parent=31 // pred_fallthru
          _
        %p225 = scmp.lt.s32.totalorder %s24, 0
        %s226 = scalar_select %p225, %s24, 0
        %s227 = smul.addr %s226, 16
        %s228 = smul.addr %s227, 8
        %s229 = scalar_lea.vmem %s0, %s228
        %p230 = pneg %p53
        %p231 = pneg %p50
        %s232 = sand.u32 %s66, 1
        %s233 = scalar_lea.sflag [#allocation3], %s232
        %s234 = sand.u32 %s66, 1
        %s235 = smul.addr %s234, 4096
        %s236 = scalar_lea.vmem [#allocation2], %s235
        %p237 = pneg %p79
        %p238 = pneg %p76
        %s239 = sand.u32 %s92, 1
        %s240 = scalar_lea.sflag [#allocation5], %s239
        %s241 = sand.u32 %s92, 1
        %s242 = smul.addr %s241, 4
        %s243 = scalar_lea.vmem [#allocation4], %s242
        %p244 = pneg %p105
        %p245 = pneg %p102
        %p246 = pneg %p133
        %p247 = pneg %p130
        %s248 = smul.u32 4, %s25
        %p249 = scmp.lt.s32.totalorder %s24, 0
        %s250 = scalar_select %p249, %s24, 0
        %p251 = scmp.lt.s32.totalorder %s248, 7
        %s252 = scalar_select %p251, %s248, 7
        %s253 = smul.addr %s250, 8
        %s254 = sadd.s32 %s252, %s253
        %s255 = smul.addr %s254, 8
        %s256 = scalar_lea.vmem %s3, %s255
        %p257 = scmp.lt.s32.totalorder %s24, 0
        %s258 = scalar_select %p257, %s24, 0
        %s259 = smul.addr %s258, 16
        %s260 = smul.addr %s259, 8
        %s261 = scalar_lea.vmem %s0, %s260
        %s262 = smul.u32 4, %s25
        %s263 = smul.u32 4, %s25
        %s264 = smul.u32 4, %s25
        %p265 = scmp.lt.s32.totalorder %s24, 0
        %s266 = scalar_select %p265, %s24, 0
        %p267 = scmp.lt.s32.totalorder %s264, 7
        %s268 = scalar_select %p267, %s264, 7
        %s269 = smul.addr %s266, 8
        %s270 = sadd.s32 %s268, %s269
        %s271 = smul.addr %s270, 8
        %s272 = scalar_lea.vmem %s3, %s271
        %s273 = smul.u32 4, %s25
        %v274 = vld [vmem:[%s261] sm:$0xff]
        %v275 = vld [vmem:[%s261 + $0x8] sm:$0xff]
        %v276 = vld [vmem:[%s261 + $0x10] sm:$0xff]
        %v277 = vld [vmem:[%s261 + $0x18] sm:$0xff]
        %v278 = vld [vmem:[%s261 + $0x20] sm:$0xff]
        %v279 = vld [vmem:[%s261 + $0x28] sm:$0xff]
        %v280 = vld [vmem:[%s261 + $0x30] sm:$0xff]
        %v281 = vld [vmem:[%s261 + $0x38] sm:$0xff]
        %v282 = vld [vmem:[%s261 + $0x40] sm:$0xff]
        %v283 = vld [vmem:[%s261 + $0x48] sm:$0xff]
        %v284 = vld [vmem:[%s261 + $0x50] sm:$0xff]
        %v285 = vld [vmem:[%s261 + $0x58] sm:$0xff]
        %v286 = vld [vmem:[%s261 + $0x60] sm:$0xff]
        %v287 = vld [vmem:[%s261 + $0x68] sm:$0xff]
        %v288 = vld [vmem:[%s261 + $0x70] sm:$0xff]
        %v289 = vld [vmem:[%s261 + $0x78] sm:$0xff]
        %v290 = vpack.c.bf16 %v274, %v274
        %v291 = vpack.c.bf16 %v275, %v275
        %v292 = vpack.c.bf16 %v276, %v276
        %v293 = vpack.c.bf16 %v277, %v277
        %v294 = vpack.c.bf16 %v278, %v278
        %v295 = vpack.c.bf16 %v279, %v279
        %v296 = vpack.c.bf16 %v280, %v280
        %v297 = vpack.c.bf16 %v281, %v281
        %v298 = vpack.c.bf16 %v282, %v282
        %v299 = vpack.c.bf16 %v283, %v283
        %v300 = vpack.c.bf16 %v284, %v284
        %v301 = vpack.c.bf16 %v285, %v285
        %v302 = vpack.c.bf16 %v286, %v286
        %v303 = vpack.c.bf16 %v287, %v287
        %v304 = vpack.c.bf16 %v288, %v288
        %v305 = vpack.c.bf16 %v289, %v289
        %v306 = vld [vmem:[%s211] sm:$0xff]
        %v307 = vld [vmem:[%s211 + $0x8] sm:$0xff]
        %v308 = vld [vmem:[%s211 + $0x10] sm:$0xff]
        %v309 = vld [vmem:[%s211 + $0x18] sm:$0xff]
        %v310 = vld [vmem:[%s211 + $0x20] sm:$0xff]
        %v311 = vld [vmem:[%s211 + $0x28] sm:$0xff]
        %v312 = vld [vmem:[%s211 + $0x30] sm:$0xff]
        %v313 = vld [vmem:[%s211 + $0x38] sm:$0xff]
        %v314 = vld [vmem:[%s211 + $0x40] sm:$0xff]
        %v315 = vld [vmem:[%s211 + $0x48] sm:$0xff]
        %v316 = vld [vmem:[%s211 + $0x50] sm:$0xff]
        %v317 = vld [vmem:[%s211 + $0x58] sm:$0xff]
        %v318 = vld [vmem:[%s211 + $0x60] sm:$0xff]
        %v319 = vld [vmem:[%s211 + $0x68] sm:$0xff]
        %v320 = vld [vmem:[%s211 + $0x70] sm:$0xff]
        %v321 = vld [vmem:[%s211 + $0x78] sm:$0xff]
        %v322 = vld [vmem:[%s211 + $0x80] sm:$0xff]
        %v323 = vld [vmem:[%s211 + $0x88] sm:$0xff]
        %v324 = vld [vmem:[%s211 + $0x90] sm:$0xff]
        %v325 = vld [vmem:[%s211 + $0x98] sm:$0xff]
        %v326 = vld [vmem:[%s211 + $0xa0] sm:$0xff]
        %v327 = vld [vmem:[%s211 + $0xa8] sm:$0xff]
        %v328 = vld [vmem:[%s211 + $0xb0] sm:$0xff]
        %v329 = vld [vmem:[%s211 + $0xb8] sm:$0xff]
        %v330 = vld [vmem:[%s211 + $0xc0] sm:$0xff]
        %v331 = vld [vmem:[%s211 + $0xc8] sm:$0xff]
        %v332 = vld [vmem:[%s211 + $0xd0] sm:$0xff]
        %v333 = vld [vmem:[%s211 + $0xd8] sm:$0xff]
        %v334 = vld [vmem:[%s211 + $0xe0] sm:$0xff]
        %v335 = vld [vmem:[%s211 + $0xe8] sm:$0xff]
        %v336 = vld [vmem:[%s211 + $0xf0] sm:$0xff]
        %v337 = vld [vmem:[%s211 + $0xf8] sm:$0xff]
        %v338 = vld [vmem:[%s211 + $0x100] sm:$0xff]
        %v339 = vld [vmem:[%s211 + $0x108] sm:$0xff]
        %v340 = vld [vmem:[%s211 + $0x110] sm:$0xff]
        %v341 = vld [vmem:[%s211 + $0x118] sm:$0xff]
        %v342 = vld [vmem:[%s211 + $0x120] sm:$0xff]
        %v343 = vld [vmem:[%s211 + $0x128] sm:$0xff]
        %v344 = vld [vmem:[%s211 + $0x130] sm:$0xff]
        %v345 = vld [vmem:[%s211 + $0x138] sm:$0xff]
        %v346 = vld [vmem:[%s211 + $0x140] sm:$0xff]
        %v347 = vld [vmem:[%s211 + $0x148] sm:$0xff]
        %v348 = vld [vmem:[%s211 + $0x150] sm:$0xff]
        %v349 = vld [vmem:[%s211 + $0x158] sm:$0xff]
        %v350 = vld [vmem:[%s211 + $0x160] sm:$0xff]
        %v351 = vld [vmem:[%s211 + $0x168] sm:$0xff]
        %v352 = vld [vmem:[%s211 + $0x170] sm:$0xff]
        %v353 = vld [vmem:[%s211 + $0x178] sm:$0xff]
        %v354 = vld [vmem:[%s211 + $0x180] sm:$0xff]
        %v355 = vld [vmem:[%s211 + $0x188] sm:$0xff]
        %v356 = vld [vmem:[%s211 + $0x190] sm:$0xff]
        %v357 = vld [vmem:[%s211 + $0x198] sm:$0xff]
        %v358 = vld [vmem:[%s211 + $0x1a0] sm:$0xff]
        %v359 = vld [vmem:[%s211 + $0x1a8] sm:$0xff]
        %v360 = vld [vmem:[%s211 + $0x1b0] sm:$0xff]
        %v361 = vld [vmem:[%s211 + $0x1b8] sm:$0xff]
        %v362 = vld [vmem:[%s211 + $0x1c0] sm:$0xff]
        %v363 = vld [vmem:[%s211 + $0x1c8] sm:$0xff]
        %v364 = vld [vmem:[%s211 + $0x1d0] sm:$0xff]
        %v365 = vld [vmem:[%s211 + $0x1d8] sm:$0xff]
        %v366 = vld [vmem:[%s211 + $0x1e0] sm:$0xff]
        %v367 = vld [vmem:[%s211 + $0x1e8] sm:$0xff]
        %v368 = vld [vmem:[%s211 + $0x1f0] sm:$0xff]
        %v369 = vld [vmem:[%s211 + $0x1f8] sm:$0xff]
        %v370 = vld [vmem:[%s211 + $0x200] sm:$0xff]
        %v371 = vld [vmem:[%s211 + $0x208] sm:$0xff]
        %v372 = vld [vmem:[%s211 + $0x210] sm:$0xff]
        %v373 = vld [vmem:[%s211 + $0x218] sm:$0xff]
        %v374 = vld [vmem:[%s211 + $0x220] sm:$0xff]
        %v375 = vld [vmem:[%s211 + $0x228] sm:$0xff]
        %v376 = vld [vmem:[%s211 + $0x230] sm:$0xff]
        %v377 = vld [vmem:[%s211 + $0x238] sm:$0xff]
        %v378 = vld [vmem:[%s211 + $0x240] sm:$0xff]
        %v379 = vld [vmem:[%s211 + $0x248] sm:$0xff]
        %v380 = vld [vmem:[%s211 + $0x250] sm:$0xff]
        %v381 = vld [vmem:[%s211 + $0x258] sm:$0xff]
        %v382 = vld [vmem:[%s211 + $0x260] sm:$0xff]
        %v383 = vld [vmem:[%s211 + $0x268] sm:$0xff]
        %v384 = vld [vmem:[%s211 + $0x270] sm:$0xff]
        %v385 = vld [vmem:[%s211 + $0x278] sm:$0xff]
        %v386 = vld [vmem:[%s211 + $0x280] sm:$0xff]
        %v387 = vld [vmem:[%s211 + $0x288] sm:$0xff]
        %v388 = vld [vmem:[%s211 + $0x290] sm:$0xff]
        %v389 = vld [vmem:[%s211 + $0x298] sm:$0xff]
        %v390 = vld [vmem:[%s211 + $0x2a0] sm:$0xff]
        %v391 = vld [vmem:[%s211 + $0x2a8] sm:$0xff]
        %v392 = vld [vmem:[%s211 + $0x2b0] sm:$0xff]
        %v393 = vld [vmem:[%s211 + $0x2b8] sm:$0xff]
        %v394 = vld [vmem:[%s211 + $0x2c0] sm:$0xff]
        %v395 = vld [vmem:[%s211 + $0x2c8] sm:$0xff]
        %v396 = vld [vmem:[%s211 + $0x2d0] sm:$0xff]
        %v397 = vld [vmem:[%s211 + $0x2d8] sm:$0xff]
        %v398 = vld [vmem:[%s211 + $0x2e0] sm:$0xff]
        %v399 = vld [vmem:[%s211 + $0x2e8] sm:$0xff]
        %v400 = vld [vmem:[%s211 + $0x2f0] sm:$0xff]
        %v401 = vld [vmem:[%s211 + $0x2f8] sm:$0xff]
        %v402 = vld [vmem:[%s211 + $0x300] sm:$0xff]
        %v403 = vld [vmem:[%s211 + $0x308] sm:$0xff]
        %v404 = vld [vmem:[%s211 + $0x310] sm:$0xff]
        %v405 = vld [vmem:[%s211 + $0x318] sm:$0xff]
        %v406 = vld [vmem:[%s211 + $0x320] sm:$0xff]
        %v407 = vld [vmem:[%s211 + $0x328] sm:$0xff]
        %v408 = vld [vmem:[%s211 + $0x330] sm:$0xff]
        %v409 = vld [vmem:[%s211 + $0x338] sm:$0xff]
        %v410 = vld [vmem:[%s211 + $0x340] sm:$0xff]
        %v411 = vld [vmem:[%s211 + $0x348] sm:$0xff]
        %v412 = vld [vmem:[%s211 + $0x350] sm:$0xff]
        %v413 = vld [vmem:[%s211 + $0x358] sm:$0xff]
        %v414 = vld [vmem:[%s211 + $0x360] sm:$0xff]
        %v415 = vld [vmem:[%s211 + $0x368] sm:$0xff]
        %v416 = vld [vmem:[%s211 + $0x370] sm:$0xff]
        %v417 = vld [vmem:[%s211 + $0x378] sm:$0xff]
        %v418 = vld [vmem:[%s211 + $0x380] sm:$0xff]
        %v419 = vld [vmem:[%s211 + $0x388] sm:$0xff]
        %v420 = vld [vmem:[%s211 + $0x390] sm:$0xff]
        %v421 = vld [vmem:[%s211 + $0x398] sm:$0xff]
        %v422 = vld [vmem:[%s211 + $0x3a0] sm:$0xff]
        %v423 = vld [vmem:[%s211 + $0x3a8] sm:$0xff]
        %v424 = vld [vmem:[%s211 + $0x3b0] sm:$0xff]
        %v425 = vld [vmem:[%s211 + $0x3b8] sm:$0xff]
        %v426 = vld [vmem:[%s211 + $0x3c0] sm:$0xff]
        %v427 = vld [vmem:[%s211 + $0x3c8] sm:$0xff]
        %v428 = vld [vmem:[%s211 + $0x3d0] sm:$0xff]
        %v429 = vld [vmem:[%s211 + $0x3d8] sm:$0xff]
        %v430 = vld [vmem:[%s211 + $0x3e0] sm:$0xff]
        %v431 = vld [vmem:[%s211 + $0x3e8] sm:$0xff]
        %v432 = vld [vmem:[%s211 + $0x3f0] sm:$0xff]
        %v433 = vld [vmem:[%s211 + $0x3f8] sm:$0xff]
        %v434 = vld [vmem:[%s211 + $0x400] sm:$0xff]
        %v435 = vld [vmem:[%s211 + $0x408] sm:$0xff]
        %v436 = vld [vmem:[%s211 + $0x410] sm:$0xff]
        %v437 = vld [vmem:[%s211 + $0x418] sm:$0xff]
        %v438 = vld [vmem:[%s211 + $0x420] sm:$0xff]
        %v439 = vld [vmem:[%s211 + $0x428] sm:$0xff]
        %v440 = vld [vmem:[%s211 + $0x430] sm:$0xff]
        %v441 = vld [vmem:[%s211 + $0x438] sm:$0xff]
        %v442 = vld [vmem:[%s211 + $0x440] sm:$0xff]
        %v443 = vld [vmem:[%s211 + $0x448] sm:$0xff]
        %v444 = vld [vmem:[%s211 + $0x450] sm:$0xff]
        %v445 = vld [vmem:[%s211 + $0x458] sm:$0xff]
        %v446 = vld [vmem:[%s211 + $0x460] sm:$0xff]
        %v447 = vld [vmem:[%s211 + $0x468] sm:$0xff]
        %v448 = vld [vmem:[%s211 + $0x470] sm:$0xff]
        %v449 = vld [vmem:[%s211 + $0x478] sm:$0xff]
        %v450 = vld [vmem:[%s211 + $0x480] sm:$0xff]
        %v451 = vld [vmem:[%s211 + $0x488] sm:$0xff]
        %v452 = vld [vmem:[%s211 + $0x490] sm:$0xff]
        %v453 = vld [vmem:[%s211 + $0x498] sm:$0xff]
        %v454 = vld [vmem:[%s211 + $0x4a0] sm:$0xff]
        %v455 = vld [vmem:[%s211 + $0x4a8] sm:$0xff]
        %v456 = vld [vmem:[%s211 + $0x4b0] sm:$0xff]
        %v457 = vld [vmem:[%s211 + $0x4b8] sm:$0xff]
        %v458 = vld [vmem:[%s211 + $0x4c0] sm:$0xff]
        %v459 = vld [vmem:[%s211 + $0x4c8] sm:$0xff]
        %v460 = vld [vmem:[%s211 + $0x4d0] sm:$0xff]
        %v461 = vld [vmem:[%s211 + $0x4d8] sm:$0xff]
        %v462 = vld [vmem:[%s211 + $0x4e0] sm:$0xff]
        %v463 = vld [vmem:[%s211 + $0x4e8] sm:$0xff]
        %v464 = vld [vmem:[%s211 + $0x4f0] sm:$0xff]
        %v465 = vld [vmem:[%s211 + $0x4f8] sm:$0xff]
        %v466 = vld [vmem:[%s211 + $0x500] sm:$0xff]
        %v467 = vld [vmem:[%s211 + $0x508] sm:$0xff]
        %v468 = vld [vmem:[%s211 + $0x510] sm:$0xff]
        %v469 = vld [vmem:[%s211 + $0x518] sm:$0xff]
        %v470 = vld [vmem:[%s211 + $0x520] sm:$0xff]
        %v471 = vld [vmem:[%s211 + $0x528] sm:$0xff]
        %v472 = vld [vmem:[%s211 + $0x530] sm:$0xff]
        %v473 = vld [vmem:[%s211 + $0x538] sm:$0xff]
        %v474 = vld [vmem:[%s211 + $0x540] sm:$0xff]
        %v475 = vld [vmem:[%s211 + $0x548] sm:$0xff]
        %v476 = vld [vmem:[%s211 + $0x550] sm:$0xff]
        %v477 = vld [vmem:[%s211 + $0x558] sm:$0xff]
        %v478 = vld [vmem:[%s211 + $0x560] sm:$0xff]
        %v479 = vld [vmem:[%s211 + $0x568] sm:$0xff]
        %v480 = vld [vmem:[%s211 + $0x570] sm:$0xff]
        %v481 = vld [vmem:[%s211 + $0x578] sm:$0xff]
        %v482 = vld [vmem:[%s211 + $0x580] sm:$0xff]
        %v483 = vld [vmem:[%s211 + $0x588] sm:$0xff]
        %v484 = vld [vmem:[%s211 + $0x590] sm:$0xff]
        %v485 = vld [vmem:[%s211 + $0x598] sm:$0xff]
        %v486 = vld [vmem:[%s211 + $0x5a0] sm:$0xff]
        %v487 = vld [vmem:[%s211 + $0x5a8] sm:$0xff]
        %v488 = vld [vmem:[%s211 + $0x5b0] sm:$0xff]
        %v489 = vld [vmem:[%s211 + $0x5b8] sm:$0xff]
        %v490 = vld [vmem:[%s211 + $0x5c0] sm:$0xff]
        %v491 = vld [vmem:[%s211 + $0x5c8] sm:$0xff]
        %v492 = vld [vmem:[%s211 + $0x5d0] sm:$0xff]
        %v493 = vld [vmem:[%s211 + $0x5d8] sm:$0xff]
        %v494 = vld [vmem:[%s211 + $0x5e0] sm:$0xff]
        %v495 = vld [vmem:[%s211 + $0x5e8] sm:$0xff]
        %v496 = vld [vmem:[%s211 + $0x5f0] sm:$0xff]
        %v497 = vld [vmem:[%s211 + $0x5f8] sm:$0xff]
        %v498 = vld [vmem:[%s211 + $0x600] sm:$0xff]
        %v499 = vld [vmem:[%s211 + $0x608] sm:$0xff]
        %v500 = vld [vmem:[%s211 + $0x610] sm:$0xff]
        %v501 = vld [vmem:[%s211 + $0x618] sm:$0xff]
        %v502 = vld [vmem:[%s211 + $0x620] sm:$0xff]
        %v503 = vld [vmem:[%s211 + $0x628] sm:$0xff]
        %v504 = vld [vmem:[%s211 + $0x630] sm:$0xff]
        %v505 = vld [vmem:[%s211 + $0x638] sm:$0xff]
        %v506 = vld [vmem:[%s211 + $0x640] sm:$0xff]
        %v507 = vld [vmem:[%s211 + $0x648] sm:$0xff]
        %v508 = vld [vmem:[%s211 + $0x650] sm:$0xff]
        %v509 = vld [vmem:[%s211 + $0x658] sm:$0xff]
        %v510 = vld [vmem:[%s211 + $0x660] sm:$0xff]
        %v511 = vld [vmem:[%s211 + $0x668] sm:$0xff]
        %v512 = vld [vmem:[%s211 + $0x670] sm:$0xff]
        %v513 = vld [vmem:[%s211 + $0x678] sm:$0xff]
        %v514 = vld [vmem:[%s211 + $0x680] sm:$0xff]
        %v515 = vld [vmem:[%s211 + $0x688] sm:$0xff]
        %v516 = vld [vmem:[%s211 + $0x690] sm:$0xff]
        %v517 = vld [vmem:[%s211 + $0x698] sm:$0xff]
        %v518 = vld [vmem:[%s211 + $0x6a0] sm:$0xff]
        %v519 = vld [vmem:[%s211 + $0x6a8] sm:$0xff]
        %v520 = vld [vmem:[%s211 + $0x6b0] sm:$0xff]
        %v521 = vld [vmem:[%s211 + $0x6b8] sm:$0xff]
        %v522 = vld [vmem:[%s211 + $0x6c0] sm:$0xff]
        %v523 = vld [vmem:[%s211 + $0x6c8] sm:$0xff]
        %v524 = vld [vmem:[%s211 + $0x6d0] sm:$0xff]
        %v525 = vld [vmem:[%s211 + $0x6d8] sm:$0xff]
        %v526 = vld [vmem:[%s211 + $0x6e0] sm:$0xff]
        %v527 = vld [vmem:[%s211 + $0x6e8] sm:$0xff]
        %v528 = vld [vmem:[%s211 + $0x6f0] sm:$0xff]
        %v529 = vld [vmem:[%s211 + $0x6f8] sm:$0xff]
        %v530 = vld [vmem:[%s211 + $0x700] sm:$0xff]
        %v531 = vld [vmem:[%s211 + $0x708] sm:$0xff]
        %v532 = vld [vmem:[%s211 + $0x710] sm:$0xff]
        %v533 = vld [vmem:[%s211 + $0x718] sm:$0xff]
        %v534 = vld [vmem:[%s211 + $0x720] sm:$0xff]
        %v535 = vld [vmem:[%s211 + $0x728] sm:$0xff]
        %v536 = vld [vmem:[%s211 + $0x730] sm:$0xff]
        %v537 = vld [vmem:[%s211 + $0x738] sm:$0xff]
        %v538 = vld [vmem:[%s211 + $0x740] sm:$0xff]
        %v539 = vld [vmem:[%s211 + $0x748] sm:$0xff]
        %v540 = vld [vmem:[%s211 + $0x750] sm:$0xff]
        %v541 = vld [vmem:[%s211 + $0x758] sm:$0xff]
        %v542 = vld [vmem:[%s211 + $0x760] sm:$0xff]
        %v543 = vld [vmem:[%s211 + $0x768] sm:$0xff]
        %v544 = vld [vmem:[%s211 + $0x770] sm:$0xff]
        %v545 = vld [vmem:[%s211 + $0x778] sm:$0xff]
        %v546 = vld [vmem:[%s211 + $0x780] sm:$0xff]
        %v547 = vld [vmem:[%s211 + $0x788] sm:$0xff]
        %v548 = vld [vmem:[%s211 + $0x790] sm:$0xff]
        %v549 = vld [vmem:[%s211 + $0x798] sm:$0xff]
        %v550 = vld [vmem:[%s211 + $0x7a0] sm:$0xff]
        %v551 = vld [vmem:[%s211 + $0x7a8] sm:$0xff]
        %v552 = vld [vmem:[%s211 + $0x7b0] sm:$0xff]
        %v553 = vld [vmem:[%s211 + $0x7b8] sm:$0xff]
        %v554 = vld [vmem:[%s211 + $0x7c0] sm:$0xff]
        %v555 = vld [vmem:[%s211 + $0x7c8] sm:$0xff]
        %v556 = vld [vmem:[%s211 + $0x7d0] sm:$0xff]
        %v557 = vld [vmem:[%s211 + $0x7d8] sm:$0xff]
        %v558 = vld [vmem:[%s211 + $0x7e0] sm:$0xff]
        %v559 = vld [vmem:[%s211 + $0x7e8] sm:$0xff]
        %v560 = vld [vmem:[%s211 + $0x7f0] sm:$0xff]
        %v561 = vld [vmem:[%s211 + $0x7f8] sm:$0xff]
        %v562 = vld [vmem:[%s211 + $0x800] sm:$0xff]
        %v563 = vld [vmem:[%s211 + $0x808] sm:$0xff]
        %v564 = vld [vmem:[%s211 + $0x810] sm:$0xff]
        %v565 = vld [vmem:[%s211 + $0x818] sm:$0xff]
        %v566 = vld [vmem:[%s211 + $0x820] sm:$0xff]
        %v567 = vld [vmem:[%s211 + $0x828] sm:$0xff]
        %v568 = vld [vmem:[%s211 + $0x830] sm:$0xff]
        %v569 = vld [vmem:[%s211 + $0x838] sm:$0xff]
        %v570 = vld [vmem:[%s211 + $0x840] sm:$0xff]
        %v571 = vld [vmem:[%s211 + $0x848] sm:$0xff]
        %v572 = vld [vmem:[%s211 + $0x850] sm:$0xff]
        %v573 = vld [vmem:[%s211 + $0x858] sm:$0xff]
        %v574 = vld [vmem:[%s211 + $0x860] sm:$0xff]
        %v575 = vld [vmem:[%s211 + $0x868] sm:$0xff]
        %v576 = vld [vmem:[%s211 + $0x870] sm:$0xff]
        %v577 = vld [vmem:[%s211 + $0x878] sm:$0xff]
        %v578 = vld [vmem:[%s211 + $0x880] sm:$0xff]
        %v579 = vld [vmem:[%s211 + $0x888] sm:$0xff]
        %v580 = vld [vmem:[%s211 + $0x890] sm:$0xff]
        %v581 = vld [vmem:[%s211 + $0x898] sm:$0xff]
        %v582 = vld [vmem:[%s211 + $0x8a0] sm:$0xff]
        %v583 = vld [vmem:[%s211 + $0x8a8] sm:$0xff]
        %v584 = vld [vmem:[%s211 + $0x8b0] sm:$0xff]
        %v585 = vld [vmem:[%s211 + $0x8b8] sm:$0xff]
        %v586 = vld [vmem:[%s211 + $0x8c0] sm:$0xff]
        %v587 = vld [vmem:[%s211 + $0x8c8] sm:$0xff]
        %v588 = vld [vmem:[%s211 + $0x8d0] sm:$0xff]
        %v589 = vld [vmem:[%s211 + $0x8d8] sm:$0xff]
        %v590 = vld [vmem:[%s211 + $0x8e0] sm:$0xff]
        %v591 = vld [vmem:[%s211 + $0x8e8] sm:$0xff]
        %v592 = vld [vmem:[%s211 + $0x8f0] sm:$0xff]
        %v593 = vld [vmem:[%s211 + $0x8f8] sm:$0xff]
        %v594 = vld [vmem:[%s211 + $0x900] sm:$0xff]
        %v595 = vld [vmem:[%s211 + $0x908] sm:$0xff]
        %v596 = vld [vmem:[%s211 + $0x910] sm:$0xff]
        %v597 = vld [vmem:[%s211 + $0x918] sm:$0xff]
        %v598 = vld [vmem:[%s211 + $0x920] sm:$0xff]
        %v599 = vld [vmem:[%s211 + $0x928] sm:$0xff]
        %v600 = vld [vmem:[%s211 + $0x930] sm:$0xff]
        %v601 = vld [vmem:[%s211 + $0x938] sm:$0xff]
        %v602 = vld [vmem:[%s211 + $0x940] sm:$0xff]
        %v603 = vld [vmem:[%s211 + $0x948] sm:$0xff]
        %v604 = vld [vmem:[%s211 + $0x950] sm:$0xff]
        %v605 = vld [vmem:[%s211 + $0x958] sm:$0xff]
        %v606 = vld [vmem:[%s211 + $0x960] sm:$0xff]
        %v607 = vld [vmem:[%s211 + $0x968] sm:$0xff]
        %v608 = vld [vmem:[%s211 + $0x970] sm:$0xff]
        %v609 = vld [vmem:[%s211 + $0x978] sm:$0xff]
        %v610 = vld [vmem:[%s211 + $0x980] sm:$0xff]
        %v611 = vld [vmem:[%s211 + $0x988] sm:$0xff]
        %v612 = vld [vmem:[%s211 + $0x990] sm:$0xff]
        %v613 = vld [vmem:[%s211 + $0x998] sm:$0xff]
        %v614 = vld [vmem:[%s211 + $0x9a0] sm:$0xff]
        %v615 = vld [vmem:[%s211 + $0x9a8] sm:$0xff]
        %v616 = vld [vmem:[%s211 + $0x9b0] sm:$0xff]
        %v617 = vld [vmem:[%s211 + $0x9b8] sm:$0xff]
        %v618 = vld [vmem:[%s211 + $0x9c0] sm:$0xff]
        %v619 = vld [vmem:[%s211 + $0x9c8] sm:$0xff]
        %v620 = vld [vmem:[%s211 + $0x9d0] sm:$0xff]
        %v621 = vld [vmem:[%s211 + $0x9d8] sm:$0xff]
        %v622 = vld [vmem:[%s211 + $0x9e0] sm:$0xff]
        %v623 = vld [vmem:[%s211 + $0x9e8] sm:$0xff]
        %v624 = vld [vmem:[%s211 + $0x9f0] sm:$0xff]
        %v625 = vld [vmem:[%s211 + $0x9f8] sm:$0xff]
        %v626 = vld [vmem:[%s211 + $0xa00] sm:$0xff]
        %v627 = vld [vmem:[%s211 + $0xa08] sm:$0xff]
        %v628 = vld [vmem:[%s211 + $0xa10] sm:$0xff]
        %v629 = vld [vmem:[%s211 + $0xa18] sm:$0xff]
        %v630 = vld [vmem:[%s211 + $0xa20] sm:$0xff]
        %v631 = vld [vmem:[%s211 + $0xa28] sm:$0xff]
        %v632 = vld [vmem:[%s211 + $0xa30] sm:$0xff]
        %v633 = vld [vmem:[%s211 + $0xa38] sm:$0xff]
        %v634 = vld [vmem:[%s211 + $0xa40] sm:$0xff]
        %v635 = vld [vmem:[%s211 + $0xa48] sm:$0xff]
        %v636 = vld [vmem:[%s211 + $0xa50] sm:$0xff]
        %v637 = vld [vmem:[%s211 + $0xa58] sm:$0xff]
        %v638 = vld [vmem:[%s211 + $0xa60] sm:$0xff]
        %v639 = vld [vmem:[%s211 + $0xa68] sm:$0xff]
        %v640 = vld [vmem:[%s211 + $0xa70] sm:$0xff]
        %v641 = vld [vmem:[%s211 + $0xa78] sm:$0xff]
        %v642 = vld [vmem:[%s211 + $0xa80] sm:$0xff]
        %v643 = vld [vmem:[%s211 + $0xa88] sm:$0xff]
        %v644 = vld [vmem:[%s211 + $0xa90] sm:$0xff]
        %v645 = vld [vmem:[%s211 + $0xa98] sm:$0xff]
        %v646 = vld [vmem:[%s211 + $0xaa0] sm:$0xff]
        %v647 = vld [vmem:[%s211 + $0xaa8] sm:$0xff]
        %v648 = vld [vmem:[%s211 + $0xab0] sm:$0xff]
        %v649 = vld [vmem:[%s211 + $0xab8] sm:$0xff]
        %v650 = vld [vmem:[%s211 + $0xac0] sm:$0xff]
        %v651 = vld [vmem:[%s211 + $0xac8] sm:$0xff]
        %v652 = vld [vmem:[%s211 + $0xad0] sm:$0xff]
        %v653 = vld [vmem:[%s211 + $0xad8] sm:$0xff]
        %v654 = vld [vmem:[%s211 + $0xae0] sm:$0xff]
        %v655 = vld [vmem:[%s211 + $0xae8] sm:$0xff]
        %v656 = vld [vmem:[%s211 + $0xaf0] sm:$0xff]
        %v657 = vld [vmem:[%s211 + $0xaf8] sm:$0xff]
        %v658 = vld [vmem:[%s211 + $0xb00] sm:$0xff]
        %v659 = vld [vmem:[%s211 + $0xb08] sm:$0xff]
        %v660 = vld [vmem:[%s211 + $0xb10] sm:$0xff]
        %v661 = vld [vmem:[%s211 + $0xb18] sm:$0xff]
        %v662 = vld [vmem:[%s211 + $0xb20] sm:$0xff]
        %v663 = vld [vmem:[%s211 + $0xb28] sm:$0xff]
        %v664 = vld [vmem:[%s211 + $0xb30] sm:$0xff]
        %v665 = vld [vmem:[%s211 + $0xb38] sm:$0xff]
        %v666 = vld [vmem:[%s211 + $0xb40] sm:$0xff]
        %v667 = vld [vmem:[%s211 + $0xb48] sm:$0xff]
        %v668 = vld [vmem:[%s211 + $0xb50] sm:$0xff]
        %v669 = vld [vmem:[%s211 + $0xb58] sm:$0xff]
        %v670 = vld [vmem:[%s211 + $0xb60] sm:$0xff]
        %v671 = vld [vmem:[%s211 + $0xb68] sm:$0xff]
        %v672 = vld [vmem:[%s211 + $0xb70] sm:$0xff]
        %v673 = vld [vmem:[%s211 + $0xb78] sm:$0xff]
        %v674 = vld [vmem:[%s211 + $0xb80] sm:$0xff]
        %v675 = vld [vmem:[%s211 + $0xb88] sm:$0xff]
        %v676 = vld [vmem:[%s211 + $0xb90] sm:$0xff]
        %v677 = vld [vmem:[%s211 + $0xb98] sm:$0xff]
        %v678 = vld [vmem:[%s211 + $0xba0] sm:$0xff]
        %v679 = vld [vmem:[%s211 + $0xba8] sm:$0xff]
        %v680 = vld [vmem:[%s211 + $0xbb0] sm:$0xff]
        %v681 = vld [vmem:[%s211 + $0xbb8] sm:$0xff]
        %v682 = vld [vmem:[%s211 + $0xbc0] sm:$0xff]
        %v683 = vld [vmem:[%s211 + $0xbc8] sm:$0xff]
        %v684 = vld [vmem:[%s211 + $0xbd0] sm:$0xff]
        %v685 = vld [vmem:[%s211 + $0xbd8] sm:$0xff]
        %v686 = vld [vmem:[%s211 + $0xbe0] sm:$0xff]
        %v687 = vld [vmem:[%s211 + $0xbe8] sm:$0xff]
        %v688 = vld [vmem:[%s211 + $0xbf0] sm:$0xff]
        %v689 = vld [vmem:[%s211 + $0xbf8] sm:$0xff]
        %v690 = vld [vmem:[%s211 + $0xc00] sm:$0xff]
        %v691 = vld [vmem:[%s211 + $0xc08] sm:$0xff]
        %v692 = vld [vmem:[%s211 + $0xc10] sm:$0xff]
        %v693 = vld [vmem:[%s211 + $0xc18] sm:$0xff]
        %v694 = vld [vmem:[%s211 + $0xc20] sm:$0xff]
        %v695 = vld [vmem:[%s211 + $0xc28] sm:$0xff]
        %v696 = vld [vmem:[%s211 + $0xc30] sm:$0xff]
        %v697 = vld [vmem:[%s211 + $0xc38] sm:$0xff]
        %v698 = vld [vmem:[%s211 + $0xc40] sm:$0xff]
        %v699 = vld [vmem:[%s211 + $0xc48] sm:$0xff]
        %v700 = vld [vmem:[%s211 + $0xc50] sm:$0xff]
        %v701 = vld [vmem:[%s211 + $0xc58] sm:$0xff]
        %v702 = vld [vmem:[%s211 + $0xc60] sm:$0xff]
        %v703 = vld [vmem:[%s211 + $0xc68] sm:$0xff]
        %v704 = vld [vmem:[%s211 + $0xc70] sm:$0xff]
        %v705 = vld [vmem:[%s211 + $0xc78] sm:$0xff]
        %v706 = vld [vmem:[%s211 + $0xc80] sm:$0xff]
        %v707 = vld [vmem:[%s211 + $0xc88] sm:$0xff]
        %v708 = vld [vmem:[%s211 + $0xc90] sm:$0xff]
        %v709 = vld [vmem:[%s211 + $0xc98] sm:$0xff]
        %v710 = vld [vmem:[%s211 + $0xca0] sm:$0xff]
        %v711 = vld [vmem:[%s211 + $0xca8] sm:$0xff]
        %v712 = vld [vmem:[%s211 + $0xcb0] sm:$0xff]
        %v713 = vld [vmem:[%s211 + $0xcb8] sm:$0xff]
        %v714 = vld [vmem:[%s211 + $0xcc0] sm:$0xff]
        %v715 = vld [vmem:[%s211 + $0xcc8] sm:$0xff]
        %v716 = vld [vmem:[%s211 + $0xcd0] sm:$0xff]
        %v717 = vld [vmem:[%s211 + $0xcd8] sm:$0xff]
        %v718 = vld [vmem:[%s211 + $0xce0] sm:$0xff]
        %v719 = vld [vmem:[%s211 + $0xce8] sm:$0xff]
        %v720 = vld [vmem:[%s211 + $0xcf0] sm:$0xff]
        %v721 = vld [vmem:[%s211 + $0xcf8] sm:$0xff]
        %v722 = vld [vmem:[%s211 + $0xd00] sm:$0xff]
        %v723 = vld [vmem:[%s211 + $0xd08] sm:$0xff]
        %v724 = vld [vmem:[%s211 + $0xd10] sm:$0xff]
        %v725 = vld [vmem:[%s211 + $0xd18] sm:$0xff]
        %v726 = vld [vmem:[%s211 + $0xd20] sm:$0xff]
        %v727 = vld [vmem:[%s211 + $0xd28] sm:$0xff]
        %v728 = vld [vmem:[%s211 + $0xd30] sm:$0xff]
        %v729 = vld [vmem:[%s211 + $0xd38] sm:$0xff]
        %v730 = vld [vmem:[%s211 + $0xd40] sm:$0xff]
        %v731 = vld [vmem:[%s211 + $0xd48] sm:$0xff]
        %v732 = vld [vmem:[%s211 + $0xd50] sm:$0xff]
        %v733 = vld [vmem:[%s211 + $0xd58] sm:$0xff]
        %v734 = vld [vmem:[%s211 + $0xd60] sm:$0xff]
        %v735 = vld [vmem:[%s211 + $0xd68] sm:$0xff]
        %v736 = vld [vmem:[%s211 + $0xd70] sm:$0xff]
        %v737 = vld [vmem:[%s211 + $0xd78] sm:$0xff]
        %v738 = vld [vmem:[%s211 + $0xd80] sm:$0xff]
        %v739 = vld [vmem:[%s211 + $0xd88] sm:$0xff]
        %v740 = vld [vmem:[%s211 + $0xd90] sm:$0xff]
        %v741 = vld [vmem:[%s211 + $0xd98] sm:$0xff]
        %v742 = vld [vmem:[%s211 + $0xda0] sm:$0xff]
        %v743 = vld [vmem:[%s211 + $0xda8] sm:$0xff]
        %v744 = vld [vmem:[%s211 + $0xdb0] sm:$0xff]
        %v745 = vld [vmem:[%s211 + $0xdb8] sm:$0xff]
        %v746 = vld [vmem:[%s211 + $0xdc0] sm:$0xff]
        %v747 = vld [vmem:[%s211 + $0xdc8] sm:$0xff]
        %v748 = vld [vmem:[%s211 + $0xdd0] sm:$0xff]
        %v749 = vld [vmem:[%s211 + $0xdd8] sm:$0xff]
        %v750 = vld [vmem:[%s211 + $0xde0] sm:$0xff]
        %v751 = vld [vmem:[%s211 + $0xde8] sm:$0xff]
        %v752 = vld [vmem:[%s211 + $0xdf0] sm:$0xff]
        %v753 = vld [vmem:[%s211 + $0xdf8] sm:$0xff]
        %v754 = vld [vmem:[%s211 + $0xe00] sm:$0xff]
        %v755 = vld [vmem:[%s211 + $0xe08] sm:$0xff]
        %v756 = vld [vmem:[%s211 + $0xe10] sm:$0xff]
        %v757 = vld [vmem:[%s211 + $0xe18] sm:$0xff]
        %v758 = vld [vmem:[%s211 + $0xe20] sm:$0xff]
        %v759 = vld [vmem:[%s211 + $0xe28] sm:$0xff]
        %v760 = vld [vmem:[%s211 + $0xe30] sm:$0xff]
        %v761 = vld [vmem:[%s211 + $0xe38] sm:$0xff]
        %v762 = vld [vmem:[%s211 + $0xe40] sm:$0xff]
        %v763 = vld [vmem:[%s211 + $0xe48] sm:$0xff]
        %v764 = vld [vmem:[%s211 + $0xe50] sm:$0xff]
        %v765 = vld [vmem:[%s211 + $0xe58] sm:$0xff]
        %v766 = vld [vmem:[%s211 + $0xe60] sm:$0xff]
        %v767 = vld [vmem:[%s211 + $0xe68] sm:$0xff]
        %v768 = vld [vmem:[%s211 + $0xe70] sm:$0xff]
        %v769 = vld [vmem:[%s211 + $0xe78] sm:$0xff]
        %v770 = vld [vmem:[%s211 + $0xe80] sm:$0xff]
        %v771 = vld [vmem:[%s211 + $0xe88] sm:$0xff]
        %v772 = vld [vmem:[%s211 + $0xe90] sm:$0xff]
        %v773 = vld [vmem:[%s211 + $0xe98] sm:$0xff]
        %v774 = vld [vmem:[%s211 + $0xea0] sm:$0xff]
        %v775 = vld [vmem:[%s211 + $0xea8] sm:$0xff]
        %v776 = vld [vmem:[%s211 + $0xeb0] sm:$0xff]
        %v777 = vld [vmem:[%s211 + $0xeb8] sm:$0xff]
        %v778 = vld [vmem:[%s211 + $0xec0] sm:$0xff]
        %v779 = vld [vmem:[%s211 + $0xec8] sm:$0xff]
        %v780 = vld [vmem:[%s211 + $0xed0] sm:$0xff]
        %v781 = vld [vmem:[%s211 + $0xed8] sm:$0xff]
        %v782 = vld [vmem:[%s211 + $0xee0] sm:$0xff]
        %v783 = vld [vmem:[%s211 + $0xee8] sm:$0xff]
        %v784 = vld [vmem:[%s211 + $0xef0] sm:$0xff]
        %v785 = vld [vmem:[%s211 + $0xef8] sm:$0xff]
        %v786 = vld [vmem:[%s211 + $0xf00] sm:$0xff]
        %v787 = vld [vmem:[%s211 + $0xf08] sm:$0xff]
        %v788 = vld [vmem:[%s211 + $0xf10] sm:$0xff]
        %v789 = vld [vmem:[%s211 + $0xf18] sm:$0xff]
        %v790 = vld [vmem:[%s211 + $0xf20] sm:$0xff]
        %v791 = vld [vmem:[%s211 + $0xf28] sm:$0xff]
        %v792 = vld [vmem:[%s211 + $0xf30] sm:$0xff]
        %v793 = vld [vmem:[%s211 + $0xf38] sm:$0xff]
        %v794 = vld [vmem:[%s211 + $0xf40] sm:$0xff]
        %v795 = vld [vmem:[%s211 + $0xf48] sm:$0xff]
        %v796 = vld [vmem:[%s211 + $0xf50] sm:$0xff]
        %v797 = vld [vmem:[%s211 + $0xf58] sm:$0xff]
        %v798 = vld [vmem:[%s211 + $0xf60] sm:$0xff]
        %v799 = vld [vmem:[%s211 + $0xf68] sm:$0xff]
        %v800 = vld [vmem:[%s211 + $0xf70] sm:$0xff]
        %v801 = vld [vmem:[%s211 + $0xf78] sm:$0xff]
        %v802 = vld [vmem:[%s211 + $0xf80] sm:$0xff]
        %v803 = vld [vmem:[%s211 + $0xf88] sm:$0xff]
        %v804 = vld [vmem:[%s211 + $0xf90] sm:$0xff]
        %v805 = vld [vmem:[%s211 + $0xf98] sm:$0xff]
        %v806 = vld [vmem:[%s211 + $0xfa0] sm:$0xff]
        %v807 = vld [vmem:[%s211 + $0xfa8] sm:$0xff]
        %v808 = vld [vmem:[%s211 + $0xfb0] sm:$0xff]
        %v809 = vld [vmem:[%s211 + $0xfb8] sm:$0xff]
        %v810 = vld [vmem:[%s211 + $0xfc0] sm:$0xff]
        %v811 = vld [vmem:[%s211 + $0xfc8] sm:$0xff]
        %v812 = vld [vmem:[%s211 + $0xfd0] sm:$0xff]
        %v813 = vld [vmem:[%s211 + $0xfd8] sm:$0xff]
        %v814 = vld [vmem:[%s211 + $0xfe0] sm:$0xff]
        %v815 = vld [vmem:[%s211 + $0xfe8] sm:$0xff]
        %v816 = vld [vmem:[%s211 + $0xff0] sm:$0xff]
        %v817 = vld [vmem:[%s211 + $0xff8] sm:$0xff]
        %v818 = vld [vmem:[%s220] sm:$0xf]
        %v820 = vlaneseq
        %v821 = vshrl.u32 %v820, 7
        %v822 = vsub.s32 0, %v821
        %v823 = vrot.slane %v818, %v822
        %v824 = vlaneseq
        %v825 = vshrl.u32 %v824, 7
        %v826 = vsub.s32 1, %v825
        %v827 = vrot.slane %v818, %v826
        %v828 = vlaneseq
        %v829 = vshrl.u32 %v828, 7
        %v830 = vsub.s32 2, %v829
        %v831 = vrot.slane %v818, %v830
        %v832 = vlaneseq
        %v833 = vshrl.u32 %v832, 7
        %v834 = vsub.s32 3, %v833
        %v835 = vrot.slane %v818, %v834
        %v1352 = vunpack.c.l.b16 %v306
        %v1353 = vunpack.c.h.b16 %v306
        %v1354 = vunpack.c.l.b16 %v307
        %v1355 = vunpack.c.h.b16 %v307
        %v1356 = vunpack.c.l.b16 %v308
        %v1357 = vunpack.c.h.b16 %v308
        %v1358 = vunpack.c.l.b16 %v309
        %v1359 = vunpack.c.h.b16 %v309
        %v1360 = vunpack.c.l.b16 %v310
        %v1361 = vunpack.c.h.b16 %v310
        %v1362 = vunpack.c.l.b16 %v311
        %v1363 = vunpack.c.h.b16 %v311
        %v1364 = vunpack.c.l.b16 %v312
        %v1365 = vunpack.c.h.b16 %v312
        %v1366 = vunpack.c.l.b16 %v313
        %v1367 = vunpack.c.h.b16 %v313
        %v1368 = vunpack.c.l.b16 %v314
        %v1369 = vunpack.c.h.b16 %v314
        %v1370 = vunpack.c.l.b16 %v315
        %v1371 = vunpack.c.h.b16 %v315
        %v1372 = vunpack.c.l.b16 %v316
        %v1373 = vunpack.c.h.b16 %v316
        %v1374 = vunpack.c.l.b16 %v317
        %v1375 = vunpack.c.h.b16 %v317
        %v1376 = vunpack.c.l.b16 %v318
        %v1377 = vunpack.c.h.b16 %v318
        %v1378 = vunpack.c.l.b16 %v319
        %v1379 = vunpack.c.h.b16 %v319
        %v1380 = vunpack.c.l.b16 %v320
        %v1381 = vunpack.c.h.b16 %v320
        %v1382 = vunpack.c.l.b16 %v321
        %v1383 = vunpack.c.h.b16 %v321
        %v1384 = vunpack.c.l.b16 %v322
        %v1385 = vunpack.c.h.b16 %v322
        %v1386 = vunpack.c.l.b16 %v323
        %v1387 = vunpack.c.h.b16 %v323
        %v1388 = vunpack.c.l.b16 %v324
        %v1389 = vunpack.c.h.b16 %v324
        %v1390 = vunpack.c.l.b16 %v325
        %v1391 = vunpack.c.h.b16 %v325
        %v1392 = vunpack.c.l.b16 %v326
        %v1393 = vunpack.c.h.b16 %v326
        %v1394 = vunpack.c.l.b16 %v327
        %v1395 = vunpack.c.h.b16 %v327
        %v1396 = vunpack.c.l.b16 %v328
        %v1397 = vunpack.c.h.b16 %v328
        %v1398 = vunpack.c.l.b16 %v329
        %v1399 = vunpack.c.h.b16 %v329
        %v1400 = vunpack.c.l.b16 %v330
        %v1401 = vunpack.c.h.b16 %v330
        %v1402 = vunpack.c.l.b16 %v331
        %v1403 = vunpack.c.h.b16 %v331
        %v1404 = vunpack.c.l.b16 %v332
        %v1405 = vunpack.c.h.b16 %v332
        %v1406 = vunpack.c.l.b16 %v333
        %v1407 = vunpack.c.h.b16 %v333
        %v1408 = vunpack.c.l.b16 %v334
        %v1409 = vunpack.c.h.b16 %v334
        %v1410 = vunpack.c.l.b16 %v335
        %v1411 = vunpack.c.h.b16 %v335
        %v1412 = vunpack.c.l.b16 %v336
        %v1413 = vunpack.c.h.b16 %v336
        %v1414 = vunpack.c.l.b16 %v337
        %v1415 = vunpack.c.h.b16 %v337
        %v1416 = vunpack.c.l.b16 %v338
        %v1417 = vunpack.c.h.b16 %v338
        %v1418 = vunpack.c.l.b16 %v339
        %v1419 = vunpack.c.h.b16 %v339
        %v1420 = vunpack.c.l.b16 %v340
        %v1421 = vunpack.c.h.b16 %v340
        %v1422 = vunpack.c.l.b16 %v341
        %v1423 = vunpack.c.h.b16 %v341
        %v1424 = vunpack.c.l.b16 %v342
        %v1425 = vunpack.c.h.b16 %v342
        %v1426 = vunpack.c.l.b16 %v343
        %v1427 = vunpack.c.h.b16 %v343
        %v1428 = vunpack.c.l.b16 %v344
        %v1429 = vunpack.c.h.b16 %v344
        %v1430 = vunpack.c.l.b16 %v345
        %v1431 = vunpack.c.h.b16 %v345
        %v1432 = vunpack.c.l.b16 %v346
        %v1433 = vunpack.c.h.b16 %v346
        %v1434 = vunpack.c.l.b16 %v347
        %v1435 = vunpack.c.h.b16 %v347
        %v1436 = vunpack.c.l.b16 %v348
        %v1437 = vunpack.c.h.b16 %v348
        %v1438 = vunpack.c.l.b16 %v349
        %v1439 = vunpack.c.h.b16 %v349
        %v1440 = vunpack.c.l.b16 %v350
        %v1441 = vunpack.c.h.b16 %v350
        %v1442 = vunpack.c.l.b16 %v351
        %v1443 = vunpack.c.h.b16 %v351
        %v1444 = vunpack.c.l.b16 %v352
        %v1445 = vunpack.c.h.b16 %v352
        %v1446 = vunpack.c.l.b16 %v353
        %v1447 = vunpack.c.h.b16 %v353
        %v1448 = vunpack.c.l.b16 %v354
        %v1449 = vunpack.c.h.b16 %v354
        %v1450 = vunpack.c.l.b16 %v355
        %v1451 = vunpack.c.h.b16 %v355
        %v1452 = vunpack.c.l.b16 %v356
        %v1453 = vunpack.c.h.b16 %v356
        %v1454 = vunpack.c.l.b16 %v357
        %v1455 = vunpack.c.h.b16 %v357
        %v1456 = vunpack.c.l.b16 %v358
        %v1457 = vunpack.c.h.b16 %v358
        %v1458 = vunpack.c.l.b16 %v359
        %v1459 = vunpack.c.h.b16 %v359
        %v1460 = vunpack.c.l.b16 %v360
        %v1461 = vunpack.c.h.b16 %v360
        %v1462 = vunpack.c.l.b16 %v361
        %v1463 = vunpack.c.h.b16 %v361
        %v1464 = vunpack.c.l.b16 %v362
        %v1465 = vunpack.c.h.b16 %v362
        %v1466 = vunpack.c.l.b16 %v363
        %v1467 = vunpack.c.h.b16 %v363
        %v1468 = vunpack.c.l.b16 %v364
        %v1469 = vunpack.c.h.b16 %v364
        %v1470 = vunpack.c.l.b16 %v365
        %v1471 = vunpack.c.h.b16 %v365
        %v1472 = vunpack.c.l.b16 %v366
        %v1473 = vunpack.c.h.b16 %v366
        %v1474 = vunpack.c.l.b16 %v367
        %v1475 = vunpack.c.h.b16 %v367
        %v1476 = vunpack.c.l.b16 %v368
        %v1477 = vunpack.c.h.b16 %v368
        %v1478 = vunpack.c.l.b16 %v369
        %v1479 = vunpack.c.h.b16 %v369
        %v1480 = vunpack.c.l.b16 %v370
        %v1481 = vunpack.c.h.b16 %v370
        %v1482 = vunpack.c.l.b16 %v371
        %v1483 = vunpack.c.h.b16 %v371
        %v1484 = vunpack.c.l.b16 %v372
        %v1485 = vunpack.c.h.b16 %v372
        %v1486 = vunpack.c.l.b16 %v373
        %v1487 = vunpack.c.h.b16 %v373
        %v1488 = vunpack.c.l.b16 %v374
        %v1489 = vunpack.c.h.b16 %v374
        %v1490 = vunpack.c.l.b16 %v375
        %v1491 = vunpack.c.h.b16 %v375
        %v1492 = vunpack.c.l.b16 %v376
        %v1493 = vunpack.c.h.b16 %v376
        %v1494 = vunpack.c.l.b16 %v377
        %v1495 = vunpack.c.h.b16 %v377
        %v1496 = vunpack.c.l.b16 %v378
        %v1497 = vunpack.c.h.b16 %v378
        %v1498 = vunpack.c.l.b16 %v379
        %v1499 = vunpack.c.h.b16 %v379
        %v1500 = vunpack.c.l.b16 %v380
        %v1501 = vunpack.c.h.b16 %v380
        %v1502 = vunpack.c.l.b16 %v381
        %v1503 = vunpack.c.h.b16 %v381
        %v1504 = vunpack.c.l.b16 %v382
        %v1505 = vunpack.c.h.b16 %v382
        %v1506 = vunpack.c.l.b16 %v383
        %v1507 = vunpack.c.h.b16 %v383
        %v1508 = vunpack.c.l.b16 %v384
        %v1509 = vunpack.c.h.b16 %v384
        %v1510 = vunpack.c.l.b16 %v385
        %v1511 = vunpack.c.h.b16 %v385
        %v1512 = vunpack.c.l.b16 %v386
        %v1513 = vunpack.c.h.b16 %v386
        %v1514 = vunpack.c.l.b16 %v387
        %v1515 = vunpack.c.h.b16 %v387
        %v1516 = vunpack.c.l.b16 %v388
        %v1517 = vunpack.c.h.b16 %v388
        %v1518 = vunpack.c.l.b16 %v389
        %v1519 = vunpack.c.h.b16 %v389
        %v1520 = vunpack.c.l.b16 %v390
        %v1521 = vunpack.c.h.b16 %v390
        %v1522 = vunpack.c.l.b16 %v391
        %v1523 = vunpack.c.h.b16 %v391
        %v1524 = vunpack.c.l.b16 %v392
        %v1525 = vunpack.c.h.b16 %v392
        %v1526 = vunpack.c.l.b16 %v393
        %v1527 = vunpack.c.h.b16 %v393
        %v1528 = vunpack.c.l.b16 %v394
        %v1529 = vunpack.c.h.b16 %v394
        %v1530 = vunpack.c.l.b16 %v395
        %v1531 = vunpack.c.h.b16 %v395
        %v1532 = vunpack.c.l.b16 %v396
        %v1533 = vunpack.c.h.b16 %v396
        %v1534 = vunpack.c.l.b16 %v397
        %v1535 = vunpack.c.h.b16 %v397
        %v1536 = vunpack.c.l.b16 %v398
        %v1537 = vunpack.c.h.b16 %v398
        %v1538 = vunpack.c.l.b16 %v399
        %v1539 = vunpack.c.h.b16 %v399
        %v1540 = vunpack.c.l.b16 %v400
        %v1541 = vunpack.c.h.b16 %v400
        %v1542 = vunpack.c.l.b16 %v401
        %v1543 = vunpack.c.h.b16 %v401
        %v1544 = vunpack.c.l.b16 %v402
        %v1545 = vunpack.c.h.b16 %v402
        %v1546 = vunpack.c.l.b16 %v403
        %v1547 = vunpack.c.h.b16 %v403
        %v1548 = vunpack.c.l.b16 %v404
        %v1549 = vunpack.c.h.b16 %v404
        %v1550 = vunpack.c.l.b16 %v405
        %v1551 = vunpack.c.h.b16 %v405
        %v1552 = vunpack.c.l.b16 %v406
        %v1553 = vunpack.c.h.b16 %v406
        %v1554 = vunpack.c.l.b16 %v407
        %v1555 = vunpack.c.h.b16 %v407
        %v1556 = vunpack.c.l.b16 %v408
        %v1557 = vunpack.c.h.b16 %v408
        %v1558 = vunpack.c.l.b16 %v409
        %v1559 = vunpack.c.h.b16 %v409
        %v1560 = vunpack.c.l.b16 %v410
        %v1561 = vunpack.c.h.b16 %v410
        %v1562 = vunpack.c.l.b16 %v411
        %v1563 = vunpack.c.h.b16 %v411
        %v1564 = vunpack.c.l.b16 %v412
        %v1565 = vunpack.c.h.b16 %v412
        %v1566 = vunpack.c.l.b16 %v413
        %v1567 = vunpack.c.h.b16 %v413
        %v1568 = vunpack.c.l.b16 %v414
        %v1569 = vunpack.c.h.b16 %v414
        %v1570 = vunpack.c.l.b16 %v415
        %v1571 = vunpack.c.h.b16 %v415
        %v1572 = vunpack.c.l.b16 %v416
        %v1573 = vunpack.c.h.b16 %v416
        %v1574 = vunpack.c.l.b16 %v417
        %v1575 = vunpack.c.h.b16 %v417
        %v1576 = vunpack.c.l.b16 %v418
        %v1577 = vunpack.c.h.b16 %v418
        %v1578 = vunpack.c.l.b16 %v419
        %v1579 = vunpack.c.h.b16 %v419
        %v1580 = vunpack.c.l.b16 %v420
        %v1581 = vunpack.c.h.b16 %v420
        %v1582 = vunpack.c.l.b16 %v421
        %v1583 = vunpack.c.h.b16 %v421
        %v1584 = vunpack.c.l.b16 %v422
        %v1585 = vunpack.c.h.b16 %v422
        %v1586 = vunpack.c.l.b16 %v423
        %v1587 = vunpack.c.h.b16 %v423
        %v1588 = vunpack.c.l.b16 %v424
        %v1589 = vunpack.c.h.b16 %v424
        %v1590 = vunpack.c.l.b16 %v425
        %v1591 = vunpack.c.h.b16 %v425
        %v1592 = vunpack.c.l.b16 %v426
        %v1593 = vunpack.c.h.b16 %v426
        %v1594 = vunpack.c.l.b16 %v427
        %v1595 = vunpack.c.h.b16 %v427
        %v1596 = vunpack.c.l.b16 %v428
        %v1597 = vunpack.c.h.b16 %v428
        %v1598 = vunpack.c.l.b16 %v429
        %v1599 = vunpack.c.h.b16 %v429
        %v1600 = vunpack.c.l.b16 %v430
        %v1601 = vunpack.c.h.b16 %v430
        %v1602 = vunpack.c.l.b16 %v431
        %v1603 = vunpack.c.h.b16 %v431
        %v1604 = vunpack.c.l.b16 %v432
        %v1605 = vunpack.c.h.b16 %v432
        %v1606 = vunpack.c.l.b16 %v433
        %v1607 = vunpack.c.h.b16 %v433
        %v1608 = vunpack.c.l.b16 %v434
        %v1609 = vunpack.c.h.b16 %v434
        %v1610 = vunpack.c.l.b16 %v435
        %v1611 = vunpack.c.h.b16 %v435
        %v1612 = vunpack.c.l.b16 %v436
        %v1613 = vunpack.c.h.b16 %v436
        %v1614 = vunpack.c.l.b16 %v437
        %v1615 = vunpack.c.h.b16 %v437
        %v1616 = vunpack.c.l.b16 %v438
        %v1617 = vunpack.c.h.b16 %v438
        %v1618 = vunpack.c.l.b16 %v439
        %v1619 = vunpack.c.h.b16 %v439
        %v1620 = vunpack.c.l.b16 %v440
        %v1621 = vunpack.c.h.b16 %v440
        %v1622 = vunpack.c.l.b16 %v441
        %v1623 = vunpack.c.h.b16 %v441
        %v1624 = vunpack.c.l.b16 %v442
        %v1625 = vunpack.c.h.b16 %v442
        %v1626 = vunpack.c.l.b16 %v443
        %v1627 = vunpack.c.h.b16 %v443
        %v1628 = vunpack.c.l.b16 %v444
        %v1629 = vunpack.c.h.b16 %v444
        %v1630 = vunpack.c.l.b16 %v445
        %v1631 = vunpack.c.h.b16 %v445
        %v1632 = vunpack.c.l.b16 %v446
        %v1633 = vunpack.c.h.b16 %v446
        %v1634 = vunpack.c.l.b16 %v447
        %v1635 = vunpack.c.h.b16 %v447
        %v1636 = vunpack.c.l.b16 %v448
        %v1637 = vunpack.c.h.b16 %v448
        %v1638 = vunpack.c.l.b16 %v449
        %v1639 = vunpack.c.h.b16 %v449
        %v1640 = vunpack.c.l.b16 %v450
        %v1641 = vunpack.c.h.b16 %v450
        %v1642 = vunpack.c.l.b16 %v451
        %v1643 = vunpack.c.h.b16 %v451
        %v1644 = vunpack.c.l.b16 %v452
        %v1645 = vunpack.c.h.b16 %v452
        %v1646 = vunpack.c.l.b16 %v453
        %v1647 = vunpack.c.h.b16 %v453
        %v1648 = vunpack.c.l.b16 %v454
        %v1649 = vunpack.c.h.b16 %v454
        %v1650 = vunpack.c.l.b16 %v455
        %v1651 = vunpack.c.h.b16 %v455
        %v1652 = vunpack.c.l.b16 %v456
        %v1653 = vunpack.c.h.b16 %v456
        %v1654 = vunpack.c.l.b16 %v457
        %v1655 = vunpack.c.h.b16 %v457
        %v1656 = vunpack.c.l.b16 %v458
        %v1657 = vunpack.c.h.b16 %v458
        %v1658 = vunpack.c.l.b16 %v459
        %v1659 = vunpack.c.h.b16 %v459
        %v1660 = vunpack.c.l.b16 %v460
        %v1661 = vunpack.c.h.b16 %v460
        %v1662 = vunpack.c.l.b16 %v461
        %v1663 = vunpack.c.h.b16 %v461
        %v1664 = vunpack.c.l.b16 %v462
        %v1665 = vunpack.c.h.b16 %v462
        %v1666 = vunpack.c.l.b16 %v463
        %v1667 = vunpack.c.h.b16 %v463
        %v1668 = vunpack.c.l.b16 %v464
        %v1669 = vunpack.c.h.b16 %v464
        %v1670 = vunpack.c.l.b16 %v465
        %v1671 = vunpack.c.h.b16 %v465
        %v1672 = vunpack.c.l.b16 %v466
        %v1673 = vunpack.c.h.b16 %v466
        %v1674 = vunpack.c.l.b16 %v467
        %v1675 = vunpack.c.h.b16 %v467
        %v1676 = vunpack.c.l.b16 %v468
        %v1677 = vunpack.c.h.b16 %v468
        %v1678 = vunpack.c.l.b16 %v469
        %v1679 = vunpack.c.h.b16 %v469
        %v1680 = vunpack.c.l.b16 %v470
        %v1681 = vunpack.c.h.b16 %v470
        %v1682 = vunpack.c.l.b16 %v471
        %v1683 = vunpack.c.h.b16 %v471
        %v1684 = vunpack.c.l.b16 %v472
        %v1685 = vunpack.c.h.b16 %v472
        %v1686 = vunpack.c.l.b16 %v473
        %v1687 = vunpack.c.h.b16 %v473
        %v1688 = vunpack.c.l.b16 %v474
        %v1689 = vunpack.c.h.b16 %v474
        %v1690 = vunpack.c.l.b16 %v475
        %v1691 = vunpack.c.h.b16 %v475
        %v1692 = vunpack.c.l.b16 %v476
        %v1693 = vunpack.c.h.b16 %v476
        %v1694 = vunpack.c.l.b16 %v477
        %v1695 = vunpack.c.h.b16 %v477
        %v1696 = vunpack.c.l.b16 %v478
        %v1697 = vunpack.c.h.b16 %v478
        %v1698 = vunpack.c.l.b16 %v479
        %v1699 = vunpack.c.h.b16 %v479
        %v1700 = vunpack.c.l.b16 %v480
        %v1701 = vunpack.c.h.b16 %v480
        %v1702 = vunpack.c.l.b16 %v481
        %v1703 = vunpack.c.h.b16 %v481
        %v1704 = vunpack.c.l.b16 %v482
        %v1705 = vunpack.c.h.b16 %v482
        %v1706 = vunpack.c.l.b16 %v483
        %v1707 = vunpack.c.h.b16 %v483
        %v1708 = vunpack.c.l.b16 %v484
        %v1709 = vunpack.c.h.b16 %v484
        %v1710 = vunpack.c.l.b16 %v485
        %v1711 = vunpack.c.h.b16 %v485
        %v1712 = vunpack.c.l.b16 %v486
        %v1713 = vunpack.c.h.b16 %v486
        %v1714 = vunpack.c.l.b16 %v487
        %v1715 = vunpack.c.h.b16 %v487
        %v1716 = vunpack.c.l.b16 %v488
        %v1717 = vunpack.c.h.b16 %v488
        %v1718 = vunpack.c.l.b16 %v489
        %v1719 = vunpack.c.h.b16 %v489
        %v1720 = vunpack.c.l.b16 %v490
        %v1721 = vunpack.c.h.b16 %v490
        %v1722 = vunpack.c.l.b16 %v491
        %v1723 = vunpack.c.h.b16 %v491
        %v1724 = vunpack.c.l.b16 %v492
        %v1725 = vunpack.c.h.b16 %v492
        %v1726 = vunpack.c.l.b16 %v493
        %v1727 = vunpack.c.h.b16 %v493
        %v1728 = vunpack.c.l.b16 %v494
        %v1729 = vunpack.c.h.b16 %v494
        %v1730 = vunpack.c.l.b16 %v495
        %v1731 = vunpack.c.h.b16 %v495
        %v1732 = vunpack.c.l.b16 %v496
        %v1733 = vunpack.c.h.b16 %v496
        %v1734 = vunpack.c.l.b16 %v497
        %v1735 = vunpack.c.h.b16 %v497
        %v1736 = vunpack.c.l.b16 %v498
        %v1737 = vunpack.c.h.b16 %v498
        %v1738 = vunpack.c.l.b16 %v499
        %v1739 = vunpack.c.h.b16 %v499
        %v1740 = vunpack.c.l.b16 %v500
        %v1741 = vunpack.c.h.b16 %v500
        %v1742 = vunpack.c.l.b16 %v501
        %v1743 = vunpack.c.h.b16 %v501
        %v1744 = vunpack.c.l.b16 %v502
        %v1745 = vunpack.c.h.b16 %v502
        %v1746 = vunpack.c.l.b16 %v503
        %v1747 = vunpack.c.h.b16 %v503
        %v1748 = vunpack.c.l.b16 %v504
        %v1749 = vunpack.c.h.b16 %v504
        %v1750 = vunpack.c.l.b16 %v505
        %v1751 = vunpack.c.h.b16 %v505
        %v1752 = vunpack.c.l.b16 %v506
        %v1753 = vunpack.c.h.b16 %v506
        %v1754 = vunpack.c.l.b16 %v507
        %v1755 = vunpack.c.h.b16 %v507
        %v1756 = vunpack.c.l.b16 %v508
        %v1757 = vunpack.c.h.b16 %v508
        %v1758 = vunpack.c.l.b16 %v509
        %v1759 = vunpack.c.h.b16 %v509
        %v1760 = vunpack.c.l.b16 %v510
        %v1761 = vunpack.c.h.b16 %v510
        %v1762 = vunpack.c.l.b16 %v511
        %v1763 = vunpack.c.h.b16 %v511
        %v1764 = vunpack.c.l.b16 %v512
        %v1765 = vunpack.c.h.b16 %v512
        %v1766 = vunpack.c.l.b16 %v513
        %v1767 = vunpack.c.h.b16 %v513
        %v1768 = vunpack.c.l.b16 %v514
        %v1769 = vunpack.c.h.b16 %v514
        %v1770 = vunpack.c.l.b16 %v515
        %v1771 = vunpack.c.h.b16 %v515
        %v1772 = vunpack.c.l.b16 %v516
        %v1773 = vunpack.c.h.b16 %v516
        %v1774 = vunpack.c.l.b16 %v517
        %v1775 = vunpack.c.h.b16 %v517
        %v1776 = vunpack.c.l.b16 %v518
        %v1777 = vunpack.c.h.b16 %v518
        %v1778 = vunpack.c.l.b16 %v519
        %v1779 = vunpack.c.h.b16 %v519
        %v1780 = vunpack.c.l.b16 %v520
        %v1781 = vunpack.c.h.b16 %v520
        %v1782 = vunpack.c.l.b16 %v521
        %v1783 = vunpack.c.h.b16 %v521
        %v1784 = vunpack.c.l.b16 %v522
        %v1785 = vunpack.c.h.b16 %v522
        %v1786 = vunpack.c.l.b16 %v523
        %v1787 = vunpack.c.h.b16 %v523
        %v1788 = vunpack.c.l.b16 %v524
        %v1789 = vunpack.c.h.b16 %v524
        %v1790 = vunpack.c.l.b16 %v525
        %v1791 = vunpack.c.h.b16 %v525
        %v1792 = vunpack.c.l.b16 %v526
        %v1793 = vunpack.c.h.b16 %v526
        %v1794 = vunpack.c.l.b16 %v527
        %v1795 = vunpack.c.h.b16 %v527
        %v1796 = vunpack.c.l.b16 %v528
        %v1797 = vunpack.c.h.b16 %v528
        %v1798 = vunpack.c.l.b16 %v529
        %v1799 = vunpack.c.h.b16 %v529
        %v1800 = vunpack.c.l.b16 %v530
        %v1801 = vunpack.c.h.b16 %v530
        %v1802 = vunpack.c.l.b16 %v531
        %v1803 = vunpack.c.h.b16 %v531
        %v1804 = vunpack.c.l.b16 %v532
        %v1805 = vunpack.c.h.b16 %v532
        %v1806 = vunpack.c.l.b16 %v533
        %v1807 = vunpack.c.h.b16 %v533
        %v1808 = vunpack.c.l.b16 %v534
        %v1809 = vunpack.c.h.b16 %v534
        %v1810 = vunpack.c.l.b16 %v535
        %v1811 = vunpack.c.h.b16 %v535
        %v1812 = vunpack.c.l.b16 %v536
        %v1813 = vunpack.c.h.b16 %v536
        %v1814 = vunpack.c.l.b16 %v537
        %v1815 = vunpack.c.h.b16 %v537
        %v1816 = vunpack.c.l.b16 %v538
        %v1817 = vunpack.c.h.b16 %v538
        %v1818 = vunpack.c.l.b16 %v539
        %v1819 = vunpack.c.h.b16 %v539
        %v1820 = vunpack.c.l.b16 %v540
        %v1821 = vunpack.c.h.b16 %v540
        %v1822 = vunpack.c.l.b16 %v541
        %v1823 = vunpack.c.h.b16 %v541
        %v1824 = vunpack.c.l.b16 %v542
        %v1825 = vunpack.c.h.b16 %v542
        %v1826 = vunpack.c.l.b16 %v543
        %v1827 = vunpack.c.h.b16 %v543
        %v1828 = vunpack.c.l.b16 %v544
        %v1829 = vunpack.c.h.b16 %v544
        %v1830 = vunpack.c.l.b16 %v545
        %v1831 = vunpack.c.h.b16 %v545
        %v1832 = vunpack.c.l.b16 %v546
        %v1833 = vunpack.c.h.b16 %v546
        %v1834 = vunpack.c.l.b16 %v547
        %v1835 = vunpack.c.h.b16 %v547
        %v1836 = vunpack.c.l.b16 %v548
        %v1837 = vunpack.c.h.b16 %v548
        %v1838 = vunpack.c.l.b16 %v549
        %v1839 = vunpack.c.h.b16 %v549
        %v1840 = vunpack.c.l.b16 %v550
        %v1841 = vunpack.c.h.b16 %v550
        %v1842 = vunpack.c.l.b16 %v551
        %v1843 = vunpack.c.h.b16 %v551
        %v1844 = vunpack.c.l.b16 %v552
        %v1845 = vunpack.c.h.b16 %v552
        %v1846 = vunpack.c.l.b16 %v553
        %v1847 = vunpack.c.h.b16 %v553
        %v1848 = vunpack.c.l.b16 %v554
        %v1849 = vunpack.c.h.b16 %v554
        %v1850 = vunpack.c.l.b16 %v555
        %v1851 = vunpack.c.h.b16 %v555
        %v1852 = vunpack.c.l.b16 %v556
        %v1853 = vunpack.c.h.b16 %v556
        %v1854 = vunpack.c.l.b16 %v557
        %v1855 = vunpack.c.h.b16 %v557
        %v1856 = vunpack.c.l.b16 %v558
        %v1857 = vunpack.c.h.b16 %v558
        %v1858 = vunpack.c.l.b16 %v559
        %v1859 = vunpack.c.h.b16 %v559
        %v1860 = vunpack.c.l.b16 %v560
        %v1861 = vunpack.c.h.b16 %v560
        %v1862 = vunpack.c.l.b16 %v561
        %v1863 = vunpack.c.h.b16 %v561
        %v1864 = vunpack.c.l.b16 %v562
        %v1865 = vunpack.c.h.b16 %v562
        %v1866 = vunpack.c.l.b16 %v563
        %v1867 = vunpack.c.h.b16 %v563
        %v1868 = vunpack.c.l.b16 %v564
        %v1869 = vunpack.c.h.b16 %v564
        %v1870 = vunpack.c.l.b16 %v565
        %v1871 = vunpack.c.h.b16 %v565
        %v1872 = vunpack.c.l.b16 %v566
        %v1873 = vunpack.c.h.b16 %v566
        %v1874 = vunpack.c.l.b16 %v567
        %v1875 = vunpack.c.h.b16 %v567
        %v1876 = vunpack.c.l.b16 %v568
        %v1877 = vunpack.c.h.b16 %v568
        %v1878 = vunpack.c.l.b16 %v569
        %v1879 = vunpack.c.h.b16 %v569
        %v1880 = vunpack.c.l.b16 %v570
        %v1881 = vunpack.c.h.b16 %v570
        %v1882 = vunpack.c.l.b16 %v571
        %v1883 = vunpack.c.h.b16 %v571
        %v1884 = vunpack.c.l.b16 %v572
        %v1885 = vunpack.c.h.b16 %v572
        %v1886 = vunpack.c.l.b16 %v573
        %v1887 = vunpack.c.h.b16 %v573
        %v1888 = vunpack.c.l.b16 %v574
        %v1889 = vunpack.c.h.b16 %v574
        %v1890 = vunpack.c.l.b16 %v575
        %v1891 = vunpack.c.h.b16 %v575
        %v1892 = vunpack.c.l.b16 %v576
        %v1893 = vunpack.c.h.b16 %v576
        %v1894 = vunpack.c.l.b16 %v577
        %v1895 = vunpack.c.h.b16 %v577
        %v1896 = vunpack.c.l.b16 %v578
        %v1897 = vunpack.c.h.b16 %v578
        %v1898 = vunpack.c.l.b16 %v579
        %v1899 = vunpack.c.h.b16 %v579
        %v1900 = vunpack.c.l.b16 %v580
        %v1901 = vunpack.c.h.b16 %v580
        %v1902 = vunpack.c.l.b16 %v581
        %v1903 = vunpack.c.h.b16 %v581
        %v1904 = vunpack.c.l.b16 %v582
        %v1905 = vunpack.c.h.b16 %v582
        %v1906 = vunpack.c.l.b16 %v583
        %v1907 = vunpack.c.h.b16 %v583
        %v1908 = vunpack.c.l.b16 %v584
        %v1909 = vunpack.c.h.b16 %v584
        %v1910 = vunpack.c.l.b16 %v585
        %v1911 = vunpack.c.h.b16 %v585
        %v1912 = vunpack.c.l.b16 %v586
        %v1913 = vunpack.c.h.b16 %v586
        %v1914 = vunpack.c.l.b16 %v587
        %v1915 = vunpack.c.h.b16 %v587
        %v1916 = vunpack.c.l.b16 %v588
        %v1917 = vunpack.c.h.b16 %v588
        %v1918 = vunpack.c.l.b16 %v589
        %v1919 = vunpack.c.h.b16 %v589
        %v1920 = vunpack.c.l.b16 %v590
        %v1921 = vunpack.c.h.b16 %v590
        %v1922 = vunpack.c.l.b16 %v591
        %v1923 = vunpack.c.h.b16 %v591
        %v1924 = vunpack.c.l.b16 %v592
        %v1925 = vunpack.c.h.b16 %v592
        %v1926 = vunpack.c.l.b16 %v593
        %v1927 = vunpack.c.h.b16 %v593
        %v1928 = vunpack.c.l.b16 %v594
        %v1929 = vunpack.c.h.b16 %v594
        %v1930 = vunpack.c.l.b16 %v595
        %v1931 = vunpack.c.h.b16 %v595
        %v1932 = vunpack.c.l.b16 %v596
        %v1933 = vunpack.c.h.b16 %v596
        %v1934 = vunpack.c.l.b16 %v597
        %v1935 = vunpack.c.h.b16 %v597
        %v1936 = vunpack.c.l.b16 %v598
        %v1937 = vunpack.c.h.b16 %v598
        %v1938 = vunpack.c.l.b16 %v599
        %v1939 = vunpack.c.h.b16 %v599
        %v1940 = vunpack.c.l.b16 %v600
        %v1941 = vunpack.c.h.b16 %v600
        %v1942 = vunpack.c.l.b16 %v601
        %v1943 = vunpack.c.h.b16 %v601
        %v1944 = vunpack.c.l.b16 %v602
        %v1945 = vunpack.c.h.b16 %v602
        %v1946 = vunpack.c.l.b16 %v603
        %v1947 = vunpack.c.h.b16 %v603
        %v1948 = vunpack.c.l.b16 %v604
        %v1949 = vunpack.c.h.b16 %v604
        %v1950 = vunpack.c.l.b16 %v605
        %v1951 = vunpack.c.h.b16 %v605
        %v1952 = vunpack.c.l.b16 %v606
        %v1953 = vunpack.c.h.b16 %v606
        %v1954 = vunpack.c.l.b16 %v607
        %v1955 = vunpack.c.h.b16 %v607
        %v1956 = vunpack.c.l.b16 %v608
        %v1957 = vunpack.c.h.b16 %v608
        %v1958 = vunpack.c.l.b16 %v609
        %v1959 = vunpack.c.h.b16 %v609
        %v1960 = vunpack.c.l.b16 %v610
        %v1961 = vunpack.c.h.b16 %v610
        %v1962 = vunpack.c.l.b16 %v611
        %v1963 = vunpack.c.h.b16 %v611
        %v1964 = vunpack.c.l.b16 %v612
        %v1965 = vunpack.c.h.b16 %v612
        %v1966 = vunpack.c.l.b16 %v613
        %v1967 = vunpack.c.h.b16 %v613
        %v1968 = vunpack.c.l.b16 %v614
        %v1969 = vunpack.c.h.b16 %v614
        %v1970 = vunpack.c.l.b16 %v615
        %v1971 = vunpack.c.h.b16 %v615
        %v1972 = vunpack.c.l.b16 %v616
        %v1973 = vunpack.c.h.b16 %v616
        %v1974 = vunpack.c.l.b16 %v617
        %v1975 = vunpack.c.h.b16 %v617
        %v1976 = vunpack.c.l.b16 %v618
        %v1977 = vunpack.c.h.b16 %v618
        %v1978 = vunpack.c.l.b16 %v619
        %v1979 = vunpack.c.h.b16 %v619
        %v1980 = vunpack.c.l.b16 %v620
        %v1981 = vunpack.c.h.b16 %v620
        %v1982 = vunpack.c.l.b16 %v621
        %v1983 = vunpack.c.h.b16 %v621
        %v1984 = vunpack.c.l.b16 %v622
        %v1985 = vunpack.c.h.b16 %v622
        %v1986 = vunpack.c.l.b16 %v623
        %v1987 = vunpack.c.h.b16 %v623
        %v1988 = vunpack.c.l.b16 %v624
        %v1989 = vunpack.c.h.b16 %v624
        %v1990 = vunpack.c.l.b16 %v625
        %v1991 = vunpack.c.h.b16 %v625
        %v1992 = vunpack.c.l.b16 %v626
        %v1993 = vunpack.c.h.b16 %v626
        %v1994 = vunpack.c.l.b16 %v627
        %v1995 = vunpack.c.h.b16 %v627
        %v1996 = vunpack.c.l.b16 %v628
        %v1997 = vunpack.c.h.b16 %v628
        %v1998 = vunpack.c.l.b16 %v629
        %v1999 = vunpack.c.h.b16 %v629
        %v2000 = vunpack.c.l.b16 %v630
        %v2001 = vunpack.c.h.b16 %v630
        %v2002 = vunpack.c.l.b16 %v631
        %v2003 = vunpack.c.h.b16 %v631
        %v2004 = vunpack.c.l.b16 %v632
        %v2005 = vunpack.c.h.b16 %v632
        %v2006 = vunpack.c.l.b16 %v633
        %v2007 = vunpack.c.h.b16 %v633
        %v2008 = vunpack.c.l.b16 %v634
        %v2009 = vunpack.c.h.b16 %v634
        %v2010 = vunpack.c.l.b16 %v635
        %v2011 = vunpack.c.h.b16 %v635
        %v2012 = vunpack.c.l.b16 %v636
        %v2013 = vunpack.c.h.b16 %v636
        %v2014 = vunpack.c.l.b16 %v637
        %v2015 = vunpack.c.h.b16 %v637
        %v2016 = vunpack.c.l.b16 %v638
        %v2017 = vunpack.c.h.b16 %v638
        %v2018 = vunpack.c.l.b16 %v639
        %v2019 = vunpack.c.h.b16 %v639
        %v2020 = vunpack.c.l.b16 %v640
        %v2021 = vunpack.c.h.b16 %v640
        %v2022 = vunpack.c.l.b16 %v641
        %v2023 = vunpack.c.h.b16 %v641
        %v2024 = vunpack.c.l.b16 %v642
        %v2025 = vunpack.c.h.b16 %v642
        %v2026 = vunpack.c.l.b16 %v643
        %v2027 = vunpack.c.h.b16 %v643
        %v2028 = vunpack.c.l.b16 %v644
        %v2029 = vunpack.c.h.b16 %v644
        %v2030 = vunpack.c.l.b16 %v645
        %v2031 = vunpack.c.h.b16 %v645
        %v2032 = vunpack.c.l.b16 %v646
        %v2033 = vunpack.c.h.b16 %v646
        %v2034 = vunpack.c.l.b16 %v647
        %v2035 = vunpack.c.h.b16 %v647
        %v2036 = vunpack.c.l.b16 %v648
        %v2037 = vunpack.c.h.b16 %v648
        %v2038 = vunpack.c.l.b16 %v649
        %v2039 = vunpack.c.h.b16 %v649
        %v2040 = vunpack.c.l.b16 %v650
        %v2041 = vunpack.c.h.b16 %v650
        %v2042 = vunpack.c.l.b16 %v651
        %v2043 = vunpack.c.h.b16 %v651
        %v2044 = vunpack.c.l.b16 %v652
        %v2045 = vunpack.c.h.b16 %v652
        %v2046 = vunpack.c.l.b16 %v653
        %v2047 = vunpack.c.h.b16 %v653
        %v2048 = vunpack.c.l.b16 %v654
        %v2049 = vunpack.c.h.b16 %v654
        %v2050 = vunpack.c.l.b16 %v655
        %v2051 = vunpack.c.h.b16 %v655
        %v2052 = vunpack.c.l.b16 %v656
        %v2053 = vunpack.c.h.b16 %v656
        %v2054 = vunpack.c.l.b16 %v657
        %v2055 = vunpack.c.h.b16 %v657
        %v2056 = vunpack.c.l.b16 %v658
        %v2057 = vunpack.c.h.b16 %v658
        %v2058 = vunpack.c.l.b16 %v659
        %v2059 = vunpack.c.h.b16 %v659
        %v2060 = vunpack.c.l.b16 %v660
        %v2061 = vunpack.c.h.b16 %v660
        %v2062 = vunpack.c.l.b16 %v661
        %v2063 = vunpack.c.h.b16 %v661
        %v2064 = vunpack.c.l.b16 %v662
        %v2065 = vunpack.c.h.b16 %v662
        %v2066 = vunpack.c.l.b16 %v663
        %v2067 = vunpack.c.h.b16 %v663
        %v2068 = vunpack.c.l.b16 %v664
        %v2069 = vunpack.c.h.b16 %v664
        %v2070 = vunpack.c.l.b16 %v665
        %v2071 = vunpack.c.h.b16 %v665
        %v2072 = vunpack.c.l.b16 %v666
        %v2073 = vunpack.c.h.b16 %v666
        %v2074 = vunpack.c.l.b16 %v667
        %v2075 = vunpack.c.h.b16 %v667
        %v2076 = vunpack.c.l.b16 %v668
        %v2077 = vunpack.c.h.b16 %v668
        %v2078 = vunpack.c.l.b16 %v669
        %v2079 = vunpack.c.h.b16 %v669
        %v2080 = vunpack.c.l.b16 %v670
        %v2081 = vunpack.c.h.b16 %v670
        %v2082 = vunpack.c.l.b16 %v671
        %v2083 = vunpack.c.h.b16 %v671
        %v2084 = vunpack.c.l.b16 %v672
        %v2085 = vunpack.c.h.b16 %v672
        %v2086 = vunpack.c.l.b16 %v673
        %v2087 = vunpack.c.h.b16 %v673
        %v2088 = vunpack.c.l.b16 %v674
        %v2089 = vunpack.c.h.b16 %v674
        %v2090 = vunpack.c.l.b16 %v675
        %v2091 = vunpack.c.h.b16 %v675
        %v2092 = vunpack.c.l.b16 %v676
        %v2093 = vunpack.c.h.b16 %v676
        %v2094 = vunpack.c.l.b16 %v677
        %v2095 = vunpack.c.h.b16 %v677
        %v2096 = vunpack.c.l.b16 %v678
        %v2097 = vunpack.c.h.b16 %v678
        %v2098 = vunpack.c.l.b16 %v679
        %v2099 = vunpack.c.h.b16 %v679
        %v2100 = vunpack.c.l.b16 %v680
        %v2101 = vunpack.c.h.b16 %v680
        %v2102 = vunpack.c.l.b16 %v681
        %v2103 = vunpack.c.h.b16 %v681
        %v2104 = vunpack.c.l.b16 %v682
        %v2105 = vunpack.c.h.b16 %v682
        %v2106 = vunpack.c.l.b16 %v683
        %v2107 = vunpack.c.h.b16 %v683
        %v2108 = vunpack.c.l.b16 %v684
        %v2109 = vunpack.c.h.b16 %v684
        %v2110 = vunpack.c.l.b16 %v685
        %v2111 = vunpack.c.h.b16 %v685
        %v2112 = vunpack.c.l.b16 %v686
        %v2113 = vunpack.c.h.b16 %v686
        %v2114 = vunpack.c.l.b16 %v687
        %v2115 = vunpack.c.h.b16 %v687
        %v2116 = vunpack.c.l.b16 %v688
        %v2117 = vunpack.c.h.b16 %v688
        %v2118 = vunpack.c.l.b16 %v689
        %v2119 = vunpack.c.h.b16 %v689
        %v2120 = vunpack.c.l.b16 %v690
        %v2121 = vunpack.c.h.b16 %v690
        %v2122 = vunpack.c.l.b16 %v691
        %v2123 = vunpack.c.h.b16 %v691
        %v2124 = vunpack.c.l.b16 %v692
        %v2125 = vunpack.c.h.b16 %v692
        %v2126 = vunpack.c.l.b16 %v693
        %v2127 = vunpack.c.h.b16 %v693
        %v2128 = vunpack.c.l.b16 %v694
        %v2129 = vunpack.c.h.b16 %v694
        %v2130 = vunpack.c.l.b16 %v695
        %v2131 = vunpack.c.h.b16 %v695
        %v2132 = vunpack.c.l.b16 %v696
        %v2133 = vunpack.c.h.b16 %v696
        %v2134 = vunpack.c.l.b16 %v697
        %v2135 = vunpack.c.h.b16 %v697
        %v2136 = vunpack.c.l.b16 %v698
        %v2137 = vunpack.c.h.b16 %v698
        %v2138 = vunpack.c.l.b16 %v699
        %v2139 = vunpack.c.h.b16 %v699
        %v2140 = vunpack.c.l.b16 %v700
        %v2141 = vunpack.c.h.b16 %v700
        %v2142 = vunpack.c.l.b16 %v701
        %v2143 = vunpack.c.h.b16 %v701
        %v2144 = vunpack.c.l.b16 %v702
        %v2145 = vunpack.c.h.b16 %v702
        %v2146 = vunpack.c.l.b16 %v703
        %v2147 = vunpack.c.h.b16 %v703
        %v2148 = vunpack.c.l.b16 %v704
        %v2149 = vunpack.c.h.b16 %v704
        %v2150 = vunpack.c.l.b16 %v705
        %v2151 = vunpack.c.h.b16 %v705
        %v2152 = vunpack.c.l.b16 %v706
        %v2153 = vunpack.c.h.b16 %v706
        %v2154 = vunpack.c.l.b16 %v707
        %v2155 = vunpack.c.h.b16 %v707
        %v2156 = vunpack.c.l.b16 %v708
        %v2157 = vunpack.c.h.b16 %v708
        %v2158 = vunpack.c.l.b16 %v709
        %v2159 = vunpack.c.h.b16 %v709
        %v2160 = vunpack.c.l.b16 %v710
        %v2161 = vunpack.c.h.b16 %v710
        %v2162 = vunpack.c.l.b16 %v711
        %v2163 = vunpack.c.h.b16 %v711
        %v2164 = vunpack.c.l.b16 %v712
        %v2165 = vunpack.c.h.b16 %v712
        %v2166 = vunpack.c.l.b16 %v713
        %v2167 = vunpack.c.h.b16 %v713
        %v2168 = vunpack.c.l.b16 %v714
        %v2169 = vunpack.c.h.b16 %v714
        %v2170 = vunpack.c.l.b16 %v715
        %v2171 = vunpack.c.h.b16 %v715
        %v2172 = vunpack.c.l.b16 %v716
        %v2173 = vunpack.c.h.b16 %v716
        %v2174 = vunpack.c.l.b16 %v717
        %v2175 = vunpack.c.h.b16 %v717
        %v2176 = vunpack.c.l.b16 %v718
        %v2177 = vunpack.c.h.b16 %v718
        %v2178 = vunpack.c.l.b16 %v719
        %v2179 = vunpack.c.h.b16 %v719
        %v2180 = vunpack.c.l.b16 %v720
        %v2181 = vunpack.c.h.b16 %v720
        %v2182 = vunpack.c.l.b16 %v721
        %v2183 = vunpack.c.h.b16 %v721
        %v2184 = vunpack.c.l.b16 %v722
        %v2185 = vunpack.c.h.b16 %v722
        %v2186 = vunpack.c.l.b16 %v723
        %v2187 = vunpack.c.h.b16 %v723
        %v2188 = vunpack.c.l.b16 %v724
        %v2189 = vunpack.c.h.b16 %v724
        %v2190 = vunpack.c.l.b16 %v725
        %v2191 = vunpack.c.h.b16 %v725
        %v2192 = vunpack.c.l.b16 %v726
        %v2193 = vunpack.c.h.b16 %v726
        %v2194 = vunpack.c.l.b16 %v727
        %v2195 = vunpack.c.h.b16 %v727
        %v2196 = vunpack.c.l.b16 %v728
        %v2197 = vunpack.c.h.b16 %v728
        %v2198 = vunpack.c.l.b16 %v729
        %v2199 = vunpack.c.h.b16 %v729
        %v2200 = vunpack.c.l.b16 %v730
        %v2201 = vunpack.c.h.b16 %v730
        %v2202 = vunpack.c.l.b16 %v731
        %v2203 = vunpack.c.h.b16 %v731
        %v2204 = vunpack.c.l.b16 %v732
        %v2205 = vunpack.c.h.b16 %v732
        %v2206 = vunpack.c.l.b16 %v733
        %v2207 = vunpack.c.h.b16 %v733
        %v2208 = vunpack.c.l.b16 %v734
        %v2209 = vunpack.c.h.b16 %v734
        %v2210 = vunpack.c.l.b16 %v735
        %v2211 = vunpack.c.h.b16 %v735
        %v2212 = vunpack.c.l.b16 %v736
        %v2213 = vunpack.c.h.b16 %v736
        %v2214 = vunpack.c.l.b16 %v737
        %v2215 = vunpack.c.h.b16 %v737
        %v2216 = vunpack.c.l.b16 %v738
        %v2217 = vunpack.c.h.b16 %v738
        %v2218 = vunpack.c.l.b16 %v739
        %v2219 = vunpack.c.h.b16 %v739
        %v2220 = vunpack.c.l.b16 %v740
        %v2221 = vunpack.c.h.b16 %v740
        %v2222 = vunpack.c.l.b16 %v741
        %v2223 = vunpack.c.h.b16 %v741
        %v2224 = vunpack.c.l.b16 %v742
        %v2225 = vunpack.c.h.b16 %v742
        %v2226 = vunpack.c.l.b16 %v743
        %v2227 = vunpack.c.h.b16 %v743
        %v2228 = vunpack.c.l.b16 %v744
        %v2229 = vunpack.c.h.b16 %v744
        %v2230 = vunpack.c.l.b16 %v745
        %v2231 = vunpack.c.h.b16 %v745
        %v2232 = vunpack.c.l.b16 %v746
        %v2233 = vunpack.c.h.b16 %v746
        %v2234 = vunpack.c.l.b16 %v747
        %v2235 = vunpack.c.h.b16 %v747
        %v2236 = vunpack.c.l.b16 %v748
        %v2237 = vunpack.c.h.b16 %v748
        %v2238 = vunpack.c.l.b16 %v749
        %v2239 = vunpack.c.h.b16 %v749
        %v2240 = vunpack.c.l.b16 %v750
        %v2241 = vunpack.c.h.b16 %v750
        %v2242 = vunpack.c.l.b16 %v751
        %v2243 = vunpack.c.h.b16 %v751
        %v2244 = vunpack.c.l.b16 %v752
        %v2245 = vunpack.c.h.b16 %v752
        %v2246 = vunpack.c.l.b16 %v753
        %v2247 = vunpack.c.h.b16 %v753
        %v2248 = vunpack.c.l.b16 %v754
        %v2249 = vunpack.c.h.b16 %v754
        %v2250 = vunpack.c.l.b16 %v755
        %v2251 = vunpack.c.h.b16 %v755
        %v2252 = vunpack.c.l.b16 %v756
        %v2253 = vunpack.c.h.b16 %v756
        %v2254 = vunpack.c.l.b16 %v757
        %v2255 = vunpack.c.h.b16 %v757
        %v2256 = vunpack.c.l.b16 %v758
        %v2257 = vunpack.c.h.b16 %v758
        %v2258 = vunpack.c.l.b16 %v759
        %v2259 = vunpack.c.h.b16 %v759
        %v2260 = vunpack.c.l.b16 %v760
        %v2261 = vunpack.c.h.b16 %v760
        %v2262 = vunpack.c.l.b16 %v761
        %v2263 = vunpack.c.h.b16 %v761
        %v2264 = vunpack.c.l.b16 %v762
        %v2265 = vunpack.c.h.b16 %v762
        %v2266 = vunpack.c.l.b16 %v763
        %v2267 = vunpack.c.h.b16 %v763
        %v2268 = vunpack.c.l.b16 %v764
        %v2269 = vunpack.c.h.b16 %v764
        %v2270 = vunpack.c.l.b16 %v765
        %v2271 = vunpack.c.h.b16 %v765
        %v2272 = vunpack.c.l.b16 %v766
        %v2273 = vunpack.c.h.b16 %v766
        %v2274 = vunpack.c.l.b16 %v767
        %v2275 = vunpack.c.h.b16 %v767
        %v2276 = vunpack.c.l.b16 %v768
        %v2277 = vunpack.c.h.b16 %v768
        %v2278 = vunpack.c.l.b16 %v769
        %v2279 = vunpack.c.h.b16 %v769
        %v2280 = vunpack.c.l.b16 %v770
        %v2281 = vunpack.c.h.b16 %v770
        %v2282 = vunpack.c.l.b16 %v771
        %v2283 = vunpack.c.h.b16 %v771
        %v2284 = vunpack.c.l.b16 %v772
        %v2285 = vunpack.c.h.b16 %v772
        %v2286 = vunpack.c.l.b16 %v773
        %v2287 = vunpack.c.h.b16 %v773
        %v2288 = vunpack.c.l.b16 %v774
        %v2289 = vunpack.c.h.b16 %v774
        %v2290 = vunpack.c.l.b16 %v775
        %v2291 = vunpack.c.h.b16 %v775
        %v2292 = vunpack.c.l.b16 %v776
        %v2293 = vunpack.c.h.b16 %v776
        %v2294 = vunpack.c.l.b16 %v777
        %v2295 = vunpack.c.h.b16 %v777
        %v2296 = vunpack.c.l.b16 %v778
        %v2297 = vunpack.c.h.b16 %v778
        %v2298 = vunpack.c.l.b16 %v779
        %v2299 = vunpack.c.h.b16 %v779
        %v2300 = vunpack.c.l.b16 %v780
        %v2301 = vunpack.c.h.b16 %v780
        %v2302 = vunpack.c.l.b16 %v781
        %v2303 = vunpack.c.h.b16 %v781
        %v2304 = vunpack.c.l.b16 %v782
        %v2305 = vunpack.c.h.b16 %v782
        %v2306 = vunpack.c.l.b16 %v783
        %v2307 = vunpack.c.h.b16 %v783
        %v2308 = vunpack.c.l.b16 %v784
        %v2309 = vunpack.c.h.b16 %v784
        %v2310 = vunpack.c.l.b16 %v785
        %v2311 = vunpack.c.h.b16 %v785
        %v2312 = vunpack.c.l.b16 %v786
        %v2313 = vunpack.c.h.b16 %v786
        %v2314 = vunpack.c.l.b16 %v787
        %v2315 = vunpack.c.h.b16 %v787
        %v2316 = vunpack.c.l.b16 %v788
        %v2317 = vunpack.c.h.b16 %v788
        %v2318 = vunpack.c.l.b16 %v789
        %v2319 = vunpack.c.h.b16 %v789
        %v2320 = vunpack.c.l.b16 %v790
        %v2321 = vunpack.c.h.b16 %v790
        %v2322 = vunpack.c.l.b16 %v791
        %v2323 = vunpack.c.h.b16 %v791
        %v2324 = vunpack.c.l.b16 %v792
        %v2325 = vunpack.c.h.b16 %v792
        %v2326 = vunpack.c.l.b16 %v793
        %v2327 = vunpack.c.h.b16 %v793
        %v2328 = vunpack.c.l.b16 %v794
        %v2329 = vunpack.c.h.b16 %v794
        %v2330 = vunpack.c.l.b16 %v795
        %v2331 = vunpack.c.h.b16 %v795
        %v2332 = vunpack.c.l.b16 %v796
        %v2333 = vunpack.c.h.b16 %v796
        %v2334 = vunpack.c.l.b16 %v797
        %v2335 = vunpack.c.h.b16 %v797
        %v2336 = vunpack.c.l.b16 %v798
        %v2337 = vunpack.c.h.b16 %v798
        %v2338 = vunpack.c.l.b16 %v799
        %v2339 = vunpack.c.h.b16 %v799
        %v2340 = vunpack.c.l.b16 %v800
        %v2341 = vunpack.c.h.b16 %v800
        %v2342 = vunpack.c.l.b16 %v801
        %v2343 = vunpack.c.h.b16 %v801
        %v2344 = vunpack.c.l.b16 %v802
        %v2345 = vunpack.c.h.b16 %v802
        %v2346 = vunpack.c.l.b16 %v803
        %v2347 = vunpack.c.h.b16 %v803
        %v2348 = vunpack.c.l.b16 %v804
        %v2349 = vunpack.c.h.b16 %v804
        %v2350 = vunpack.c.l.b16 %v805
        %v2351 = vunpack.c.h.b16 %v805
        %v2352 = vunpack.c.l.b16 %v806
        %v2353 = vunpack.c.h.b16 %v806
        %v2354 = vunpack.c.l.b16 %v807
        %v2355 = vunpack.c.h.b16 %v807
        %v2356 = vunpack.c.l.b16 %v808
        %v2357 = vunpack.c.h.b16 %v808
        %v2358 = vunpack.c.l.b16 %v809
        %v2359 = vunpack.c.h.b16 %v809
        %v2360 = vunpack.c.l.b16 %v810
        %v2361 = vunpack.c.h.b16 %v810
        %v2362 = vunpack.c.l.b16 %v811
        %v2363 = vunpack.c.h.b16 %v811
        %v2364 = vunpack.c.l.b16 %v812
        %v2365 = vunpack.c.h.b16 %v812
        %v2366 = vunpack.c.l.b16 %v813
        %v2367 = vunpack.c.h.b16 %v813
        %v2368 = vunpack.c.l.b16 %v814
        %v2369 = vunpack.c.h.b16 %v814
        %v2370 = vunpack.c.l.b16 %v815
        %v2371 = vunpack.c.h.b16 %v815
        %v2372 = vunpack.c.l.b16 %v816
        %v2373 = vunpack.c.h.b16 %v816
        %v2374 = vunpack.c.l.b16 %v817
        %v2375 = vunpack.c.h.b16 %v817
        %v2376 = vpack.c.b16 %v1356, %v1352
        %v2377 = vpack.c.b16 %v1357, %v1353
        %v2378 = vpack.c.b16 %v1358, %v1354
        %v2379 = vpack.c.b16 %v1359, %v1355
        %v2380 = vpack.c.b16 %v1364, %v1360
        %v2381 = vpack.c.b16 %v1365, %v1361
        %v2382 = vpack.c.b16 %v1366, %v1362
        %v2383 = vpack.c.b16 %v1367, %v1363
        %v2384 = vpack.c.b16 %v1372, %v1368
        %v2385 = vpack.c.b16 %v1373, %v1369
        %v2386 = vpack.c.b16 %v1374, %v1370
        %v2387 = vpack.c.b16 %v1375, %v1371
        %v2388 = vpack.c.b16 %v1380, %v1376
        %v2389 = vpack.c.b16 %v1381, %v1377
        %v2390 = vpack.c.b16 %v1382, %v1378
        %v2391 = vpack.c.b16 %v1383, %v1379
        %v2392 = vpack.c.b16 %v1388, %v1384
        %v2393 = vpack.c.b16 %v1389, %v1385
        %v2394 = vpack.c.b16 %v1390, %v1386
        %v2395 = vpack.c.b16 %v1391, %v1387
        %v2396 = vpack.c.b16 %v1396, %v1392
        %v2397 = vpack.c.b16 %v1397, %v1393
        %v2398 = vpack.c.b16 %v1398, %v1394
        %v2399 = vpack.c.b16 %v1399, %v1395
        %v2400 = vpack.c.b16 %v1404, %v1400
        %v2401 = vpack.c.b16 %v1405, %v1401
        %v2402 = vpack.c.b16 %v1406, %v1402
        %v2403 = vpack.c.b16 %v1407, %v1403
        %v2404 = vpack.c.b16 %v1412, %v1408
        %v2405 = vpack.c.b16 %v1413, %v1409
        %v2406 = vpack.c.b16 %v1414, %v1410
        %v2407 = vpack.c.b16 %v1415, %v1411
        %v2408 = vpack.c.b16 %v1420, %v1416
        %v2409 = vpack.c.b16 %v1421, %v1417
        %v2410 = vpack.c.b16 %v1422, %v1418
        %v2411 = vpack.c.b16 %v1423, %v1419
        %v2412 = vpack.c.b16 %v1428, %v1424
        %v2413 = vpack.c.b16 %v1429, %v1425
        %v2414 = vpack.c.b16 %v1430, %v1426
        %v2415 = vpack.c.b16 %v1431, %v1427
        %v2416 = vpack.c.b16 %v1436, %v1432
        %v2417 = vpack.c.b16 %v1437, %v1433
        %v2418 = vpack.c.b16 %v1438, %v1434
        %v2419 = vpack.c.b16 %v1439, %v1435
        %v2420 = vpack.c.b16 %v1444, %v1440
        %v2421 = vpack.c.b16 %v1445, %v1441
        %v2422 = vpack.c.b16 %v1446, %v1442
        %v2423 = vpack.c.b16 %v1447, %v1443
        %v2424 = vpack.c.b16 %v1452, %v1448
        %v2425 = vpack.c.b16 %v1453, %v1449
        %v2426 = vpack.c.b16 %v1454, %v1450
        %v2427 = vpack.c.b16 %v1455, %v1451
        %v2428 = vpack.c.b16 %v1460, %v1456
        %v2429 = vpack.c.b16 %v1461, %v1457
        %v2430 = vpack.c.b16 %v1462, %v1458
        %v2431 = vpack.c.b16 %v1463, %v1459
        %v2432 = vpack.c.b16 %v1468, %v1464
        %v2433 = vpack.c.b16 %v1469, %v1465
        %v2434 = vpack.c.b16 %v1470, %v1466
        %v2435 = vpack.c.b16 %v1471, %v1467
        %v2436 = vpack.c.b16 %v1476, %v1472
        %v2437 = vpack.c.b16 %v1477, %v1473
        %v2438 = vpack.c.b16 %v1478, %v1474
        %v2439 = vpack.c.b16 %v1479, %v1475
        %v2440 = vpack.c.b16 %v1484, %v1480
        %v2441 = vpack.c.b16 %v1485, %v1481
        %v2442 = vpack.c.b16 %v1486, %v1482
        %v2443 = vpack.c.b16 %v1487, %v1483
        %v2444 = vpack.c.b16 %v1492, %v1488
        %v2445 = vpack.c.b16 %v1493, %v1489
        %v2446 = vpack.c.b16 %v1494, %v1490
        %v2447 = vpack.c.b16 %v1495, %v1491
        %v2448 = vpack.c.b16 %v1500, %v1496
        %v2449 = vpack.c.b16 %v1501, %v1497
        %v2450 = vpack.c.b16 %v1502, %v1498
        %v2451 = vpack.c.b16 %v1503, %v1499
        %v2452 = vpack.c.b16 %v1508, %v1504
        %v2453 = vpack.c.b16 %v1509, %v1505
        %v2454 = vpack.c.b16 %v1510, %v1506
        %v2455 = vpack.c.b16 %v1511, %v1507
        %v2456 = vpack.c.b16 %v1516, %v1512
        %v2457 = vpack.c.b16 %v1517, %v1513
        %v2458 = vpack.c.b16 %v1518, %v1514
        %v2459 = vpack.c.b16 %v1519, %v1515
        %v2460 = vpack.c.b16 %v1524, %v1520
        %v2461 = vpack.c.b16 %v1525, %v1521
        %v2462 = vpack.c.b16 %v1526, %v1522
        %v2463 = vpack.c.b16 %v1527, %v1523
        %v2464 = vpack.c.b16 %v1532, %v1528
        %v2465 = vpack.c.b16 %v1533, %v1529
        %v2466 = vpack.c.b16 %v1534, %v1530
        %v2467 = vpack.c.b16 %v1535, %v1531
        %v2468 = vpack.c.b16 %v1540, %v1536
        %v2469 = vpack.c.b16 %v1541, %v1537
        %v2470 = vpack.c.b16 %v1542, %v1538
        %v2471 = vpack.c.b16 %v1543, %v1539
        %v2472 = vpack.c.b16 %v1548, %v1544
        %v2473 = vpack.c.b16 %v1549, %v1545
        %v2474 = vpack.c.b16 %v1550, %v1546
        %v2475 = vpack.c.b16 %v1551, %v1547
        %v2476 = vpack.c.b16 %v1556, %v1552
        %v2477 = vpack.c.b16 %v1557, %v1553
        %v2478 = vpack.c.b16 %v1558, %v1554
        %v2479 = vpack.c.b16 %v1559, %v1555
        %v2480 = vpack.c.b16 %v1564, %v1560
        %v2481 = vpack.c.b16 %v1565, %v1561
        %v2482 = vpack.c.b16 %v1566, %v1562
        %v2483 = vpack.c.b16 %v1567, %v1563
        %v2484 = vpack.c.b16 %v1572, %v1568
        %v2485 = vpack.c.b16 %v1573, %v1569
        %v2486 = vpack.c.b16 %v1574, %v1570
        %v2487 = vpack.c.b16 %v1575, %v1571
        %v2488 = vpack.c.b16 %v1580, %v1576
        %v2489 = vpack.c.b16 %v1581, %v1577
        %v2490 = vpack.c.b16 %v1582, %v1578
        %v2491 = vpack.c.b16 %v1583, %v1579
        %v2492 = vpack.c.b16 %v1588, %v1584
        %v2493 = vpack.c.b16 %v1589, %v1585
        %v2494 = vpack.c.b16 %v1590, %v1586
        %v2495 = vpack.c.b16 %v1591, %v1587
        %v2496 = vpack.c.b16 %v1596, %v1592
        %v2497 = vpack.c.b16 %v1597, %v1593
        %v2498 = vpack.c.b16 %v1598, %v1594
        %v2499 = vpack.c.b16 %v1599, %v1595
        %v2500 = vpack.c.b16 %v1604, %v1600
        %v2501 = vpack.c.b16 %v1605, %v1601
        %v2502 = vpack.c.b16 %v1606, %v1602
        %v2503 = vpack.c.b16 %v1607, %v1603
        %v2504 = vpack.c.b16 %v1612, %v1608
        %v2505 = vpack.c.b16 %v1613, %v1609
        %v2506 = vpack.c.b16 %v1614, %v1610
        %v2507 = vpack.c.b16 %v1615, %v1611
        %v2508 = vpack.c.b16 %v1620, %v1616
        %v2509 = vpack.c.b16 %v1621, %v1617
        %v2510 = vpack.c.b16 %v1622, %v1618
        %v2511 = vpack.c.b16 %v1623, %v1619
        %v2512 = vpack.c.b16 %v1628, %v1624
        %v2513 = vpack.c.b16 %v1629, %v1625
        %v2514 = vpack.c.b16 %v1630, %v1626
        %v2515 = vpack.c.b16 %v1631, %v1627
        %v2516 = vpack.c.b16 %v1636, %v1632
        %v2517 = vpack.c.b16 %v1637, %v1633
        %v2518 = vpack.c.b16 %v1638, %v1634
        %v2519 = vpack.c.b16 %v1639, %v1635
        %v2520 = vpack.c.b16 %v1644, %v1640
        %v2521 = vpack.c.b16 %v1645, %v1641
        %v2522 = vpack.c.b16 %v1646, %v1642
        %v2523 = vpack.c.b16 %v1647, %v1643
        %v2524 = vpack.c.b16 %v1652, %v1648
        %v2525 = vpack.c.b16 %v1653, %v1649
        %v2526 = vpack.c.b16 %v1654, %v1650
        %v2527 = vpack.c.b16 %v1655, %v1651
        %v2528 = vpack.c.b16 %v1660, %v1656
        %v2529 = vpack.c.b16 %v1661, %v1657
        %v2530 = vpack.c.b16 %v1662, %v1658
        %v2531 = vpack.c.b16 %v1663, %v1659
        %v2532 = vpack.c.b16 %v1668, %v1664
        %v2533 = vpack.c.b16 %v1669, %v1665
        %v2534 = vpack.c.b16 %v1670, %v1666
        %v2535 = vpack.c.b16 %v1671, %v1667
        %v2536 = vpack.c.b16 %v1676, %v1672
        %v2537 = vpack.c.b16 %v1677, %v1673
        %v2538 = vpack.c.b16 %v1678, %v1674
        %v2539 = vpack.c.b16 %v1679, %v1675
        %v2540 = vpack.c.b16 %v1684, %v1680
        %v2541 = vpack.c.b16 %v1685, %v1681
        %v2542 = vpack.c.b16 %v1686, %v1682
        %v2543 = vpack.c.b16 %v1687, %v1683
        %v2544 = vpack.c.b16 %v1692, %v1688
        %v2545 = vpack.c.b16 %v1693, %v1689
        %v2546 = vpack.c.b16 %v1694, %v1690
        %v2547 = vpack.c.b16 %v1695, %v1691
        %v2548 = vpack.c.b16 %v1700, %v1696
        %v2549 = vpack.c.b16 %v1701, %v1697
        %v2550 = vpack.c.b16 %v1702, %v1698
        %v2551 = vpack.c.b16 %v1703, %v1699
        %v2552 = vpack.c.b16 %v1708, %v1704
        %v2553 = vpack.c.b16 %v1709, %v1705
        %v2554 = vpack.c.b16 %v1710, %v1706
        %v2555 = vpack.c.b16 %v1711, %v1707
        %v2556 = vpack.c.b16 %v1716, %v1712
        %v2557 = vpack.c.b16 %v1717, %v1713
        %v2558 = vpack.c.b16 %v1718, %v1714
        %v2559 = vpack.c.b16 %v1719, %v1715
        %v2560 = vpack.c.b16 %v1724, %v1720
        %v2561 = vpack.c.b16 %v1725, %v1721
        %v2562 = vpack.c.b16 %v1726, %v1722
        %v2563 = vpack.c.b16 %v1727, %v1723
        %v2564 = vpack.c.b16 %v1732, %v1728
        %v2565 = vpack.c.b16 %v1733, %v1729
        %v2566 = vpack.c.b16 %v1734, %v1730
        %v2567 = vpack.c.b16 %v1735, %v1731
        %v2568 = vpack.c.b16 %v1740, %v1736
        %v2569 = vpack.c.b16 %v1741, %v1737
        %v2570 = vpack.c.b16 %v1742, %v1738
        %v2571 = vpack.c.b16 %v1743, %v1739
        %v2572 = vpack.c.b16 %v1748, %v1744
        %v2573 = vpack.c.b16 %v1749, %v1745
        %v2574 = vpack.c.b16 %v1750, %v1746
        %v2575 = vpack.c.b16 %v1751, %v1747
        %v2576 = vpack.c.b16 %v1756, %v1752
        %v2577 = vpack.c.b16 %v1757, %v1753
        %v2578 = vpack.c.b16 %v1758, %v1754
        %v2579 = vpack.c.b16 %v1759, %v1755
        %v2580 = vpack.c.b16 %v1764, %v1760
        %v2581 = vpack.c.b16 %v1765, %v1761
        %v2582 = vpack.c.b16 %v1766, %v1762
        %v2583 = vpack.c.b16 %v1767, %v1763
        %v2584 = vpack.c.b16 %v1772, %v1768
        %v2585 = vpack.c.b16 %v1773, %v1769
        %v2586 = vpack.c.b16 %v1774, %v1770
        %v2587 = vpack.c.b16 %v1775, %v1771
        %v2588 = vpack.c.b16 %v1780, %v1776
        %v2589 = vpack.c.b16 %v1781, %v1777
        %v2590 = vpack.c.b16 %v1782, %v1778
        %v2591 = vpack.c.b16 %v1783, %v1779
        %v2592 = vpack.c.b16 %v1788, %v1784
        %v2593 = vpack.c.b16 %v1789, %v1785
        %v2594 = vpack.c.b16 %v1790, %v1786
        %v2595 = vpack.c.b16 %v1791, %v1787
        %v2596 = vpack.c.b16 %v1796, %v1792
        %v2597 = vpack.c.b16 %v1797, %v1793
        %v2598 = vpack.c.b16 %v1798, %v1794
        %v2599 = vpack.c.b16 %v1799, %v1795
        %v2600 = vpack.c.b16 %v1804, %v1800
        %v2601 = vpack.c.b16 %v1805, %v1801
        %v2602 = vpack.c.b16 %v1806, %v1802
        %v2603 = vpack.c.b16 %v1807, %v1803
        %v2604 = vpack.c.b16 %v1812, %v1808
        %v2605 = vpack.c.b16 %v1813, %v1809
        %v2606 = vpack.c.b16 %v1814, %v1810
        %v2607 = vpack.c.b16 %v1815, %v1811
        %v2608 = vpack.c.b16 %v1820, %v1816
        %v2609 = vpack.c.b16 %v1821, %v1817
        %v2610 = vpack.c.b16 %v1822, %v1818
        %v2611 = vpack.c.b16 %v1823, %v1819
        %v2612 = vpack.c.b16 %v1828, %v1824
        %v2613 = vpack.c.b16 %v1829, %v1825
        %v2614 = vpack.c.b16 %v1830, %v1826
        %v2615 = vpack.c.b16 %v1831, %v1827
        %v2616 = vpack.c.b16 %v1836, %v1832
        %v2617 = vpack.c.b16 %v1837, %v1833
        %v2618 = vpack.c.b16 %v1838, %v1834
        %v2619 = vpack.c.b16 %v1839, %v1835
        %v2620 = vpack.c.b16 %v1844, %v1840
        %v2621 = vpack.c.b16 %v1845, %v1841
        %v2622 = vpack.c.b16 %v1846, %v1842
        %v2623 = vpack.c.b16 %v1847, %v1843
        %v2624 = vpack.c.b16 %v1852, %v1848
        %v2625 = vpack.c.b16 %v1853, %v1849
        %v2626 = vpack.c.b16 %v1854, %v1850
        %v2627 = vpack.c.b16 %v1855, %v1851
        %v2628 = vpack.c.b16 %v1860, %v1856
        %v2629 = vpack.c.b16 %v1861, %v1857
        %v2630 = vpack.c.b16 %v1862, %v1858
        %v2631 = vpack.c.b16 %v1863, %v1859
        %v2632 = vpack.c.b16 %v1868, %v1864
        %v2633 = vpack.c.b16 %v1869, %v1865
        %v2634 = vpack.c.b16 %v1870, %v1866
        %v2635 = vpack.c.b16 %v1871, %v1867
        %v2636 = vpack.c.b16 %v1876, %v1872
        %v2637 = vpack.c.b16 %v1877, %v1873
        %v2638 = vpack.c.b16 %v1878, %v1874
        %v2639 = vpack.c.b16 %v1879, %v1875
        %v2640 = vpack.c.b16 %v1884, %v1880
        %v2641 = vpack.c.b16 %v1885, %v1881
        %v2642 = vpack.c.b16 %v1886, %v1882
        %v2643 = vpack.c.b16 %v1887, %v1883
        %v2644 = vpack.c.b16 %v1892, %v1888
        %v2645 = vpack.c.b16 %v1893, %v1889
        %v2646 = vpack.c.b16 %v1894, %v1890
        %v2647 = vpack.c.b16 %v1895, %v1891
        %v2648 = vpack.c.b16 %v1900, %v1896
        %v2649 = vpack.c.b16 %v1901, %v1897
        %v2650 = vpack.c.b16 %v1902, %v1898
        %v2651 = vpack.c.b16 %v1903, %v1899
        %v2652 = vpack.c.b16 %v1908, %v1904
        %v2653 = vpack.c.b16 %v1909, %v1905
        %v2654 = vpack.c.b16 %v1910, %v1906
        %v2655 = vpack.c.b16 %v1911, %v1907
        %v2656 = vpack.c.b16 %v1916, %v1912
        %v2657 = vpack.c.b16 %v1917, %v1913
        %v2658 = vpack.c.b16 %v1918, %v1914
        %v2659 = vpack.c.b16 %v1919, %v1915
        %v2660 = vpack.c.b16 %v1924, %v1920
        %v2661 = vpack.c.b16 %v1925, %v1921
        %v2662 = vpack.c.b16 %v1926, %v1922
        %v2663 = vpack.c.b16 %v1927, %v1923
        %v2664 = vpack.c.b16 %v1932, %v1928
        %v2665 = vpack.c.b16 %v1933, %v1929
        %v2666 = vpack.c.b16 %v1934, %v1930
        %v2667 = vpack.c.b16 %v1935, %v1931
        %v2668 = vpack.c.b16 %v1940, %v1936
        %v2669 = vpack.c.b16 %v1941, %v1937
        %v2670 = vpack.c.b16 %v1942, %v1938
        %v2671 = vpack.c.b16 %v1943, %v1939
        %v2672 = vpack.c.b16 %v1948, %v1944
        %v2673 = vpack.c.b16 %v1949, %v1945
        %v2674 = vpack.c.b16 %v1950, %v1946
        %v2675 = vpack.c.b16 %v1951, %v1947
        %v2676 = vpack.c.b16 %v1956, %v1952
        %v2677 = vpack.c.b16 %v1957, %v1953
        %v2678 = vpack.c.b16 %v1958, %v1954
        %v2679 = vpack.c.b16 %v1959, %v1955
        %v2680 = vpack.c.b16 %v1964, %v1960
        %v2681 = vpack.c.b16 %v1965, %v1961
        %v2682 = vpack.c.b16 %v1966, %v1962
        %v2683 = vpack.c.b16 %v1967, %v1963
        %v2684 = vpack.c.b16 %v1972, %v1968
        %v2685 = vpack.c.b16 %v1973, %v1969
        %v2686 = vpack.c.b16 %v1974, %v1970
        %v2687 = vpack.c.b16 %v1975, %v1971
        %v2688 = vpack.c.b16 %v1980, %v1976
        %v2689 = vpack.c.b16 %v1981, %v1977
        %v2690 = vpack.c.b16 %v1982, %v1978
        %v2691 = vpack.c.b16 %v1983, %v1979
        %v2692 = vpack.c.b16 %v1988, %v1984
        %v2693 = vpack.c.b16 %v1989, %v1985
        %v2694 = vpack.c.b16 %v1990, %v1986
        %v2695 = vpack.c.b16 %v1991, %v1987
        %v2696 = vpack.c.b16 %v1996, %v1992
        %v2697 = vpack.c.b16 %v1997, %v1993
        %v2698 = vpack.c.b16 %v1998, %v1994
        %v2699 = vpack.c.b16 %v1999, %v1995
        %v2700 = vpack.c.b16 %v2004, %v2000
        %v2701 = vpack.c.b16 %v2005, %v2001
        %v2702 = vpack.c.b16 %v2006, %v2002
        %v2703 = vpack.c.b16 %v2007, %v2003
        %v2704 = vpack.c.b16 %v2012, %v2008
        %v2705 = vpack.c.b16 %v2013, %v2009
        %v2706 = vpack.c.b16 %v2014, %v2010
        %v2707 = vpack.c.b16 %v2015, %v2011
        %v2708 = vpack.c.b16 %v2020, %v2016
        %v2709 = vpack.c.b16 %v2021, %v2017
        %v2710 = vpack.c.b16 %v2022, %v2018
        %v2711 = vpack.c.b16 %v2023, %v2019
        %v2712 = vpack.c.b16 %v2028, %v2024
        %v2713 = vpack.c.b16 %v2029, %v2025
        %v2714 = vpack.c.b16 %v2030, %v2026
        %v2715 = vpack.c.b16 %v2031, %v2027
        %v2716 = vpack.c.b16 %v2036, %v2032
        %v2717 = vpack.c.b16 %v2037, %v2033
        %v2718 = vpack.c.b16 %v2038, %v2034
        %v2719 = vpack.c.b16 %v2039, %v2035
        %v2720 = vpack.c.b16 %v2044, %v2040
        %v2721 = vpack.c.b16 %v2045, %v2041
        %v2722 = vpack.c.b16 %v2046, %v2042
        %v2723 = vpack.c.b16 %v2047, %v2043
        %v2724 = vpack.c.b16 %v2052, %v2048
        %v2725 = vpack.c.b16 %v2053, %v2049
        %v2726 = vpack.c.b16 %v2054, %v2050
        %v2727 = vpack.c.b16 %v2055, %v2051
        %v2728 = vpack.c.b16 %v2060, %v2056
        %v2729 = vpack.c.b16 %v2061, %v2057
        %v2730 = vpack.c.b16 %v2062, %v2058
        %v2731 = vpack.c.b16 %v2063, %v2059
        %v2732 = vpack.c.b16 %v2068, %v2064
        %v2733 = vpack.c.b16 %v2069, %v2065
        %v2734 = vpack.c.b16 %v2070, %v2066
        %v2735 = vpack.c.b16 %v2071, %v2067
        %v2736 = vpack.c.b16 %v2076, %v2072
        %v2737 = vpack.c.b16 %v2077, %v2073
        %v2738 = vpack.c.b16 %v2078, %v2074
        %v2739 = vpack.c.b16 %v2079, %v2075
        %v2740 = vpack.c.b16 %v2084, %v2080
        %v2741 = vpack.c.b16 %v2085, %v2081
        %v2742 = vpack.c.b16 %v2086, %v2082
        %v2743 = vpack.c.b16 %v2087, %v2083
        %v2744 = vpack.c.b16 %v2092, %v2088
        %v2745 = vpack.c.b16 %v2093, %v2089
        %v2746 = vpack.c.b16 %v2094, %v2090
        %v2747 = vpack.c.b16 %v2095, %v2091
        %v2748 = vpack.c.b16 %v2100, %v2096
        %v2749 = vpack.c.b16 %v2101, %v2097
        %v2750 = vpack.c.b16 %v2102, %v2098
        %v2751 = vpack.c.b16 %v2103, %v2099
        %v2752 = vpack.c.b16 %v2108, %v2104
        %v2753 = vpack.c.b16 %v2109, %v2105
        %v2754 = vpack.c.b16 %v2110, %v2106
        %v2755 = vpack.c.b16 %v2111, %v2107
        %v2756 = vpack.c.b16 %v2116, %v2112
        %v2757 = vpack.c.b16 %v2117, %v2113
        %v2758 = vpack.c.b16 %v2118, %v2114
        %v2759 = vpack.c.b16 %v2119, %v2115
        %v2760 = vpack.c.b16 %v2124, %v2120
        %v2761 = vpack.c.b16 %v2125, %v2121
        %v2762 = vpack.c.b16 %v2126, %v2122
        %v2763 = vpack.c.b16 %v2127, %v2123
        %v2764 = vpack.c.b16 %v2132, %v2128
        %v2765 = vpack.c.b16 %v2133, %v2129
        %v2766 = vpack.c.b16 %v2134, %v2130
        %v2767 = vpack.c.b16 %v2135, %v2131
        %v2768 = vpack.c.b16 %v2140, %v2136
        %v2769 = vpack.c.b16 %v2141, %v2137
        %v2770 = vpack.c.b16 %v2142, %v2138
        %v2771 = vpack.c.b16 %v2143, %v2139
        %v2772 = vpack.c.b16 %v2148, %v2144
        %v2773 = vpack.c.b16 %v2149, %v2145
        %v2774 = vpack.c.b16 %v2150, %v2146
        %v2775 = vpack.c.b16 %v2151, %v2147
        %v2776 = vpack.c.b16 %v2156, %v2152
        %v2777 = vpack.c.b16 %v2157, %v2153
        %v2778 = vpack.c.b16 %v2158, %v2154
        %v2779 = vpack.c.b16 %v2159, %v2155
        %v2780 = vpack.c.b16 %v2164, %v2160
        %v2781 = vpack.c.b16 %v2165, %v2161
        %v2782 = vpack.c.b16 %v2166, %v2162
        %v2783 = vpack.c.b16 %v2167, %v2163
        %v2784 = vpack.c.b16 %v2172, %v2168
        %v2785 = vpack.c.b16 %v2173, %v2169
        %v2786 = vpack.c.b16 %v2174, %v2170
        %v2787 = vpack.c.b16 %v2175, %v2171
        %v2788 = vpack.c.b16 %v2180, %v2176
        %v2789 = vpack.c.b16 %v2181, %v2177
        %v2790 = vpack.c.b16 %v2182, %v2178
        %v2791 = vpack.c.b16 %v2183, %v2179
        %v2792 = vpack.c.b16 %v2188, %v2184
        %v2793 = vpack.c.b16 %v2189, %v2185
        %v2794 = vpack.c.b16 %v2190, %v2186
        %v2795 = vpack.c.b16 %v2191, %v2187
        %v2796 = vpack.c.b16 %v2196, %v2192
        %v2797 = vpack.c.b16 %v2197, %v2193
        %v2798 = vpack.c.b16 %v2198, %v2194
        %v2799 = vpack.c.b16 %v2199, %v2195
        %v2800 = vpack.c.b16 %v2204, %v2200
        %v2801 = vpack.c.b16 %v2205, %v2201
        %v2802 = vpack.c.b16 %v2206, %v2202
        %v2803 = vpack.c.b16 %v2207, %v2203
        %v2804 = vpack.c.b16 %v2212, %v2208
        %v2805 = vpack.c.b16 %v2213, %v2209
        %v2806 = vpack.c.b16 %v2214, %v2210
        %v2807 = vpack.c.b16 %v2215, %v2211
        %v2808 = vpack.c.b16 %v2220, %v2216
        %v2809 = vpack.c.b16 %v2221, %v2217
        %v2810 = vpack.c.b16 %v2222, %v2218
        %v2811 = vpack.c.b16 %v2223, %v2219
        %v2812 = vpack.c.b16 %v2228, %v2224
        %v2813 = vpack.c.b16 %v2229, %v2225
        %v2814 = vpack.c.b16 %v2230, %v2226
        %v2815 = vpack.c.b16 %v2231, %v2227
        %v2816 = vpack.c.b16 %v2236, %v2232
        %v2817 = vpack.c.b16 %v2237, %v2233
        %v2818 = vpack.c.b16 %v2238, %v2234
        %v2819 = vpack.c.b16 %v2239, %v2235
        %v2820 = vpack.c.b16 %v2244, %v2240
        %v2821 = vpack.c.b16 %v2245, %v2241
        %v2822 = vpack.c.b16 %v2246, %v2242
        %v2823 = vpack.c.b16 %v2247, %v2243
        %v2824 = vpack.c.b16 %v2252, %v2248
        %v2825 = vpack.c.b16 %v2253, %v2249
        %v2826 = vpack.c.b16 %v2254, %v2250
        %v2827 = vpack.c.b16 %v2255, %v2251
        %v2828 = vpack.c.b16 %v2260, %v2256
        %v2829 = vpack.c.b16 %v2261, %v2257
        %v2830 = vpack.c.b16 %v2262, %v2258
        %v2831 = vpack.c.b16 %v2263, %v2259
        %v2832 = vpack.c.b16 %v2268, %v2264
        %v2833 = vpack.c.b16 %v2269, %v2265
        %v2834 = vpack.c.b16 %v2270, %v2266
        %v2835 = vpack.c.b16 %v2271, %v2267
        %v2836 = vpack.c.b16 %v2276, %v2272
        %v2837 = vpack.c.b16 %v2277, %v2273
        %v2838 = vpack.c.b16 %v2278, %v2274
        %v2839 = vpack.c.b16 %v2279, %v2275
        %v2840 = vpack.c.b16 %v2284, %v2280
        %v2841 = vpack.c.b16 %v2285, %v2281
        %v2842 = vpack.c.b16 %v2286, %v2282
        %v2843 = vpack.c.b16 %v2287, %v2283
        %v2844 = vpack.c.b16 %v2292, %v2288
        %v2845 = vpack.c.b16 %v2293, %v2289
        %v2846 = vpack.c.b16 %v2294, %v2290
        %v2847 = vpack.c.b16 %v2295, %v2291
        %v2848 = vpack.c.b16 %v2300, %v2296
        %v2849 = vpack.c.b16 %v2301, %v2297
        %v2850 = vpack.c.b16 %v2302, %v2298
        %v2851 = vpack.c.b16 %v2303, %v2299
        %v2852 = vpack.c.b16 %v2308, %v2304
        %v2853 = vpack.c.b16 %v2309, %v2305
        %v2854 = vpack.c.b16 %v2310, %v2306
        %v2855 = vpack.c.b16 %v2311, %v2307
        %v2856 = vpack.c.b16 %v2316, %v2312
        %v2857 = vpack.c.b16 %v2317, %v2313
        %v2858 = vpack.c.b16 %v2318, %v2314
        %v2859 = vpack.c.b16 %v2319, %v2315
        %v2860 = vpack.c.b16 %v2324, %v2320
        %v2861 = vpack.c.b16 %v2325, %v2321
        %v2862 = vpack.c.b16 %v2326, %v2322
        %v2863 = vpack.c.b16 %v2327, %v2323
        %v2864 = vpack.c.b16 %v2332, %v2328
        %v2865 = vpack.c.b16 %v2333, %v2329
        %v2866 = vpack.c.b16 %v2334, %v2330
        %v2867 = vpack.c.b16 %v2335, %v2331
        %v2868 = vpack.c.b16 %v2340, %v2336
        %v2869 = vpack.c.b16 %v2341, %v2337
        %v2870 = vpack.c.b16 %v2342, %v2338
        %v2871 = vpack.c.b16 %v2343, %v2339
        %v2872 = vpack.c.b16 %v2348, %v2344
        %v2873 = vpack.c.b16 %v2349, %v2345
        %v2874 = vpack.c.b16 %v2350, %v2346
        %v2875 = vpack.c.b16 %v2351, %v2347
        %v2876 = vpack.c.b16 %v2356, %v2352
        %v2877 = vpack.c.b16 %v2357, %v2353
        %v2878 = vpack.c.b16 %v2358, %v2354
        %v2879 = vpack.c.b16 %v2359, %v2355
        %v2880 = vpack.c.b16 %v2364, %v2360
        %v2881 = vpack.c.b16 %v2365, %v2361
        %v2882 = vpack.c.b16 %v2366, %v2362
        %v2883 = vpack.c.b16 %v2367, %v2363
        %v2884 = vpack.c.b16 %v2372, %v2368
        %v2885 = vpack.c.b16 %v2373, %v2369
        %v2886 = vpack.c.b16 %v2374, %v2370
        %v2887 = vpack.c.b16 %v2375, %v2371
        %3400 = vmatprep.subr.bf16.mxu0 %v2377
        %3401 = vmatpush1.bf16.msra.mxu0 %v2376
        %3402 = vmatprep.subr.bf16.mxu0 %v2381
        %3403 = vmatpush1.bf16.msra.mxu0 %v2380
        %3404 = vmatprep.subr.bf16.mxu0 %v2385
        %3405 = vmatpush1.bf16.msra.mxu0 %v2384
        %3406 = vmatprep.subr.bf16.mxu0 %v2389
        %3407 = vmatpush1.bf16.msra.mxu0 %v2388
        %3408 = vmatprep.subr.bf16.mxu0 %v2393
        %3409 = vmatpush1.bf16.msra.mxu0 %v2392
        %3410 = vmatprep.subr.bf16.mxu0 %v2397
        %3411 = vmatpush1.bf16.msra.mxu0 %v2396
        %3412 = vmatprep.subr.bf16.mxu0 %v2401
        %3413 = vmatpush1.bf16.msra.mxu0 %v2400
        %3414 = vmatprep.subr.bf16.mxu0 %v2405
        %3415 = vmatpush1.bf16.msra.mxu0 %v2404
        %3416 = vmatprep.subr.bf16.mxu0 %v2409
        %3417 = vmatpush1.bf16.msra.mxu0 %v2408
        %3418 = vmatprep.subr.bf16.mxu0 %v2413
        %3419 = vmatpush1.bf16.msra.mxu0 %v2412
        %3420 = vmatprep.subr.bf16.mxu0 %v2417
        %3421 = vmatpush1.bf16.msra.mxu0 %v2416
        %3422 = vmatprep.subr.bf16.mxu0 %v2421
        %3423 = vmatpush1.bf16.msra.mxu0 %v2420
        %3424 = vmatprep.subr.bf16.mxu0 %v2425
        %3425 = vmatpush1.bf16.msra.mxu0 %v2424
        %3426 = vmatprep.subr.bf16.mxu0 %v2429
        %3427 = vmatpush1.bf16.msra.mxu0 %v2428
        %3428 = vmatprep.subr.bf16.mxu0 %v2433
        %3429 = vmatpush1.bf16.msra.mxu0 %v2432
        %3430 = vmatprep.subr.bf16.mxu0 %v2437
        %3431 = vmatpush1.bf16.msra.mxu0 %v2436
        %3432 = vmatprep.mubr.bf16.mxu0 %v291
        %3433 = vmatmul.mubr.bf16.gmra.mrb[0].mxu0 %v290
        %v3434 = vpop.f32.mrb[0].mxu0
        %v3435 = vadd.f32 %v823, %v3434
        %v3436 = vpop.f32.mrb[0].mxu0
        %v3437 = vadd.f32 %v827, %v3436
        %v3438 = vpop.f32.mrb[0].mxu0
        %v3439 = vpop.f32.mrb[0].mxu0
        %3440 = vdwg.mxu0
        %3441 = vmatprep.subr.bf16.mxu0 %v2441
        %3442 = vmatpush1.bf16.msra.mxu0 %v2440
        %3443 = vmatprep.subr.bf16.mxu0 %v2445
        %3444 = vmatpush1.bf16.msra.mxu0 %v2444
        %3445 = vmatprep.subr.bf16.mxu0 %v2449
        %3446 = vmatpush1.bf16.msra.mxu0 %v2448
        %3447 = vmatprep.subr.bf16.mxu0 %v2453
        %3448 = vmatpush1.bf16.msra.mxu0 %v2452
        %3449 = vmatprep.subr.bf16.mxu0 %v2457
        %3450 = vmatpush1.bf16.msra.mxu0 %v2456
        %3451 = vmatprep.subr.bf16.mxu0 %v2461
        %3452 = vmatpush1.bf16.msra.mxu0 %v2460
        %3453 = vmatprep.subr.bf16.mxu0 %v2465
        %3454 = vmatpush1.bf16.msra.mxu0 %v2464
        %3455 = vmatprep.subr.bf16.mxu0 %v2469
        %3456 = vmatpush1.bf16.msra.mxu0 %v2468
        %3457 = vmatprep.subr.bf16.mxu0 %v2473
        %3458 = vmatpush1.bf16.msra.mxu0 %v2472
        %3459 = vmatprep.subr.bf16.mxu0 %v2477
        %3460 = vmatpush1.bf16.msra.mxu0 %v2476
        %3461 = vmatprep.subr.bf16.mxu0 %v2481
        %3462 = vmatpush1.bf16.msra.mxu0 %v2480
        %3463 = vmatprep.subr.bf16.mxu0 %v2485
        %3464 = vmatpush1.bf16.msra.mxu0 %v2484
        %3465 = vmatprep.subr.bf16.mxu0 %v2489
        %3466 = vmatpush1.bf16.msra.mxu0 %v2488
        %3467 = vmatprep.subr.bf16.mxu0 %v2493
        %3468 = vmatpush1.bf16.msra.mxu0 %v2492
        %3469 = vmatprep.subr.bf16.mxu0 %v2497
        %3470 = vmatpush1.bf16.msra.mxu0 %v2496
        %3471 = vmatprep.subr.bf16.mxu0 %v2501
        %3472 = vmatpush1.bf16.msra.mxu0 %v2500
        %3473 = vmatprep.mubr.bf16.mxu0 %v293
        %3474 = vmatmul.mubr.bf16.gmra.mrb[0].mxu0 %v292
        %v3475 = vpop.f32.mrb[0].mxu0
        %v3476 = vadd.f32 %v3435, %v3475
        %v3477 = vpop.f32.mrb[0].mxu0
        %v3478 = vadd.f32 %v3437, %v3477
        %v3479 = vpop.f32.mrb[0].mxu0
        %v3480 = vpop.f32.mrb[0].mxu0
        %3481 = vdwg.mxu0
        %3482 = vmatprep.subr.bf16.mxu0 %v2505
        %3483 = vmatpush1.bf16.msra.mxu0 %v2504
        %3484 = vmatprep.subr.bf16.mxu0 %v2509
        %3485 = vmatpush1.bf16.msra.mxu0 %v2508
        %3486 = vmatprep.subr.bf16.mxu0 %v2513
        %3487 = vmatpush1.bf16.msra.mxu0 %v2512
        %3488 = vmatprep.subr.bf16.mxu0 %v2517
        %3489 = vmatpush1.bf16.msra.mxu0 %v2516
        %3490 = vmatprep.subr.bf16.mxu0 %v2521
        %3491 = vmatpush1.bf16.msra.mxu0 %v2520
        %3492 = vmatprep.subr.bf16.mxu0 %v2525
        %3493 = vmatpush1.bf16.msra.mxu0 %v2524
        %3494 = vmatprep.subr.bf16.mxu0 %v2529
        %3495 = vmatpush1.bf16.msra.mxu0 %v2528
        %3496 = vmatprep.subr.bf16.mxu0 %v2533
        %3497 = vmatpush1.bf16.msra.mxu0 %v2532
        %3498 = vmatprep.subr.bf16.mxu0 %v2537
        %3499 = vmatpush1.bf16.msra.mxu0 %v2536
        %3500 = vmatprep.subr.bf16.mxu0 %v2541
        %3501 = vmatpush1.bf16.msra.mxu0 %v2540
        %3502 = vmatprep.subr.bf16.mxu0 %v2545
        %3503 = vmatpush1.bf16.msra.mxu0 %v2544
        %3504 = vmatprep.subr.bf16.mxu0 %v2549
        %3505 = vmatpush1.bf16.msra.mxu0 %v2548
        %3506 = vmatprep.subr.bf16.mxu0 %v2553
        %3507 = vmatpush1.bf16.msra.mxu0 %v2552
        %3508 = vmatprep.subr.bf16.mxu0 %v2557
        %3509 = vmatpush1.bf16.msra.mxu0 %v2556
        %3510 = vmatprep.subr.bf16.mxu0 %v2561
        %3511 = vmatpush1.bf16.msra.mxu0 %v2560
        %3512 = vmatprep.subr.bf16.mxu0 %v2565
        %3513 = vmatpush1.bf16.msra.mxu0 %v2564
        %3514 = vmatprep.mubr.bf16.mxu0 %v295
        %3515 = vmatmul.mubr.bf16.gmra.mrb[0].mxu0 %v294
        %v3516 = vpop.f32.mrb[0].mxu0
        %v3517 = vadd.f32 %v3476, %v3516
        %v3518 = vpop.f32.mrb[0].mxu0
        %v3519 = vadd.f32 %v3478, %v3518
        %v3520 = vpop.f32.mrb[0].mxu0
        %v3521 = vpop.f32.mrb[0].mxu0
        %3522 = vdwg.mxu0
        %3523 = vmatprep.subr.bf16.mxu0 %v2569
        %3524 = vmatpush1.bf16.msra.mxu0 %v2568
        %3525 = vmatprep.subr.bf16.mxu0 %v2573
        %3526 = vmatpush1.bf16.msra.mxu0 %v2572
        %3527 = vmatprep.subr.bf16.mxu0 %v2577
        %3528 = vmatpush1.bf16.msra.mxu0 %v2576
        %3529 = vmatprep.subr.bf16.mxu0 %v2581
        %3530 = vmatpush1.bf16.msra.mxu0 %v2580
        %3531 = vmatprep.subr.bf16.mxu0 %v2585
        %3532 = vmatpush1.bf16.msra.mxu0 %v2584
        %3533 = vmatprep.subr.bf16.mxu0 %v2589
        %3534 = vmatpush1.bf16.msra.mxu0 %v2588
        %3535 = vmatprep.subr.bf16.mxu0 %v2593
        %3536 = vmatpush1.bf16.msra.mxu0 %v2592
        %3537 = vmatprep.subr.bf16.mxu0 %v2597
        %3538 = vmatpush1.bf16.msra.mxu0 %v2596
        %3539 = vmatprep.subr.bf16.mxu0 %v2601
        %3540 = vmatpush1.bf16.msra.mxu0 %v2600
        %3541 = vmatprep.subr.bf16.mxu0 %v2605
        %3542 = vmatpush1.bf16.msra.mxu0 %v2604
        %3543 = vmatprep.subr.bf16.mxu0 %v2609
        %3544 = vmatpush1.bf16.msra.mxu0 %v2608
        %3545 = vmatprep.subr.bf16.mxu0 %v2613
        %3546 = vmatpush1.bf16.msra.mxu0 %v2612
        %3547 = vmatprep.subr.bf16.mxu0 %v2617
        %3548 = vmatpush1.bf16.msra.mxu0 %v2616
        %3549 = vmatprep.subr.bf16.mxu0 %v2621
        %3550 = vmatpush1.bf16.msra.mxu0 %v2620
        %3551 = vmatprep.subr.bf16.mxu0 %v2625
        %3552 = vmatpush1.bf16.msra.mxu0 %v2624
        %3553 = vmatprep.subr.bf16.mxu0 %v2629
        %3554 = vmatpush1.bf16.msra.mxu0 %v2628
        %3555 = vmatprep.mubr.bf16.mxu0 %v297
        %3556 = vmatmul.mubr.bf16.gmra.mrb[0].mxu0 %v296
        %v3557 = vpop.f32.mrb[0].mxu0
        %v3558 = vadd.f32 %v3517, %v3557
        %v3559 = vpop.f32.mrb[0].mxu0
        %v3560 = vadd.f32 %v3519, %v3559
        %v3561 = vpop.f32.mrb[0].mxu0
        %v3562 = vpop.f32.mrb[0].mxu0
        %3563 = vdwg.mxu0
        %3564 = vmatprep.subr.bf16.mxu0 %v2633
        %3565 = vmatpush1.bf16.msra.mxu0 %v2632
        %3566 = vmatprep.subr.bf16.mxu0 %v2637
        %3567 = vmatpush1.bf16.msra.mxu0 %v2636
        %3568 = vmatprep.subr.bf16.mxu0 %v2641
        %3569 = vmatpush1.bf16.msra.mxu0 %v2640
        %3570 = vmatprep.subr.bf16.mxu0 %v2645
        %3571 = vmatpush1.bf16.msra.mxu0 %v2644
        %3572 = vmatprep.subr.bf16.mxu0 %v2649
        %3573 = vmatpush1.bf16.msra.mxu0 %v2648
        %3574 = vmatprep.subr.bf16.mxu0 %v2653
        %3575 = vmatpush1.bf16.msra.mxu0 %v2652
        %3576 = vmatprep.subr.bf16.mxu0 %v2657
        %3577 = vmatpush1.bf16.msra.mxu0 %v2656
        %3578 = vmatprep.subr.bf16.mxu0 %v2661
        %3579 = vmatpush1.bf16.msra.mxu0 %v2660
        %3580 = vmatprep.subr.bf16.mxu0 %v2665
        %3581 = vmatpush1.bf16.msra.mxu0 %v2664
        %3582 = vmatprep.subr.bf16.mxu0 %v2669
        %3583 = vmatpush1.bf16.msra.mxu0 %v2668
        %3584 = vmatprep.subr.bf16.mxu0 %v2673
        %3585 = vmatpush1.bf16.msra.mxu0 %v2672
        %3586 = vmatprep.subr.bf16.mxu0 %v2677
        %3587 = vmatpush1.bf16.msra.mxu0 %v2676
        %3588 = vmatprep.subr.bf16.mxu0 %v2681
        %3589 = vmatpush1.bf16.msra.mxu0 %v2680
        %3590 = vmatprep.subr.bf16.mxu0 %v2685
        %3591 = vmatpush1.bf16.msra.mxu0 %v2684
        %3592 = vmatprep.subr.bf16.mxu0 %v2689
        %3593 = vmatpush1.bf16.msra.mxu0 %v2688
        %3594 = vmatprep.subr.bf16.mxu0 %v2693
        %3595 = vmatpush1.bf16.msra.mxu0 %v2692
        %3596 = vmatprep.mubr.bf16.mxu0 %v299
        %3597 = vmatmul.mubr.bf16.gmra.mrb[0].mxu0 %v298
        %v3598 = vpop.f32.mrb[0].mxu0
        %v3599 = vadd.f32 %v3558, %v3598
        %v3600 = vpop.f32.mrb[0].mxu0
        %v3601 = vadd.f32 %v3560, %v3600
        %v3602 = vpop.f32.mrb[0].mxu0
        %v3603 = vpop.f32.mrb[0].mxu0
        %3604 = vdwg.mxu0
        %3605 = vmatprep.subr.bf16.mxu0 %v2697
        %3606 = vmatpush1.bf16.msra.mxu0 %v2696
        %3607 = vmatprep.subr.bf16.mxu0 %v2701
        %3608 = vmatpush1.bf16.msra.mxu0 %v2700
        %3609 = vmatprep.subr.bf16.mxu0 %v2705
        %3610 = vmatpush1.bf16.msra.mxu0 %v2704
        %3611 = vmatprep.subr.bf16.mxu0 %v2709
        %3612 = vmatpush1.bf16.msra.mxu0 %v2708
        %3613 = vmatprep.subr.bf16.mxu0 %v2713
        %3614 = vmatpush1.bf16.msra.mxu0 %v2712
        %3615 = vmatprep.subr.bf16.mxu0 %v2717
        %3616 = vmatpush1.bf16.msra.mxu0 %v2716
        %3617 = vmatprep.subr.bf16.mxu0 %v2721
        %3618 = vmatpush1.bf16.msra.mxu0 %v2720
        %3619 = vmatprep.subr.bf16.mxu0 %v2725
        %3620 = vmatpush1.bf16.msra.mxu0 %v2724
        %3621 = vmatprep.subr.bf16.mxu0 %v2729
        %3622 = vmatpush1.bf16.msra.mxu0 %v2728
        %3623 = vmatprep.subr.bf16.mxu0 %v2733
        %3624 = vmatpush1.bf16.msra.mxu0 %v2732
        %3625 = vmatprep.subr.bf16.mxu0 %v2737
        %3626 = vmatpush1.bf16.msra.mxu0 %v2736
        %3627 = vmatprep.subr.bf16.mxu0 %v2741
        %3628 = vmatpush1.bf16.msra.mxu0 %v2740
        %3629 = vmatprep.subr.bf16.mxu0 %v2745
        %3630 = vmatpush1.bf16.msra.mxu0 %v2744
        %3631 = vmatprep.subr.bf16.mxu0 %v2749
        %3632 = vmatpush1.bf16.msra.mxu0 %v2748
        %3633 = vmatprep.subr.bf16.mxu0 %v2753
        %3634 = vmatpush1.bf16.msra.mxu0 %v2752
        %3635 = vmatprep.subr.bf16.mxu0 %v2757
        %3636 = vmatpush1.bf16.msra.mxu0 %v2756
        %3637 = vmatprep.mubr.bf16.mxu0 %v301
        %3638 = vmatmul.mubr.bf16.gmra.mrb[0].mxu0 %v300
        %v3639 = vpop.f32.mrb[0].mxu0
        %v3640 = vadd.f32 %v3599, %v3639
        %v3641 = vpop.f32.mrb[0].mxu0
        %v3642 = vadd.f32 %v3601, %v3641
        %v3643 = vpop.f32.mrb[0].mxu0
        %v3644 = vpop.f32.mrb[0].mxu0
        %3645 = vdwg.mxu0
        %3646 = vmatprep.subr.bf16.mxu0 %v2761
        %3647 = vmatpush1.bf16.msra.mxu0 %v2760
        %3648 = vmatprep.subr.bf16.mxu0 %v2765
        %3649 = vmatpush1.bf16.msra.mxu0 %v2764
        %3650 = vmatprep.subr.bf16.mxu0 %v2769
        %3651 = vmatpush1.bf16.msra.mxu0 %v2768
        %3652 = vmatprep.subr.bf16.mxu0 %v2773
        %3653 = vmatpush1.bf16.msra.mxu0 %v2772
        %3654 = vmatprep.subr.bf16.mxu0 %v2777
        %3655 = vmatpush1.bf16.msra.mxu0 %v2776
        %3656 = vmatprep.subr.bf16.mxu0 %v2781
        %3657 = vmatpush1.bf16.msra.mxu0 %v2780
        %3658 = vmatprep.subr.bf16.mxu0 %v2785
        %3659 = vmatpush1.bf16.msra.mxu0 %v2784
        %3660 = vmatprep.subr.bf16.mxu0 %v2789
        %3661 = vmatpush1.bf16.msra.mxu0 %v2788
        %3662 = vmatprep.subr.bf16.mxu0 %v2793
        %3663 = vmatpush1.bf16.msra.mxu0 %v2792
        %3664 = vmatprep.subr.bf16.mxu0 %v2797
        %3665 = vmatpush1.bf16.msra.mxu0 %v2796
        %3666 = vmatprep.subr.bf16.mxu0 %v2801
        %3667 = vmatpush1.bf16.msra.mxu0 %v2800
        %3668 = vmatprep.subr.bf16.mxu0 %v2805
        %3669 = vmatpush1.bf16.msra.mxu0 %v2804
        %3670 = vmatprep.subr.bf16.mxu0 %v2809
        %3671 = vmatpush1.bf16.msra.mxu0 %v2808
        %3672 = vmatprep.subr.bf16.mxu0 %v2813
        %3673 = vmatpush1.bf16.msra.mxu0 %v2812
        %3674 = vmatprep.subr.bf16.mxu0 %v2817
        %3675 = vmatpush1.bf16.msra.mxu0 %v2816
        %3676 = vmatprep.subr.bf16.mxu0 %v2821
        %3677 = vmatpush1.bf16.msra.mxu0 %v2820
        %3678 = vmatprep.mubr.bf16.mxu0 %v303
        %3679 = vmatmul.mubr.bf16.gmra.mrb[0].mxu0 %v302
        %v3680 = vpop.f32.mrb[0].mxu0
        %v3681 = vadd.f32 %v3640, %v3680
        %v3682 = vpop.f32.mrb[0].mxu0
        %v3683 = vadd.f32 %v3642, %v3682
        %v3684 = vpop.f32.mrb[0].mxu0
        %v3685 = vpop.f32.mrb[0].mxu0
        %3686 = vdwg.mxu0
        %3687 = vmatprep.subr.bf16.mxu0 %v2825
        %3688 = vmatpush1.bf16.msra.mxu0 %v2824
        %3689 = vmatprep.subr.bf16.mxu0 %v2829
        %3690 = vmatpush1.bf16.msra.mxu0 %v2828
        %3691 = vmatprep.subr.bf16.mxu0 %v2833
        %3692 = vmatpush1.bf16.msra.mxu0 %v2832
        %3693 = vmatprep.subr.bf16.mxu0 %v2837
        %3694 = vmatpush1.bf16.msra.mxu0 %v2836
        %3695 = vmatprep.subr.bf16.mxu0 %v2841
        %3696 = vmatpush1.bf16.msra.mxu0 %v2840
        %3697 = vmatprep.subr.bf16.mxu0 %v2845
        %3698 = vmatpush1.bf16.msra.mxu0 %v2844
        %3699 = vmatprep.subr.bf16.mxu0 %v2849
        %3700 = vmatpush1.bf16.msra.mxu0 %v2848
        %3701 = vmatprep.subr.bf16.mxu0 %v2853
        %3702 = vmatpush1.bf16.msra.mxu0 %v2852
        %3703 = vmatprep.subr.bf16.mxu0 %v2857
        %3704 = vmatpush1.bf16.msra.mxu0 %v2856
        %3705 = vmatprep.subr.bf16.mxu0 %v2861
        %3706 = vmatpush1.bf16.msra.mxu0 %v2860
        %3707 = vmatprep.subr.bf16.mxu0 %v2865
        %3708 = vmatpush1.bf16.msra.mxu0 %v2864
        %3709 = vmatprep.subr.bf16.mxu0 %v2869
        %3710 = vmatpush1.bf16.msra.mxu0 %v2868
        %3711 = vmatprep.subr.bf16.mxu0 %v2873
        %3712 = vmatpush1.bf16.msra.mxu0 %v2872
        %3713 = vmatprep.subr.bf16.mxu0 %v2877
        %3714 = vmatpush1.bf16.msra.mxu0 %v2876
        %3715 = vmatprep.subr.bf16.mxu0 %v2881
        %3716 = vmatpush1.bf16.msra.mxu0 %v2880
        %3717 = vmatprep.subr.bf16.mxu0 %v2885
        %3718 = vmatpush1.bf16.msra.mxu0 %v2884
        %3719 = vmatprep.mubr.bf16.mxu0 %v305
        %3720 = vmatmul.mubr.bf16.gmra.mrb[0].mxu0 %v304
        %v3721 = vpop.f32.mrb[0].mxu0
        %v3722 = vadd.f32 %v3681, %v3721
        %v3723 = vpop.f32.mrb[0].mxu0
        %v3724 = vadd.f32 %v3683, %v3723
        %v3725 = vpop.f32.mrb[0].mxu0
        %v3726 = vpop.f32.mrb[0].mxu0
        %3727 = vdwg.mxu0
        %3728 = vmatprep.subr.bf16.mxu0 %v2379
        %3729 = vmatpush1.bf16.msra.mxu0 %v2378
        %3730 = vmatprep.subr.bf16.mxu0 %v2383
        %3731 = vmatpush1.bf16.msra.mxu0 %v2382
        %3732 = vmatprep.subr.bf16.mxu0 %v2387
        %3733 = vmatpush1.bf16.msra.mxu0 %v2386
        %3734 = vmatprep.subr.bf16.mxu0 %v2391
        %3735 = vmatpush1.bf16.msra.mxu0 %v2390
        %3736 = vmatprep.subr.bf16.mxu0 %v2395
        %3737 = vmatpush1.bf16.msra.mxu0 %v2394
        %3738 = vmatprep.subr.bf16.mxu0 %v2399
        %3739 = vmatpush1.bf16.msra.mxu0 %v2398
        %3740 = vmatprep.subr.bf16.mxu0 %v2403
        %3741 = vmatpush1.bf16.msra.mxu0 %v2402
        %3742 = vmatprep.subr.bf16.mxu0 %v2407
        %3743 = vmatpush1.bf16.msra.mxu0 %v2406
        %3744 = vmatprep.subr.bf16.mxu0 %v2411
        %3745 = vmatpush1.bf16.msra.mxu0 %v2410
        %3746 = vmatprep.subr.bf16.mxu0 %v2415
        %3747 = vmatpush1.bf16.msra.mxu0 %v2414
        %3748 = vmatprep.subr.bf16.mxu0 %v2419
        %3749 = vmatpush1.bf16.msra.mxu0 %v2418
        %3750 = vmatprep.subr.bf16.mxu0 %v2423
        %3751 = vmatpush1.bf16.msra.mxu0 %v2422
        %3752 = vmatprep.subr.bf16.mxu0 %v2427
        %3753 = vmatpush1.bf16.msra.mxu0 %v2426
        %3754 = vmatprep.subr.bf16.mxu0 %v2431
        %3755 = vmatpush1.bf16.msra.mxu0 %v2430
        %3756 = vmatprep.subr.bf16.mxu0 %v2435
        %3757 = vmatpush1.bf16.msra.mxu0 %v2434
        %3758 = vmatprep.subr.bf16.mxu0 %v2439
        %3759 = vmatpush1.bf16.msra.mxu0 %v2438
        %3760 = vmatprep.mubr.bf16.mxu0 %v291
        %3761 = vmatmul.mubr.bf16.gmra.mrb[0].mxu0 %v290
        %v3762 = vpop.f32.mrb[0].mxu0
        %v3763 = vadd.f32 %v831, %v3762
        %v3764 = vpop.f32.mrb[0].mxu0
        %v3765 = vadd.f32 %v835, %v3764
        %v3766 = vpop.f32.mrb[0].mxu0
        %v3767 = vpop.f32.mrb[0].mxu0
        %3768 = vdwg.mxu0
        %3769 = vmatprep.subr.bf16.mxu0 %v2443
        %3770 = vmatpush1.bf16.msra.mxu0 %v2442
        %3771 = vmatprep.subr.bf16.mxu0 %v2447
        %3772 = vmatpush1.bf16.msra.mxu0 %v2446
        %3773 = vmatprep.subr.bf16.mxu0 %v2451
        %3774 = vmatpush1.bf16.msra.mxu0 %v2450
        %3775 = vmatprep.subr.bf16.mxu0 %v2455
        %3776 = vmatpush1.bf16.msra.mxu0 %v2454
        %3777 = vmatprep.subr.bf16.mxu0 %v2459
        %3778 = vmatpush1.bf16.msra.mxu0 %v2458
        %3779 = vmatprep.subr.bf16.mxu0 %v2463
        %3780 = vmatpush1.bf16.msra.mxu0 %v2462
        %3781 = vmatprep.subr.bf16.mxu0 %v2467
        %3782 = vmatpush1.bf16.msra.mxu0 %v2466
        %3783 = vmatprep.subr.bf16.mxu0 %v2471
        %3784 = vmatpush1.bf16.msra.mxu0 %v2470
        %3785 = vmatprep.subr.bf16.mxu0 %v2475
        %3786 = vmatpush1.bf16.msra.mxu0 %v2474
        %3787 = vmatprep.subr.bf16.mxu0 %v2479
        %3788 = vmatpush1.bf16.msra.mxu0 %v2478
        %3789 = vmatprep.subr.bf16.mxu0 %v2483
        %3790 = vmatpush1.bf16.msra.mxu0 %v2482
        %3791 = vmatprep.subr.bf16.mxu0 %v2487
        %3792 = vmatpush1.bf16.msra.mxu0 %v2486
        %3793 = vmatprep.subr.bf16.mxu0 %v2491
        %3794 = vmatpush1.bf16.msra.mxu0 %v2490
        %3795 = vmatprep.subr.bf16.mxu0 %v2495
        %3796 = vmatpush1.bf16.msra.mxu0 %v2494
        %3797 = vmatprep.subr.bf16.mxu0 %v2499
        %3798 = vmatpush1.bf16.msra.mxu0 %v2498
        %3799 = vmatprep.subr.bf16.mxu0 %v2503
        %3800 = vmatpush1.bf16.msra.mxu0 %v2502
        %3801 = vmatprep.mubr.bf16.mxu0 %v293
        %3802 = vmatmul.mubr.bf16.gmra.mrb[0].mxu0 %v292
        %v3803 = vpop.f32.mrb[0].mxu0
        %v3804 = vadd.f32 %v3763, %v3803
        %v3805 = vpop.f32.mrb[0].mxu0
        %v3806 = vadd.f32 %v3765, %v3805
        %v3807 = vpop.f32.mrb[0].mxu0
        %v3808 = vpop.f32.mrb[0].mxu0
        %3809 = vdwg.mxu0
        %3810 = vmatprep.subr.bf16.mxu0 %v2507
        %3811 = vmatpush1.bf16.msra.mxu0 %v2506
        %3812 = vmatprep.subr.bf16.mxu0 %v2511
        %3813 = vmatpush1.bf16.msra.mxu0 %v2510
        %3814 = vmatprep.subr.bf16.mxu0 %v2515
        %3815 = vmatpush1.bf16.msra.mxu0 %v2514
        %3816 = vmatprep.subr.bf16.mxu0 %v2519
        %3817 = vmatpush1.bf16.msra.mxu0 %v2518
        %3818 = vmatprep.subr.bf16.mxu0 %v2523
        %3819 = vmatpush1.bf16.msra.mxu0 %v2522
        %3820 = vmatprep.subr.bf16.mxu0 %v2527
        %3821 = vmatpush1.bf16.msra.mxu0 %v2526
        %3822 = vmatprep.subr.bf16.mxu0 %v2531
        %3823 = vmatpush1.bf16.msra.mxu0 %v2530
        %3824 = vmatprep.subr.bf16.mxu0 %v2535
        %3825 = vmatpush1.bf16.msra.mxu0 %v2534
        %3826 = vmatprep.subr.bf16.mxu0 %v2539
        %3827 = vmatpush1.bf16.msra.mxu0 %v2538
        %3828 = vmatprep.subr.bf16.mxu0 %v2543
        %3829 = vmatpush1.bf16.msra.mxu0 %v2542
        %3830 = vmatprep.subr.bf16.mxu0 %v2547
        %3831 = vmatpush1.bf16.msra.mxu0 %v2546
        %3832 = vmatprep.subr.bf16.mxu0 %v2551
        %3833 = vmatpush1.bf16.msra.mxu0 %v2550
        %3834 = vmatprep.subr.bf16.mxu0 %v2555
        %3835 = vmatpush1.bf16.msra.mxu0 %v2554
        %3836 = vmatprep.subr.bf16.mxu0 %v2559
        %3837 = vmatpush1.bf16.msra.mxu0 %v2558
        %3838 = vmatprep.subr.bf16.mxu0 %v2563
        %3839 = vmatpush1.bf16.msra.mxu0 %v2562
        %3840 = vmatprep.subr.bf16.mxu0 %v2567
        %3841 = vmatpush1.bf16.msra.mxu0 %v2566
        %3842 = vmatprep.mubr.bf16.mxu0 %v295
        %3843 = vmatmul.mubr.bf16.gmra.mrb[0].mxu0 %v294
        %v3844 = vpop.f32.mrb[0].mxu0
        %v3845 = vadd.f32 %v3804, %v3844
        %v3846 = vpop.f32.mrb[0].mxu0
        %v3847 = vadd.f32 %v3806, %v3846
        %v3848 = vpop.f32.mrb[0].mxu0
        %v3849 = vpop.f32.mrb[0].mxu0
        %3850 = vdwg.mxu0
        %3851 = vmatprep.subr.bf16.mxu0 %v2571
        %3852 = vmatpush1.bf16.msra.mxu0 %v2570
        %3853 = vmatprep.subr.bf16.mxu0 %v2575
        %3854 = vmatpush1.bf16.msra.mxu0 %v2574
        %3855 = vmatprep.subr.bf16.mxu0 %v2579
        %3856 = vmatpush1.bf16.msra.mxu0 %v2578
        %3857 = vmatprep.subr.bf16.mxu0 %v2583
        %3858 = vmatpush1.bf16.msra.mxu0 %v2582
        %3859 = vmatprep.subr.bf16.mxu0 %v2587
        %3860 = vmatpush1.bf16.msra.mxu0 %v2586
        %3861 = vmatprep.subr.bf16.mxu0 %v2591
        %3862 = vmatpush1.bf16.msra.mxu0 %v2590
        %3863 = vmatprep.subr.bf16.mxu0 %v2595
        %3864 = vmatpush1.bf16.msra.mxu0 %v2594
        %3865 = vmatprep.subr.bf16.mxu0 %v2599
        %3866 = vmatpush1.bf16.msra.mxu0 %v2598
        %3867 = vmatprep.subr.bf16.mxu0 %v2603
        %3868 = vmatpush1.bf16.msra.mxu0 %v2602
        %3869 = vmatprep.subr.bf16.mxu0 %v2607
        %3870 = vmatpush1.bf16.msra.mxu0 %v2606
        %3871 = vmatprep.subr.bf16.mxu0 %v2611
        %3872 = vmatpush1.bf16.msra.mxu0 %v2610
        %3873 = vmatprep.subr.bf16.mxu0 %v2615
        %3874 = vmatpush1.bf16.msra.mxu0 %v2614
        %3875 = vmatprep.subr.bf16.mxu0 %v2619
        %3876 = vmatpush1.bf16.msra.mxu0 %v2618
        %3877 = vmatprep.subr.bf16.mxu0 %v2623
        %3878 = vmatpush1.bf16.msra.mxu0 %v2622
        %3879 = vmatprep.subr.bf16.mxu0 %v2627
        %3880 = vmatpush1.bf16.msra.mxu0 %v2626
        %3881 = vmatprep.subr.bf16.mxu0 %v2631
        %3882 = vmatpush1.bf16.msra.mxu0 %v2630
        %3883 = vmatprep.mubr.bf16.mxu0 %v297
        %3884 = vmatmul.mubr.bf16.gmra.mrb[0].mxu0 %v296
        %v3885 = vpop.f32.mrb[0].mxu0
        %v3886 = vadd.f32 %v3845, %v3885
        %v3887 = vpop.f32.mrb[0].mxu0
        %v3888 = vadd.f32 %v3847, %v3887
        %v3889 = vpop.f32.mrb[0].mxu0
        %v3890 = vpop.f32.mrb[0].mxu0
        %3891 = vdwg.mxu0
        %3892 = vmatprep.subr.bf16.mxu0 %v2635
        %3893 = vmatpush1.bf16.msra.mxu0 %v2634
        %3894 = vmatprep.subr.bf16.mxu0 %v2639
        %3895 = vmatpush1.bf16.msra.mxu0 %v2638
        %3896 = vmatprep.subr.bf16.mxu0 %v2643
        %3897 = vmatpush1.bf16.msra.mxu0 %v2642
        %3898 = vmatprep.subr.bf16.mxu0 %v2647
        %3899 = vmatpush1.bf16.msra.mxu0 %v2646
        %3900 = vmatprep.subr.bf16.mxu0 %v2651
        %3901 = vmatpush1.bf16.msra.mxu0 %v2650
        %3902 = vmatprep.subr.bf16.mxu0 %v2655
        %3903 = vmatpush1.bf16.msra.mxu0 %v2654
        %3904 = vmatprep.subr.bf16.mxu0 %v2659
        %3905 = vmatpush1.bf16.msra.mxu0 %v2658
        %3906 = vmatprep.subr.bf16.mxu0 %v2663
        %3907 = vmatpush1.bf16.msra.mxu0 %v2662
        %3908 = vmatprep.subr.bf16.mxu0 %v2667
        %3909 = vmatpush1.bf16.msra.mxu0 %v2666
        %3910 = vmatprep.subr.bf16.mxu0 %v2671
        %3911 = vmatpush1.bf16.msra.mxu0 %v2670
        %3912 = vmatprep.subr.bf16.mxu0 %v2675
        %3913 = vmatpush1.bf16.msra.mxu0 %v2674
        %3914 = vmatprep.subr.bf16.mxu0 %v2679
        %3915 = vmatpush1.bf16.msra.mxu0 %v2678
        %3916 = vmatprep.subr.bf16.mxu0 %v2683
        %3917 = vmatpush1.bf16.msra.mxu0 %v2682
        %3918 = vmatprep.subr.bf16.mxu0 %v2687
        %3919 = vmatpush1.bf16.msra.mxu0 %v2686
        %3920 = vmatprep.subr.bf16.mxu0 %v2691
        %3921 = vmatpush1.bf16.msra.mxu0 %v2690
        %3922 = vmatprep.subr.bf16.mxu0 %v2695
        %3923 = vmatpush1.bf16.msra.mxu0 %v2694
        %3924 = vmatprep.mubr.bf16.mxu0 %v299
        %3925 = vmatmul.mubr.bf16.gmra.mrb[0].mxu0 %v298
        %v3926 = vpop.f32.mrb[0].mxu0
        %v3927 = vadd.f32 %v3886, %v3926
        %v3928 = vpop.f32.mrb[0].mxu0
        %v3929 = vadd.f32 %v3888, %v3928
        %v3930 = vpop.f32.mrb[0].mxu0
        %v3931 = vpop.f32.mrb[0].mxu0
        %3932 = vdwg.mxu0
        %3933 = vmatprep.subr.bf16.mxu0 %v2699
        %3934 = vmatpush1.bf16.msra.mxu0 %v2698
        %3935 = vmatprep.subr.bf16.mxu0 %v2703
        %3936 = vmatpush1.bf16.msra.mxu0 %v2702
        %3937 = vmatprep.subr.bf16.mxu0 %v2707
        %3938 = vmatpush1.bf16.msra.mxu0 %v2706
        %3939 = vmatprep.subr.bf16.mxu0 %v2711
        %3940 = vmatpush1.bf16.msra.mxu0 %v2710
        %3941 = vmatprep.subr.bf16.mxu0 %v2715
        %3942 = vmatpush1.bf16.msra.mxu0 %v2714
        %3943 = vmatprep.subr.bf16.mxu0 %v2719
        %3944 = vmatpush1.bf16.msra.mxu0 %v2718
        %3945 = vmatprep.subr.bf16.mxu0 %v2723
        %3946 = vmatpush1.bf16.msra.mxu0 %v2722
        %3947 = vmatprep.subr.bf16.mxu0 %v2727
        %3948 = vmatpush1.bf16.msra.mxu0 %v2726
        %3949 = vmatprep.subr.bf16.mxu0 %v2731
        %3950 = vmatpush1.bf16.msra.mxu0 %v2730
        %3951 = vmatprep.subr.bf16.mxu0 %v2735
        %3952 = vmatpush1.bf16.msra.mxu0 %v2734
        %3953 = vmatprep.subr.bf16.mxu0 %v2739
        %3954 = vmatpush1.bf16.msra.mxu0 %v2738
        %3955 = vmatprep.subr.bf16.mxu0 %v2743
        %3956 = vmatpush1.bf16.msra.mxu0 %v2742
        %3957 = vmatprep.subr.bf16.mxu0 %v2747
        %3958 = vmatpush1.bf16.msra.mxu0 %v2746
        %3959 = vmatprep.subr.bf16.mxu0 %v2751
        %3960 = vmatpush1.bf16.msra.mxu0 %v2750
        %3961 = vmatprep.subr.bf16.mxu0 %v2755
        %3962 = vmatpush1.bf16.msra.mxu0 %v2754
        %3963 = vmatprep.subr.bf16.mxu0 %v2759
        %3964 = vmatpush1.bf16.msra.mxu0 %v2758
        %3965 = vmatprep.mubr.bf16.mxu0 %v301
        %3966 = vmatmul.mubr.bf16.gmra.mrb[0].mxu0 %v300
        %v3967 = vpop.f32.mrb[0].mxu0
        %v3968 = vadd.f32 %v3927, %v3967
        %v3969 = vpop.f32.mrb[0].mxu0
        %v3970 = vadd.f32 %v3929, %v3969
        %v3971 = vpop.f32.mrb[0].mxu0
        %v3972 = vpop.f32.mrb[0].mxu0
        %3973 = vdwg.mxu0
        %3974 = vmatprep.subr.bf16.mxu0 %v2763
        %3975 = vmatpush1.bf16.msra.mxu0 %v2762
        %3976 = vmatprep.subr.bf16.mxu0 %v2767
        %3977 = vmatpush1.bf16.msra.mxu0 %v2766
        %3978 = vmatprep.subr.bf16.mxu0 %v2771
        %3979 = vmatpush1.bf16.msra.mxu0 %v2770
        %3980 = vmatprep.subr.bf16.mxu0 %v2775
        %3981 = vmatpush1.bf16.msra.mxu0 %v2774
        %3982 = vmatprep.subr.bf16.mxu0 %v2779
        %3983 = vmatpush1.bf16.msra.mxu0 %v2778
        %3984 = vmatprep.subr.bf16.mxu0 %v2783
        %3985 = vmatpush1.bf16.msra.mxu0 %v2782
        %3986 = vmatprep.subr.bf16.mxu0 %v2787
        %3987 = vmatpush1.bf16.msra.mxu0 %v2786
        %3988 = vmatprep.subr.bf16.mxu0 %v2791
        %3989 = vmatpush1.bf16.msra.mxu0 %v2790
        %3990 = vmatprep.subr.bf16.mxu0 %v2795
        %3991 = vmatpush1.bf16.msra.mxu0 %v2794
        %3992 = vmatprep.subr.bf16.mxu0 %v2799
        %3993 = vmatpush1.bf16.msra.mxu0 %v2798
        %3994 = vmatprep.subr.bf16.mxu0 %v2803
        %3995 = vmatpush1.bf16.msra.mxu0 %v2802
        %3996 = vmatprep.subr.bf16.mxu0 %v2807
        %3997 = vmatpush1.bf16.msra.mxu0 %v2806
        %3998 = vmatprep.subr.bf16.mxu0 %v2811
        %3999 = vmatpush1.bf16.msra.mxu0 %v2810
        %4000 = vmatprep.subr.bf16.mxu0 %v2815
        %4001 = vmatpush1.bf16.msra.mxu0 %v2814
        %4002 = vmatprep.subr.bf16.mxu0 %v2819
        %4003 = vmatpush1.bf16.msra.mxu0 %v2818
        %4004 = vmatprep.subr.bf16.mxu0 %v2823
        %4005 = vmatpush1.bf16.msra.mxu0 %v2822
        %4006 = vmatprep.mubr.bf16.mxu0 %v303
        %4007 = vmatmul.mubr.bf16.gmra.mrb[0].mxu0 %v302
        %v4008 = vpop.f32.mrb[0].mxu0
        %v4009 = vadd.f32 %v3968, %v4008
        %v4010 = vpop.f32.mrb[0].mxu0
        %v4011 = vadd.f32 %v3970, %v4010
        %v4012 = vpop.f32.mrb[0].mxu0
        %v4013 = vpop.f32.mrb[0].mxu0
        %4014 = vdwg.mxu0
        %4015 = vmatprep.subr.bf16.mxu0 %v2827
        %4016 = vmatpush1.bf16.msra.mxu0 %v2826
        %4017 = vmatprep.subr.bf16.mxu0 %v2831
        %4018 = vmatpush1.bf16.msra.mxu0 %v2830
        %4019 = vmatprep.subr.bf16.mxu0 %v2835
        %4020 = vmatpush1.bf16.msra.mxu0 %v2834
        %4021 = vmatprep.subr.bf16.mxu0 %v2839
        %4022 = vmatpush1.bf16.msra.mxu0 %v2838
        %4023 = vmatprep.subr.bf16.mxu0 %v2843
        %4024 = vmatpush1.bf16.msra.mxu0 %v2842
        %4025 = vmatprep.subr.bf16.mxu0 %v2847
        %4026 = vmatpush1.bf16.msra.mxu0 %v2846
        %4027 = vmatprep.subr.bf16.mxu0 %v2851
        %4028 = vmatpush1.bf16.msra.mxu0 %v2850
        %4029 = vmatprep.subr.bf16.mxu0 %v2855
        %4030 = vmatpush1.bf16.msra.mxu0 %v2854
        %4031 = vmatprep.subr.bf16.mxu0 %v2859
        %4032 = vmatpush1.bf16.msra.mxu0 %v2858
        %4033 = vmatprep.subr.bf16.mxu0 %v2863
        %4034 = vmatpush1.bf16.msra.mxu0 %v2862
        %4035 = vmatprep.subr.bf16.mxu0 %v2867
        %4036 = vmatpush1.bf16.msra.mxu0 %v2866
        %4037 = vmatprep.subr.bf16.mxu0 %v2871
        %4038 = vmatpush1.bf16.msra.mxu0 %v2870
        %4039 = vmatprep.subr.bf16.mxu0 %v2875
        %4040 = vmatpush1.bf16.msra.mxu0 %v2874
        %4041 = vmatprep.subr.bf16.mxu0 %v2879
        %4042 = vmatpush1.bf16.msra.mxu0 %v2878
        %4043 = vmatprep.subr.bf16.mxu0 %v2883
        %4044 = vmatpush1.bf16.msra.mxu0 %v2882
        %4045 = vmatprep.subr.bf16.mxu0 %v2887
        %4046 = vmatpush1.bf16.msra.mxu0 %v2886
        %4047 = vmatprep.mubr.bf16.mxu0 %v305
        %4048 = vmatmul.mubr.bf16.gmra.mrb[0].mxu0 %v304
        %v4049 = vpop.f32.mrb[0].mxu0
        %v4050 = vadd.f32 %v4009, %v4049
        %v4051 = vpop.f32.mrb[0].mxu0
        %v4052 = vadd.f32 %v4011, %v4051
        %v4053 = vpop.f32.mrb[0].mxu0
        %v4054 = vpop.f32.mrb[0].mxu0
        %4055 = vdwg.mxu0
        %4056 = vst [vmem:[%s272] sm:$0xff] %v3722
        %4057 = vst [vmem:[%s272 + $0x8] sm:$0xff] %v3724
        %4058 = vst [vmem:[%s272 + $0x10] sm:$0xff] %v4050
        %4059 = vst [vmem:[%s272 + $0x18] sm:$0xff] %v4052
        %s4060 = smul.u32 4, %s25
        %p4061 = scmp.lt.s32.totalorder %s24, 0
        %s4062 = scalar_select %p4061, %s24, 0
        %p4063 = scmp.lt.s32.totalorder %s4060, 7
        %s4064 = scalar_select %p4063, %s4060, 7
        %s4065 = smul.addr %s4062, 8
        %s4066 = sadd.s32 %s4064, %s4065
        %s4067 = smul.addr %s4066, 8
        %s4068 = scalar_lea.vmem %s3, %s4067
        // Predicated region
        $region41: #{netc_resnet_forward.1} parent=31 // pred_check
          %p4069 = pneg %p130
        $region42: #{netc_resnet_forward.1} parent=31 // pred_check_branch
          %4071 = sbr.rel (%p4069) target = $region44
        $region43: #{netc_resnet_forward.1} parent=31 // pred_region
          %s4072 = smul.u32 4, %s25
        $region44: #{netc_resnet_forward.1} parent=31 // pred_fallthru
          _
      $region32: #{netc_resnet_forward.1} parent=5 // pred_fallthru
        _
      %p4073 = scmp.le.s32.totalorder 2, %s15
      // Predicated region
      $region45: #{netc_resnet_forward.1} parent=5 // pred_check
        %p4074 = pneg %p4073
      $region46: #{netc_resnet_forward.1} parent=5 // pred_check_branch
        %4076 = sbr.rel (%p4074) target = $region48
      $region47: #{netc_resnet_forward.1} parent=5 // pred_region
        %s4077 = ssub.s32 %s15, 2
        // Predicated region
        $region49: #{netc_resnet_forward.1} parent=47 // pred_check
          %p4078 = pneg %p136
        $region50: #{netc_resnet_forward.1} parent=47 // pred_check_branch
          %4080 = sbr.rel (%p4078) target = $region52
        $region51: #{netc_resnet_forward.1} parent=47 // pred_region
          %s4081 = smul.u32 4, %s27
          %p4082 = scmp.lt.s32.totalorder %s26, 0
          %s4083 = scalar_select %p4082, %s26, 0
          %p4084 = scmp.lt.s32.totalorder %s4081, 7
          %s4085 = scalar_select %p4084, %s4081, 7
          %s4086 = smul.addr %s4083, 8
          %s4087 = sadd.s32 %s4085, %s4086
          %s4088 = smul.addr %s4087, 8
          %s4089 = scalar_lea.vmem %s3, %s4088
        $region52: #{netc_resnet_forward.1} parent=47 // pred_fallthru
          _
      $region48: #{netc_resnet_forward.1} parent=5 // pred_fallthru
        _
    $region6: #{netc_resnet_forward.1} parent=1 // loop_footer
      %s19 = sadd.s32 1, %s15
    $region7: #{netc_resnet_forward.1} parent=1 // loop_footer_branch
      %14 = sbr.rel target = $region3
    $region8: #{netc_resnet_forward.1} parent=1 // loop_exit
      _
    %4090 = vsyncpa [#allocation3], 1
    %s4091 = scalar_lea.sflag [#allocation3], 1
    %4092 = vsyncpa %s4091, 1
    %4093 = vsyncpa [#allocation5], 1
    %s4094 = scalar_lea.sflag [#allocation5], 1
    %4095 = vsyncpa %s4094, 1

</llo_original>
